<compile_context>
chip_gen: v5e
topology: v5e:2x2
jax: 0.10.0
libtpu: 0.0.40
codegen_flags: <defaults>
</compile_context>

<pallas_src>
import functools

import jax
import jax.numpy as jnp
import numpy as np
from jax import lax
from jax.experimental import pallas as pl
from jax.experimental.pallas import tpu as pltpu

EPS = 1e-5   # fp32 LayerNorm eps (matches the torch.float32 branch)
PADW = 8     # sublane-aligned start column of the conv interior inside the halo scratch


def _softmax(x, axis):
    m = jnp.max(x, axis=axis, keepdims=True)
    e = jnp.exp(x - m)
    return e / jnp.sum(e, axis=axis, keepdims=True)


def _chan_layernorm(x, g):
    """LayerNorm over the channel axis (= axis 0, rows) of a (C, N) tile."""
    mean = jnp.mean(x, axis=0, keepdims=True)
    var = jnp.mean((x - mean) ** 2, axis=0, keepdims=True)     # unbiased=False
    return (x - mean) * lax.rsqrt(var + EPS) * g                # g: (C, 1)


# ----------------------------- fused kernel ----------------------------------
def fused_linear_attention_kernel(
    x_ref,       # (1, dim, N)      input feature map (NCHW, HW flattened)
    g_norm_ref,  # (dim, 1)         input ChanLayerNorm gain
    w_qkv_ref,   # (dim, 3*inner)   fused q/k/v 1x1-conv weights (transposed)
    w_dw_ref,    # (9, 3*inner)     depthwise 3x3 weights, tap-major
    w_out_ref,   # (dim, inner)     output 1x1-conv weights (torch layout)
    g_out_ref,   # (dim, 1)         output ChanLayerNorm gain
    o_ref,       # (1, dim, N)      output (NCHW, HW flattened)
    pad_ref,     # VMEM scratch (H+2, W+2*PADW, 3*inner): zero halo for the conv
    *, H, W, heads, dim_head, scale,
):
    N = H * W
    inner = heads * dim_head
    C3 = 3 * inner

    # ---- ChanLayerNorm + fused q/k/v 1x1 conv --------------------------------
    # Channels sit in rows, so the LN reduces over sublanes and the MXU does the
    # "transpose" via an A^T @ B contraction.  Dropout(p=0.05) is identity here.
    x = x_ref[0]                                               # (dim, N)
    xn = _chan_layernorm(x, g_norm_ref[...])
    qkv = lax.dot_general(                                     # xn^T @ W -> (N, C3)
        xn, w_qkv_ref[...], (((0,), (0,)), ((), ())),
        preferred_element_type=jnp.float32)

    # ---- depthwise 3x3 conv, padding=1 (halo kept in VMEM scratch) -----------
    pad_ref[...] = jnp.zeros_like(pad_ref)
    pad_ref[1:H + 1, PADW:PADW + W, :] = qkv.reshape(H, W, C3)  # aligned interior store
    xp = pad_ref[...]                                           # (H+2, W+2*PADW, C3)
    w_dw = w_dw_ref[...]                                        # (9, C3)
    acc = xp[0:H, PADW - 1:PADW - 1 + W, :] * w_dw[0].reshape(1, 1, C3)
    for ky in range(3):
        for kx in range(3):
            if ky == 0 and kx == 0:
                continue
            tap = xp[ky:ky + H, PADW - 1 + kx:PADW - 1 + kx + W, :]
            acc = acc + tap * w_dw[ky * 3 + kx].reshape(1, 1, C3)
    qkv_dw = acc.reshape(N, C3)                                 # (N, 3*inner)

    # ---- linear attention: all heads of this batch element in one grid step --
    d = dim_head
    head_outs = []
    for h in range(heads):
        q = qkv_dw[:, h * d:(h + 1) * d]                        # (N, d)
        k = qkv_dw[:, inner + h * d:inner + (h + 1) * d]
        v = qkv_dw[:, 2 * inner + h * d:2 * inner + (h + 1) * d]
        q = _softmax(q, axis=-1) * scale                        # softmax over head dim
        k = _softmax(k, axis=0)                                 # softmax over sequence
        ctx = lax.dot_general(k, v, (((0,), (0,)), ((), ())),   # k^T v -> (d, d)
                              preferred_element_type=jnp.float32)
        head_outs.append(jnp.dot(q, ctx, preferred_element_type=jnp.float32))
    out_inner = jnp.concatenate(head_outs, axis=-1)             # (N, inner), heads merged

    # ---- SiLU + output 1x1 conv + ChanLayerNorm ------------------------------
    # Produce the result directly in channel-major (NCHW) orientation via an
    # A @ B^T contraction, so no transpose is needed anywhere.
    a = out_inner * jax.nn.sigmoid(out_inner)                   # SiLU
    y = lax.dot_general(                                        # W @ a^T -> (dim, N)
        w_out_ref[...], a, (((1,), (1,)), ((), ())),
        preferred_element_type=jnp.float32)
    o_ref[0] = _chan_layernorm(y, g_out_ref[...])


# ------------------------------- wrapper --------------------------------------
def linear_attention(fmap, params, *, heads, dim_head):
    """Forward pass of LinearAttention.  fmap: (B, dim, H, W) NCHW, f32."""
    B, dim, H, W = fmap.shape
    N = H * W
    inner = heads * dim_head
    C3 = 3 * inner
    scale = dim_head ** -0.5

    x = fmap.reshape(B, dim, N)                 # metadata-only reshape (no HBM pass)
    g_norm = params["g_norm"].reshape(dim, 1)
    g_out = params["g_out"].reshape(dim, 1)

    kernel = functools.partial(
        fused_linear_attention_kernel,
        H=H, W=W, heads=heads, dim_head=dim_head, scale=scale)

    out = pl.pallas_call(
        kernel,
        out_shape=jax.ShapeDtypeStruct((B, dim, N), jnp.float32),
        grid=(B,),
        in_specs=[
            pl.BlockSpec((1, dim, N), lambda b: (b, 0, 0)),     # x
            pl.BlockSpec((dim, 1), lambda b: (0, 0)),           # g_norm
            pl.BlockSpec((dim, C3), lambda b: (0, 0)),          # w_qkv
            pl.BlockSpec((9, C3), lambda b: (0, 0)),            # w_dw
            pl.BlockSpec((dim, inner), lambda b: (0, 0)),       # w_out
            pl.BlockSpec((dim, 1), lambda b: (0, 0)),           # g_out
        ],
        out_specs=pl.BlockSpec((1, dim, N), lambda b: (b, 0, 0)),
        scratch_shapes=[pltpu.VMEM((H + 2, W + 2 * PADW, C3), jnp.float32)],
        compiler_params=pltpu.CompilerParams(
            dimension_semantics=("parallel",)),   # B>=2 -> both v7x cores get work
    )(x, g_norm, params["w_qkv"], params["w_dw"], params["w_out"], g_out)

    return out.reshape(B, dim, H, W)            # metadata-only reshape back to NCHW


# ---------------- deterministic parameter init --------------------------------
def init_params(key, dim, heads, dim_head):
    inner = heads * dim_head
    ks = jax.random.split(key, 7)
    # 1x1 conv weights (torch: (inner, dim, 1, 1)) stored transposed as (dim, inner)
    wq1 = 0.1 * jax.random.normal(ks[0], (dim, inner), jnp.float32)
    wk1 = 0.1 * jax.random.normal(ks[1], (dim, inner), jnp.float32)
    wv1 = 0.1 * jax.random.normal(ks[2], (dim, inner), jnp.float32)
    w_qkv = jnp.concatenate([wq1, wk1, wv1], axis=1)            # (dim, 3*inner)

    # depthwise 3x3 weights (torch: (inner, 1, 3, 3)) stored as (9, C) tap-major
    def dw(k):
        w = 0.1 * jax.random.normal(k, (inner, 3, 3), jnp.float32)
        return w.transpose(1, 2, 0)                             # (3, 3, inner)

    w_dw = jnp.concatenate([dw(ks[3]), dw(ks[4]), dw(ks[5])], axis=-1)
    w_dw = w_dw.reshape(9, 3 * inner)

    # output 1x1 conv kept in torch layout (dim, inner)
    w_out = 0.1 * jax.random.normal(ks[6], (dim, inner), jnp.float32)

    return dict(
        g_norm=jnp.ones((dim,), jnp.float32),                   # ChanLayerNorm g init = 1
        w_qkv=w_qkv, w_dw=w_dw, w_out=w_out,
        g_out=jnp.ones((dim,), jnp.float32),
    )


# ---------------- pure-JAX reference (mirrors PyTorch semantics) --------------
def reference(fmap, params, *, heads, dim_head):
    B, dim, H, W = fmap.shape
    N = H * W
    inner = heads * dim_head
    scale = dim_head ** -0.5
    x = fmap.transpose(0, 2, 3, 1)                              # NHWC
    mean = x.mean(-1, keepdims=True)
    var = ((x - mean) ** 2).mean(-1, keepdims=True)
    xn = (x - mean) * lax.rsqrt(var + EPS) * params["g_norm"]
    qkv = jnp.einsum("bhwc,cd->bhwd", xn, params["w_qkv"])
    wdw = params["w_dw"].reshape(3, 3, 1, 3 * inner)
    qkv = lax.conv_general_dilated(
        qkv, wdw, (1, 1), "SAME",
        dimension_numbers=("NHWC", "HWIO", "NHWC"),
        feature_group_count=3 * inner)
    qkv = qkv.reshape(B, N, 3, heads, dim_head).transpose(2, 0, 3, 1, 4)
    q, k, v = [t.reshape(B * heads, N, dim_head) for t in qkv]
    q = jax.nn.softmax(q, axis=-1) * scale
    k = jax.nn.softmax(k, axis=-2)
    ctx = jnp.einsum("bnd,bne->bde", k, v)
    out = jnp.einsum("bnd,bde->bne", q, ctx)
    out = out.reshape(B, heads, N, dim_head).transpose(0, 2, 1, 3).reshape(B, N, inner)
    out = out * jax.nn.sigmoid(out)
    y = jnp.einsum("bnc,dc->bnd", out, params["w_out"])
    mean = y.mean(-1, keepdims=True)
    var = ((y - mean) ** 2).mean(-1, keepdims=True)
    y = (y - mean) * lax.rsqrt(var + EPS) * params["g_out"]
    return y.reshape(B, H, W, dim).transpose(0, 3, 1, 2)


if __name__ == "__main__":
    B, dim, H, W = 2, 8, 8, 8
    heads, dim_head = 4, 8

    key = jax.random.PRNGKey(0)
    k_in, k_par = jax.random.split(key)
    fmap = jax.random.normal(k_in, (B, dim, H, W), jnp.float32)
    params = init_params(k_par, dim, heads, dim_head)

    out = linear_attention(fmap, params, heads=heads, dim_head=dim_head)
    out = jax.block_until_ready(out)
    assert out.shape == (B, dim, H, W)

    ref = reference(fmap, params, heads=heads, dim_head=dim_head)
    np.testing.assert_allclose(np.asarray(out), np.asarray(ref), rtol=1e-4, atol=1e-4)

    print("KERNEL_OK")
</pallas_src>

<mosaic_0001>
module attributes {stable_mosaic.version = 11 : i64} {
  func.func @fused_linear_attention_kernel(%arg0: i32, %arg1: memref<1x8x64xf32, #tpu.memory_space<vmem>>, %arg2: memref<8x1xf32, #tpu.memory_space<vmem>>, %arg3: memref<8x96xf32, #tpu.memory_space<vmem>>, %arg4: memref<9x96xf32, #tpu.memory_space<vmem>>, %arg5: memref<8x32xf32, #tpu.memory_space<vmem>>, %arg6: memref<8x1xf32, #tpu.memory_space<vmem>>, %arg7: memref<1x8x64xf32, #tpu.memory_space<vmem>>, %arg8: memref<10x24x96xf32, #tpu.memory_space<vmem>>) attributes {dimension_semantics = [#tpu.dimension_semantics<parallel>], iteration_bounds = array<i64: 2>, scalar_prefetch = 0 : i64, scratch_operands = 1 : i64, tpu.core_type = #tpu.core_type<tc>, window_params = [{transform_indices = @transform_0, window_bounds = array<i64: 1, 8, 64>}, {pipeline_mode = #tpu.pipeline_mode<synchronous>, transform_indices = @transform_1, window_bounds = array<i64: 8, 1>}, {pipeline_mode = #tpu.pipeline_mode<synchronous>, transform_indices = @transform_2, window_bounds = array<i64: 8, 96>}, {pipeline_mode = #tpu.pipeline_mode<synchronous>, transform_indices = @transform_3, window_bounds = array<i64: 9, 96>}, {pipeline_mode = #tpu.pipeline_mode<synchronous>, transform_indices = @transform_4, window_bounds = array<i64: 8, 32>}, {pipeline_mode = #tpu.pipeline_mode<synchronous>, transform_indices = @transform_5, window_bounds = array<i64: 8, 1>}, {transform_indices = @transform_6, window_bounds = array<i64: 1, 8, 64>}]} {
    %c0 = arith.constant 0 : index
    %c0_0 = arith.constant 0 : index
    %c0_1 = arith.constant 0 : index
    %0 = vector.load %arg1[%c0, %c0_0, %c0_1] : memref<1x8x64xf32, #tpu.memory_space<vmem>>, vector<1x8x64xf32>
    %1 = vector.shape_cast %0 : vector<1x8x64xf32> to vector<8x64xf32>
    %c0_2 = arith.constant 0 : index
    %c0_3 = arith.constant 0 : index
    %2 = vector.load %arg2[%c0_2, %c0_3] : memref<8x1xf32, #tpu.memory_space<vmem>>, vector<8x1xf32>
    %cst = arith.constant dense<0.000000e+00> : vector<64xf32>
    %3 = vector.multi_reduction <add>, %1, %cst [0] : vector<8x64xf32> to vector<64xf32>
    %4 = vector.shape_cast %3 : vector<64xf32> to vector<1x64xf32>
    %cst_4 = arith.constant 8.000000e+00 : f32
    %5 = vector.broadcast %cst_4 : f32 to vector<1x64xf32>
    %6 = arith.divf %4, %5 : vector<1x64xf32>
    %7 = vector.broadcast %6 : vector<1x64xf32> to vector<8x64xf32>
    %8 = arith.subf %1, %7 : vector<8x64xf32>
    %9 = arith.mulf %8, %8 : vector<8x64xf32>
    %cst_5 = arith.constant dense<0.000000e+00> : vector<64xf32>
    %10 = vector.multi_reduction <add>, %9, %cst_5 [0] : vector<8x64xf32> to vector<64xf32>
    %11 = vector.shape_cast %10 : vector<64xf32> to vector<1x64xf32>
    %cst_6 = arith.constant 8.000000e+00 : f32
    %12 = vector.broadcast %cst_6 : f32 to vector<1x64xf32>
    %13 = arith.divf %11, %12 : vector<1x64xf32>
    %14 = vector.broadcast %6 : vector<1x64xf32> to vector<8x64xf32>
    %15 = arith.subf %1, %14 : vector<8x64xf32>
    %cst_7 = arith.constant 9.99999974E-6 : f32
    %16 = vector.broadcast %cst_7 : f32 to vector<1x64xf32>
    %17 = arith.addf %13, %16 : vector<1x64xf32>
    %18 = math.rsqrt %17 : vector<1x64xf32>
    %19 = vector.broadcast %18 : vector<1x64xf32> to vector<8x64xf32>
    %20 = arith.mulf %15, %19 : vector<8x64xf32>
    %21 = vector.broadcast %2 : vector<8x1xf32> to vector<8x64xf32>
    %22 = arith.mulf %20, %21 : vector<8x64xf32>
    %c0_8 = arith.constant 0 : index
    %c0_9 = arith.constant 0 : index
    %23 = vector.load %arg3[%c0_8, %c0_9] : memref<8x96xf32, #tpu.memory_space<vmem>>, vector<8x96xf32>
    %cst_10 = arith.constant dense<0.000000e+00> : vector<64x96xf32>
    %24 = tpu.matmul %22, %23, %cst_10 {dimension_numbers = #tpu.dot_dimension_numbers<[0], [0], [1], [1], [0, 1, 1, 1], [], []>} : vector<8x64xf32>, vector<8x96xf32>, vector<64x96xf32> -> vector<64x96xf32>
    %cst_11 = arith.constant 0.000000e+00 : f32
    %25 = vector.broadcast %cst_11 : f32 to vector<10x24x96xf32>
    %c0_12 = arith.constant 0 : index
    %c0_13 = arith.constant 0 : index
    %c0_14 = arith.constant 0 : index
    %26 = vector.load %arg8[%c0_12, %c0_13, %c0_14] : memref<10x24x96xf32, #tpu.memory_space<vmem>>, vector<10x24x96xf32>
    tpu.vector_store %arg8[%c0_12, %c0_13, %c0_14], %25 {strides = array<i32>} : memref<10x24x96xf32, #tpu.memory_space<vmem>>, vector<10x24x96xf32>,
    %27 = vector.shape_cast %24 : vector<64x96xf32> to vector<8x8x96xf32>
    %c1 = arith.constant 1 : index
    %c8 = arith.constant 8 : index
    %c0_15 = arith.constant 0 : index
    %28 = vector.load %arg8[%c1, %c8, %c0_15] : memref<10x24x96xf32, #tpu.memory_space<vmem>>, vector<8x8x96xf32>
    tpu.vector_store %arg8[%c1, %c8, %c0_15], %27 {strides = array<i32>} : memref<10x24x96xf32, #tpu.memory_space<vmem>>, vector<8x8x96xf32>,
    %c0_16 = arith.constant 0 : index
    %c0_17 = arith.constant 0 : index
    %c0_18 = arith.constant 0 : index
    %29 = vector.load %arg8[%c0_16, %c0_17, %c0_18] : memref<10x24x96xf32, #tpu.memory_space<vmem>>, vector<10x24x96xf32>
    %c0_19 = arith.constant 0 : index
    %c0_20 = arith.constant 0 : index
    %30 = vector.load %arg4[%c0_19, %c0_20] : memref<9x96xf32, #tpu.memory_space<vmem>>, vector<9x96xf32>
    %31 = vector.extract_strided_slice %29 {offsets = [0, 7, 0], sizes = [8, 8, 96], strides = [1, 1, 1]} : vector<10x24x96xf32> to vector<8x8x96xf32>
    %32 = vector.extract_strided_slice %30 {offsets = [0, 0], sizes = [1, 96], strides = [1, 1]} : vector<9x96xf32> to vector<1x96xf32>
    %33 = vector.shape_cast %32 : vector<1x96xf32> to vector<96xf32>
    %34 = vector.shape_cast %33 : vector<96xf32> to vector<1x1x96xf32>
    %35 = vector.broadcast %34 : vector<1x1x96xf32> to vector<8x8x96xf32>
    %36 = arith.mulf %31, %35 : vector<8x8x96xf32>
    %37 = vector.extract_strided_slice %29 {offsets = [0, 8, 0], sizes = [8, 8, 96], strides = [1, 1, 1]} : vector<10x24x96xf32> to vector<8x8x96xf32>
    %38 = vector.extract_strided_slice %30 {offsets = [1, 0], sizes = [1, 96], strides = [1, 1]} : vector<9x96xf32> to vector<1x96xf32>
    %39 = vector.shape_cast %38 : vector<1x96xf32> to vector<96xf32>
    %40 = vector.shape_cast %39 : vector<96xf32> to vector<1x1x96xf32>
    %41 = vector.broadcast %40 : vector<1x1x96xf32> to vector<8x8x96xf32>
    %42 = arith.mulf %37, %41 : vector<8x8x96xf32>
    %43 = arith.addf %36, %42 : vector<8x8x96xf32>
    %44 = vector.extract_strided_slice %29 {offsets = [0, 9, 0], sizes = [8, 8, 96], strides = [1, 1, 1]} : vector<10x24x96xf32> to vector<8x8x96xf32>
    %45 = vector.extract_strided_slice %30 {offsets = [2, 0], sizes = [1, 96], strides = [1, 1]} : vector<9x96xf32> to vector<1x96xf32>
    %46 = vector.shape_cast %45 : vector<1x96xf32> to vector<96xf32>
    %47 = vector.shape_cast %46 : vector<96xf32> to vector<1x1x96xf32>
    %48 = vector.broadcast %47 : vector<1x1x96xf32> to vector<8x8x96xf32>
    %49 = arith.mulf %44, %48 : vector<8x8x96xf32>
    %50 = arith.addf %43, %49 : vector<8x8x96xf32>
    %51 = vector.extract_strided_slice %29 {offsets = [1, 7, 0], sizes = [8, 8, 96], strides = [1, 1, 1]} : vector<10x24x96xf32> to vector<8x8x96xf32>
    %52 = vector.extract_strided_slice %30 {offsets = [3, 0], sizes = [1, 96], strides = [1, 1]} : vector<9x96xf32> to vector<1x96xf32>
    %53 = vector.shape_cast %52 : vector<1x96xf32> to vector<96xf32>
    %54 = vector.shape_cast %53 : vector<96xf32> to vector<1x1x96xf32>
    %55 = vector.broadcast %54 : vector<1x1x96xf32> to vector<8x8x96xf32>
    %56 = arith.mulf %51, %55 : vector<8x8x96xf32>
    %57 = arith.addf %50, %56 : vector<8x8x96xf32>
    %58 = vector.extract_strided_slice %29 {offsets = [1, 8, 0], sizes = [8, 8, 96], strides = [1, 1, 1]} : vector<10x24x96xf32> to vector<8x8x96xf32>
    %59 = vector.extract_strided_slice %30 {offsets = [4, 0], sizes = [1, 96], strides = [1, 1]} : vector<9x96xf32> to vector<1x96xf32>
    %60 = vector.shape_cast %59 : vector<1x96xf32> to vector<96xf32>
    %61 = vector.shape_cast %60 : vector<96xf32> to vector<1x1x96xf32>
    %62 = vector.broadcast %61 : vector<1x1x96xf32> to vector<8x8x96xf32>
    %63 = arith.mulf %58, %62 : vector<8x8x96xf32>
    %64 = arith.addf %57, %63 : vector<8x8x96xf32>
    %65 = vector.extract_strided_slice %29 {offsets = [1, 9, 0], sizes = [8, 8, 96], strides = [1, 1, 1]} : vector<10x24x96xf32> to vector<8x8x96xf32>
    %66 = vector.extract_strided_slice %30 {offsets = [5, 0], sizes = [1, 96], strides = [1, 1]} : vector<9x96xf32> to vector<1x96xf32>
    %67 = vector.shape_cast %66 : vector<1x96xf32> to vector<96xf32>
    %68 = vector.shape_cast %67 : vector<96xf32> to vector<1x1x96xf32>
    %69 = vector.broadcast %68 : vector<1x1x96xf32> to vector<8x8x96xf32>
    %70 = arith.mulf %65, %69 : vector<8x8x96xf32>
    %71 = arith.addf %64, %70 : vector<8x8x96xf32>
    %72 = vector.extract_strided_slice %29 {offsets = [2, 7, 0], sizes = [8, 8, 96], strides = [1, 1, 1]} : vector<10x24x96xf32> to vector<8x8x96xf32>
    %73 = vector.extract_strided_slice %30 {offsets = [6, 0], sizes = [1, 96], strides = [1, 1]} : vector<9x96xf32> to vector<1x96xf32>
    %74 = vector.shape_cast %73 : vector<1x96xf32> to vector<96xf32>
    %75 = vector.shape_cast %74 : vector<96xf32> to vector<1x1x96xf32>
    %76 = vector.broadcast %75 : vector<1x1x96xf32> to vector<8x8x96xf32>
    %77 = arith.mulf %72, %76 : vector<8x8x96xf32>
    %78 = arith.addf %71, %77 : vector<8x8x96xf32>
    %79 = vector.extract_strided_slice %29 {offsets = [2, 8, 0], sizes = [8, 8, 96], strides = [1, 1, 1]} : vector<10x24x96xf32> to vector<8x8x96xf32>
    %80 = vector.extract_strided_slice %30 {offsets = [7, 0], sizes = [1, 96], strides = [1, 1]} : vector<9x96xf32> to vector<1x96xf32>
    %81 = vector.shape_cast %80 : vector<1x96xf32> to vector<96xf32>
    %82 = vector.shape_cast %81 : vector<96xf32> to vector<1x1x96xf32>
    %83 = vector.broadcast %82 : vector<1x1x96xf32> to vector<8x8x96xf32>
    %84 = arith.mulf %79, %83 : vector<8x8x96xf32>
    %85 = arith.addf %78, %84 : vector<8x8x96xf32>
    %86 = vector.extract_strided_slice %29 {offsets = [2, 9, 0], sizes = [8, 8, 96], strides = [1, 1, 1]} : vector<10x24x96xf32> to vector<8x8x96xf32>
    %87 = vector.extract_strided_slice %30 {offsets = [8, 0], sizes = [1, 96], strides = [1, 1]} : vector<9x96xf32> to vector<1x96xf32>
    %88 = vector.shape_cast %87 : vector<1x96xf32> to vector<96xf32>
    %89 = vector.shape_cast %88 : vector<96xf32> to vector<1x1x96xf32>
    %90 = vector.broadcast %89 : vector<1x1x96xf32> to vector<8x8x96xf32>
    %91 = arith.mulf %86, %90 : vector<8x8x96xf32>
    %92 = arith.addf %85, %91 : vector<8x8x96xf32>
    %93 = vector.shape_cast %92 : vector<8x8x96xf32> to vector<64x96xf32>
    %94 = vector.extract_strided_slice %93 {offsets = [0, 0], sizes = [64, 8], strides = [1, 1]} : vector<64x96xf32> to vector<64x8xf32>
    %95 = vector.extract_strided_slice %93 {offsets = [0, 32], sizes = [64, 8], strides = [1, 1]} : vector<64x96xf32> to vector<64x8xf32>
    %96 = vector.extract_strided_slice %93 {offsets = [0, 64], sizes = [64, 8], strides = [1, 1]} : vector<64x96xf32> to vector<64x8xf32>
    %cst_21 = arith.constant dense<0xFF800000> : vector<64xf32>
    %97 = vector.multi_reduction <maximumf>, %94, %cst_21 [1] : vector<64x8xf32> to vector<64xf32>
    %98 = vector.shape_cast %97 : vector<64xf32> to vector<64x1xf32>
    %99 = vector.broadcast %98 : vector<64x1xf32> to vector<64x8xf32>
    %100 = arith.subf %94, %99 : vector<64x8xf32>
    %101 = math.exp %100 : vector<64x8xf32>
    %cst_22 = arith.constant dense<0.000000e+00> : vector<64xf32>
    %102 = vector.multi_reduction <add>, %101, %cst_22 [1] : vector<64x8xf32> to vector<64xf32>
    %103 = vector.shape_cast %102 : vector<64xf32> to vector<64x1xf32>
    %104 = vector.broadcast %103 : vector<64x1xf32> to vector<64x8xf32>
    %105 = arith.divf %101, %104 : vector<64x8xf32>
    %cst_23 = arith.constant 0.353553385 : f32
    %106 = vector.broadcast %cst_23 : f32 to vector<64x8xf32>
    %107 = arith.mulf %105, %106 : vector<64x8xf32>
    %cst_24 = arith.constant dense<0xFF800000> : vector<8xf32>
    %108 = vector.multi_reduction <maximumf>, %95, %cst_24 [0] : vector<64x8xf32> to vector<8xf32>
    %109 = vector.shape_cast %108 : vector<8xf32> to vector<1x8xf32>
    %110 = vector.broadcast %109 : vector<1x8xf32> to vector<64x8xf32>
    %111 = arith.subf %95, %110 : vector<64x8xf32>
    %112 = math.exp %111 : vector<64x8xf32>
    %cst_25 = arith.constant dense<0.000000e+00> : vector<8xf32>
    %113 = vector.multi_reduction <add>, %112, %cst_25 [0] : vector<64x8xf32> to vector<8xf32>
    %114 = vector.shape_cast %113 : vector<8xf32> to vector<1x8xf32>
    %115 = vector.broadcast %114 : vector<1x8xf32> to vector<64x8xf32>
    %116 = arith.divf %112, %115 : vector<64x8xf32>
    %cst_26 = arith.constant dense<0.000000e+00> : vector<8x8xf32>
    %117 = tpu.matmul %116, %96, %cst_26 {dimension_numbers = #tpu.dot_dimension_numbers<[0], [0], [1], [1], [0, 1, 1, 1], [], []>} : vector<64x8xf32>, vector<64x8xf32>, vector<8x8xf32> -> vector<8x8xf32>
    %cst_27 = arith.constant dense<0.000000e+00> : vector<64x8xf32>
    %118 = tpu.matmul %107, %117, %cst_27 {dimension_numbers = #tpu.dot_dimension_numbers<[1], [0], [0], [1], [0, 0, 1, 1], [], []>} : vector<64x8xf32>, vector<8x8xf32>, vector<64x8xf32> -> vector<64x8xf32>
    %119 = vector.extract_strided_slice %93 {offsets = [0, 8], sizes = [64, 8], strides = [1, 1]} : vector<64x96xf32> to vector<64x8xf32>
    %120 = vector.extract_strided_slice %93 {offsets = [0, 40], sizes = [64, 8], strides = [1, 1]} : vector<64x96xf32> to vector<64x8xf32>
    %121 = vector.extract_strided_slice %93 {offsets = [0, 72], sizes = [64, 8], strides = [1, 1]} : vector<64x96xf32> to vector<64x8xf32>
    %cst_28 = arith.constant dense<0xFF800000> : vector<64xf32>
    %122 = vector.multi_reduction <maximumf>, %119, %cst_28 [1] : vector<64x8xf32> to vector<64xf32>
    %123 = vector.shape_cast %122 : vector<64xf32> to vector<64x1xf32>
    %124 = vector.broadcast %123 : vector<64x1xf32> to vector<64x8xf32>
    %125 = arith.subf %119, %124 : vector<64x8xf32>
    %126 = math.exp %125 : vector<64x8xf32>
    %cst_29 = arith.constant dense<0.000000e+00> : vector<64xf32>
    %127 = vector.multi_reduction <add>, %126, %cst_29 [1] : vector<64x8xf32> to vector<64xf32>
    %128 = vector.shape_cast %127 : vector<64xf32> to vector<64x1xf32>
    %129 = vector.broadcast %128 : vector<64x1xf32> to vector<64x8xf32>
    %130 = arith.divf %126, %129 : vector<64x8xf32>
    %cst_30 = arith.constant 0.353553385 : f32
    %131 = vector.broadcast %cst_30 : f32 to vector<64x8xf32>
    %132 = arith.mulf %130, %131 : vector<64x8xf32>
    %cst_31 = arith.constant dense<0xFF800000> : vector<8xf32>
    %133 = vector.multi_reduction <maximumf>, %120, %cst_31 [0] : vector<64x8xf32> to vector<8xf32>
    %134 = vector.shape_cast %133 : vector<8xf32> to vector<1x8xf32>
    %135 = vector.broadcast %134 : vector<1x8xf32> to vector<64x8xf32>
    %136 = arith.subf %120, %135 : vector<64x8xf32>
    %137 = math.exp %136 : vector<64x8xf32>
    %cst_32 = arith.constant dense<0.000000e+00> : vector<8xf32>
    %138 = vector.multi_reduction <add>, %137, %cst_32 [0] : vector<64x8xf32> to vector<8xf32>
    %139 = vector.shape_cast %138 : vector<8xf32> to vector<1x8xf32>
    %140 = vector.broadcast %139 : vector<1x8xf32> to vector<64x8xf32>
    %141 = arith.divf %137, %140 : vector<64x8xf32>
    %cst_33 = arith.constant dense<0.000000e+00> : vector<8x8xf32>
    %142 = tpu.matmul %141, %121, %cst_33 {dimension_numbers = #tpu.dot_dimension_numbers<[0], [0], [1], [1], [0, 1, 1, 1], [], []>} : vector<64x8xf32>, vector<64x8xf32>, vector<8x8xf32> -> vector<8x8xf32>
    %cst_34 = arith.constant dense<0.000000e+00> : vector<64x8xf32>
    %143 = tpu.matmul %132, %142, %cst_34 {dimension_numbers = #tpu.dot_dimension_numbers<[1], [0], [0], [1], [0, 0, 1, 1], [], []>} : vector<64x8xf32>, vector<8x8xf32>, vector<64x8xf32> -> vector<64x8xf32>
    %144 = vector.extract_strided_slice %93 {offsets = [0, 16], sizes = [64, 8], strides = [1, 1]} : vector<64x96xf32> to vector<64x8xf32>
    %145 = vector.extract_strided_slice %93 {offsets = [0, 48], sizes = [64, 8], strides = [1, 1]} : vector<64x96xf32> to vector<64x8xf32>
    %146 = vector.extract_strided_slice %93 {offsets = [0, 80], sizes = [64, 8], strides = [1, 1]} : vector<64x96xf32> to vector<64x8xf32>
    %cst_35 = arith.constant dense<0xFF800000> : vector<64xf32>
    %147 = vector.multi_reduction <maximumf>, %144, %cst_35 [1] : vector<64x8xf32> to vector<64xf32>
    %148 = vector.shape_cast %147 : vector<64xf32> to vector<64x1xf32>
    %149 = vector.broadcast %148 : vector<64x1xf32> to vector<64x8xf32>
    %150 = arith.subf %144, %149 : vector<64x8xf32>
    %151 = math.exp %150 : vector<64x8xf32>
    %cst_36 = arith.constant dense<0.000000e+00> : vector<64xf32>
    %152 = vector.multi_reduction <add>, %151, %cst_36 [1] : vector<64x8xf32> to vector<64xf32>
    %153 = vector.shape_cast %152 : vector<64xf32> to vector<64x1xf32>
    %154 = vector.broadcast %153 : vector<64x1xf32> to vector<64x8xf32>
    %155 = arith.divf %151, %154 : vector<64x8xf32>
    %cst_37 = arith.constant 0.353553385 : f32
    %156 = vector.broadcast %cst_37 : f32 to vector<64x8xf32>
    %157 = arith.mulf %155, %156 : vector<64x8xf32>
    %cst_38 = arith.constant dense<0xFF800000> : vector<8xf32>
    %158 = vector.multi_reduction <maximumf>, %145, %cst_38 [0] : vector<64x8xf32> to vector<8xf32>
    %159 = vector.shape_cast %158 : vector<8xf32> to vector<1x8xf32>
    %160 = vector.broadcast %159 : vector<1x8xf32> to vector<64x8xf32>
    %161 = arith.subf %145, %160 : vector<64x8xf32>
    %162 = math.exp %161 : vector<64x8xf32>
    %cst_39 = arith.constant dense<0.000000e+00> : vector<8xf32>
    %163 = vector.multi_reduction <add>, %162, %cst_39 [0] : vector<64x8xf32> to vector<8xf32>
    %164 = vector.shape_cast %163 : vector<8xf32> to vector<1x8xf32>
    %165 = vector.broadcast %164 : vector<1x8xf32> to vector<64x8xf32>
    %166 = arith.divf %162, %165 : vector<64x8xf32>
    %cst_40 = arith.constant dense<0.000000e+00> : vector<8x8xf32>
    %167 = tpu.matmul %166, %146, %cst_40 {dimension_numbers = #tpu.dot_dimension_numbers<[0], [0], [1], [1], [0, 1, 1, 1], [], []>} : vector<64x8xf32>, vector<64x8xf32>, vector<8x8xf32> -> vector<8x8xf32>
    %cst_41 = arith.constant dense<0.000000e+00> : vector<64x8xf32>
    %168 = tpu.matmul %157, %167, %cst_41 {dimension_numbers = #tpu.dot_dimension_numbers<[1], [0], [0], [1], [0, 0, 1, 1], [], []>} : vector<64x8xf32>, vector<8x8xf32>, vector<64x8xf32> -> vector<64x8xf32>
    %169 = vector.extract_strided_slice %93 {offsets = [0, 24], sizes = [64, 8], strides = [1, 1]} : vector<64x96xf32> to vector<64x8xf32>
    %170 = vector.extract_strided_slice %93 {offsets = [0, 56], sizes = [64, 8], strides = [1, 1]} : vector<64x96xf32> to vector<64x8xf32>
    %171 = vector.extract_strided_slice %93 {offsets = [0, 88], sizes = [64, 8], strides = [1, 1]} : vector<64x96xf32> to vector<64x8xf32>
    %cst_42 = arith.constant dense<0xFF800000> : vector<64xf32>
    %172 = vector.multi_reduction <maximumf>, %169, %cst_42 [1] : vector<64x8xf32> to vector<64xf32>
    %173 = vector.shape_cast %172 : vector<64xf32> to vector<64x1xf32>
    %174 = vector.broadcast %173 : vector<64x1xf32> to vector<64x8xf32>
    %175 = arith.subf %169, %174 : vector<64x8xf32>
    %176 = math.exp %175 : vector<64x8xf32>
    %cst_43 = arith.constant dense<0.000000e+00> : vector<64xf32>
    %177 = vector.multi_reduction <add>, %176, %cst_43 [1] : vector<64x8xf32> to vector<64xf32>
    %178 = vector.shape_cast %177 : vector<64xf32> to vector<64x1xf32>
    %179 = vector.broadcast %178 : vector<64x1xf32> to vector<64x8xf32>
    %180 = arith.divf %176, %179 : vector<64x8xf32>
    %cst_44 = arith.constant 0.353553385 : f32
    %181 = vector.broadcast %cst_44 : f32 to vector<64x8xf32>
    %182 = arith.mulf %180, %181 : vector<64x8xf32>
    %cst_45 = arith.constant dense<0xFF800000> : vector<8xf32>
    %183 = vector.multi_reduction <maximumf>, %170, %cst_45 [0] : vector<64x8xf32> to vector<8xf32>
    %184 = vector.shape_cast %183 : vector<8xf32> to vector<1x8xf32>
    %185 = vector.broadcast %184 : vector<1x8xf32> to vector<64x8xf32>
    %186 = arith.subf %170, %185 : vector<64x8xf32>
    %187 = math.exp %186 : vector<64x8xf32>
    %cst_46 = arith.constant dense<0.000000e+00> : vector<8xf32>
    %188 = vector.multi_reduction <add>, %187, %cst_46 [0] : vector<64x8xf32> to vector<8xf32>
    %189 = vector.shape_cast %188 : vector<8xf32> to vector<1x8xf32>
    %190 = vector.broadcast %189 : vector<1x8xf32> to vector<64x8xf32>
    %191 = arith.divf %187, %190 : vector<64x8xf32>
    %cst_47 = arith.constant dense<0.000000e+00> : vector<8x8xf32>
    %192 = tpu.matmul %191, %171, %cst_47 {dimension_numbers = #tpu.dot_dimension_numbers<[0], [0], [1], [1], [0, 1, 1, 1], [], []>} : vector<64x8xf32>, vector<64x8xf32>, vector<8x8xf32> -> vector<8x8xf32>
    %cst_48 = arith.constant dense<0.000000e+00> : vector<64x8xf32>
    %193 = tpu.matmul %182, %192, %cst_48 {dimension_numbers = #tpu.dot_dimension_numbers<[1], [0], [0], [1], [0, 0, 1, 1], [], []>} : vector<64x8xf32>, vector<8x8xf32>, vector<64x8xf32> -> vector<64x8xf32>
    %194 = tpu.concatenate %118, %143, %168, %193 in 1 : vector<64x8xf32>, vector<64x8xf32>, vector<64x8xf32>, vector<64x8xf32> -> vector<64x32xf32>
    %195 = arith.negf %194 : vector<64x32xf32>
    %196 = math.exp %195 : vector<64x32xf32>
    %cst_49 = arith.constant 1.000000e+00 : f32
    %197 = vector.broadcast %cst_49 : f32 to vector<64x32xf32>
    %198 = arith.addf %197, %196 : vector<64x32xf32>
    %199 = arith.divf %197, %198 : vector<64x32xf32>
    %200 = arith.mulf %194, %199 : vector<64x32xf32>
    %c0_50 = arith.constant 0 : index
    %c0_51 = arith.constant 0 : index
    %201 = vector.load %arg5[%c0_50, %c0_51] : memref<8x32xf32, #tpu.memory_space<vmem>>, vector<8x32xf32>
    %cst_52 = arith.constant dense<0.000000e+00> : vector<8x64xf32>
    %202 = tpu.matmul %201, %200, %cst_52 {dimension_numbers = #tpu.dot_dimension_numbers<[1], [1], [0], [0], [0, 0, 1, 0], [], []>} : vector<8x32xf32>, vector<64x32xf32>, vector<8x64xf32> -> vector<8x64xf32>
    %c0_53 = arith.constant 0 : index
    %c0_54 = arith.constant 0 : index
    %203 = vector.load %arg6[%c0_53, %c0_54] : memref<8x1xf32, #tpu.memory_space<vmem>>, vector<8x1xf32>
    %cst_55 = arith.constant dense<0.000000e+00> : vector<64xf32>
    %204 = vector.multi_reduction <add>, %202, %cst_55 [0] : vector<8x64xf32> to vector<64xf32>
    %205 = vector.shape_cast %204 : vector<64xf32> to vector<1x64xf32>
    %cst_56 = arith.constant 8.000000e+00 : f32
    %206 = vector.broadcast %cst_56 : f32 to vector<1x64xf32>
    %207 = arith.divf %205, %206 : vector<1x64xf32>
    %208 = vector.broadcast %207 : vector<1x64xf32> to vector<8x64xf32>
    %209 = arith.subf %202, %208 : vector<8x64xf32>
    %210 = arith.mulf %209, %209 : vector<8x64xf32>
    %cst_57 = arith.constant dense<0.000000e+00> : vector<64xf32>
    %211 = vector.multi_reduction <add>, %210, %cst_57 [0] : vector<8x64xf32> to vector<64xf32>
    %212 = vector.shape_cast %211 : vector<64xf32> to vector<1x64xf32>
    %cst_58 = arith.constant 8.000000e+00 : f32
    %213 = vector.broadcast %cst_58 : f32 to vector<1x64xf32>
    %214 = arith.divf %212, %213 : vector<1x64xf32>
    %215 = vector.broadcast %207 : vector<1x64xf32> to vector<8x64xf32>
    %216 = arith.subf %202, %215 : vector<8x64xf32>
    %cst_59 = arith.constant 9.99999974E-6 : f32
    %217 = vector.broadcast %cst_59 : f32 to vector<1x64xf32>
    %218 = arith.addf %214, %217 : vector<1x64xf32>
    %219 = math.rsqrt %218 : vector<1x64xf32>
    %220 = vector.broadcast %219 : vector<1x64xf32> to vector<8x64xf32>
    %221 = arith.mulf %216, %220 : vector<8x64xf32>
    %222 = vector.broadcast %203 : vector<8x1xf32> to vector<8x64xf32>
    %223 = arith.mulf %221, %222 : vector<8x64xf32>
    %c0_60 = arith.constant 0 : index
    %c0_61 = arith.constant 0 : index
    %c0_62 = arith.constant 0 : index
    %224 = vector.load %arg7[%c0_60, %c0_61, %c0_62] : memref<1x8x64xf32, #tpu.memory_space<vmem>>, vector<1x8x64xf32>
    %225 = vector.shape_cast %224 : vector<1x8x64xf32> to vector<8x64xf32>
    %226 = vector.shape_cast %223 : vector<8x64xf32> to vector<1x8x64xf32>
    tpu.vector_store %arg7[%c0_60, %c0_61, %c0_62], %226 {strides = array<i32>} : memref<1x8x64xf32, #tpu.memory_space<vmem>>, vector<1x8x64xf32>,
    return
  }
  func.func @transform_0(%arg0: i32) -> (i32, i32, i32) {
    %c0_i32 = arith.constant 0 : i32
    %c0_i32_0 = arith.constant 0 : i32
    %c0_i32_1 = arith.constant 0 : i32
    return %arg0, %c0_i32, %c0_i32_0 : i32, i32, i32
  }
  func.func @transform_1(%arg0: i32) -> (i32, i32) {
    %c0_i32 = arith.constant 0 : i32
    %c0_i32_0 = arith.constant 0 : i32
    %c0_i32_1 = arith.constant 0 : i32
    return %c0_i32, %c0_i32_0 : i32, i32
  }
  func.func @transform_2(%arg0: i32) -> (i32, i32) {
    %c0_i32 = arith.constant 0 : i32
    %c0_i32_0 = arith.constant 0 : i32
    %c0_i32_1 = arith.constant 0 : i32
    return %c0_i32, %c0_i32_0 : i32, i32
  }
  func.func @transform_3(%arg0: i32) -> (i32, i32) {
    %c0_i32 = arith.constant 0 : i32
    %c0_i32_0 = arith.constant 0 : i32
    %c0_i32_1 = arith.constant 0 : i32
    return %c0_i32, %c0_i32_0 : i32, i32
  }
  func.func @transform_4(%arg0: i32) -> (i32, i32) {
    %c0_i32 = arith.constant 0 : i32
    %c0_i32_0 = arith.constant 0 : i32
    %c0_i32_1 = arith.constant 0 : i32
    return %c0_i32, %c0_i32_0 : i32, i32
  }
  func.func @transform_5(%arg0: i32) -> (i32, i32) {
    %c0_i32 = arith.constant 0 : i32
    %c0_i32_0 = arith.constant 0 : i32
    %c0_i32_1 = arith.constant 0 : i32
    return %c0_i32, %c0_i32_0 : i32, i32
  }
  func.func @transform_6(%arg0: i32) -> (i32, i32, i32) {
    %c0_i32 = arith.constant 0 : i32
    %c0_i32_0 = arith.constant 0 : i32
    %c0_i32_1 = arith.constant 0 : i32
    return %arg0, %c0_i32, %c0_i32_0 : i32, i32, i32
  }
}

</mosaic_0001>

<llo_original>
// kernel: tpu_custom_call.1
$region0: #{tpu_custom_call.1}
  #allocation0 [shape = 'u32[]', space=smem, size = 0x4, offset = 0x4, fixed_abs, tag = 'smem constant byte address 0x4 - core index']
  #allocation1 [shape = 'u32[72,128]{1,0:T(1,128)}', space=vmem, size = 0x9000, scoped, tag = 'internal scratch']
  #allocation2 [shape = 'f32[10,24,96]{2,1,0:T(8,128)}', space=vmem, size = 0x1e000, scoped, tag = 'scratch operand']
  %s0 = inlined_call_operand.vmem [shape: f32[2,8,64], index: 0, kind: input, shape index: {}]
  %s1 = inlined_call_operand.vmem [shape: f32[8,1], index: 1, kind: input, shape index: {}]
  %s2 = inlined_call_operand.hbm [shape: f32[8,96], index: 2, kind: input, shape index: {}]
  %s3 = inlined_call_operand.hbm [shape: f32[9,96], index: 3, kind: input, shape index: {}]
  %s4 = inlined_call_operand.hbm [shape: f32[8,32], index: 4, kind: input, shape index: {}]
  %s5 = inlined_call_operand.vmem [shape: f32[8,1], index: 5, kind: input, shape index: {}]
  %s6 = inlined_call_operand.hbm [shape: f32[2,8,64], index: 6, kind: output, shape index: {}]
  %s7 = sld [smem:[#allocation0]]
  $region69: #{tpu_custom_call.1} parent=0
    _
  %s9 = ssub.s32 1, %s7
  %s10 = scalar_select 0, %s9, %s7
  $region1: #{tpu_custom_call.1} parent=0
    #allocation3 [shape = 'u8[4096]{0}', space=vmem, size = 0x1000, scoped, tag = 'input window, operand 2, single buffered']
    #allocation4 [shape = 's32[2]{0}', space=sflag, size = 0x8, scoped, tag = 'scoped memory for tpu_custom_call.1']
    #allocation5 [shape = 's32[2]{0}', space=sflag, size = 0x8, scoped, tag = 'scoped memory for tpu_custom_call.1']
    #allocation6 [shape = 'u8[8192]{0}', space=vmem, size = 0x2000, scoped, tag = 'input window, operand 3, single buffered']
    #allocation7 [shape = 's32[1]{0}', space=sflag, size = 0x4, scoped, tag = 'scoped memory for tpu_custom_call.1']
    #allocation8 [shape = 'u8[4096]{0}', space=vmem, size = 0x1000, scoped, tag = 'input window, operand 4, single buffered']
    #allocation9 [shape = 'u8[8192]{0}', space=vmem, size = 0x2000, scoped, tag = 'output window, operand 0']
    %11 = vsyncpa [#allocation4], 0
    %12 = vsyncpa [#allocation7], 0
    %13 = vsyncpa [#allocation5], 0
    %s14 = scalar_lea.sflag [#allocation5], 1
    %15 = vsyncpa %s14, 0
    loop: start=0, step=1, limit=4
    $region2: #{tpu_custom_call.1} parent=1 // loop_pre_header
      _
    $region3: #{tpu_custom_call.1} parent=1 // loop_header
      %s17 = sphi 0, %s21
      %p18 = scmp.ge.s32.totalorder %s17, 4
      %s27 = sphi 0, %s29
      %s30 = sphi 0, %s27
      %s31 = sphi 0, %s30
      %s47 = sphi 0, %s31
      %s51 = sphi 0, %s51
      %s53 = sphi 0, %s51
      %s54 = sphi 0, %s53
      %s68 = sphi 0, %s54
      %s72 = sphi 0, %s72
      %s74 = sphi 0, %s72
      %s75 = sphi 0, %s74
      %s89 = sphi 0, %s75
      %s93 = sphi 0, %s93
      %s95 = sphi 0, %s93
      %s96 = sphi 0, %s95
      %s110 = sphi 0, %s96
      %s114 = sphi 0, %s114
      %s116 = sphi 0, %s114
      %s117 = sphi 0, %s116
      %s131 = sphi 0, %s117
      %s135 = sphi 0, %s135
      %s137 = sphi 0, %s135
      %s138 = sphi 0, %s137
      %s152 = sphi 0, %s138
      %s158 = sphi 0, %s160
      %s161 = sphi 0, %s158
      %s162 = sphi 0, %s161
      %s178 = sphi 0, %s162
    $region4: #{tpu_custom_call.1} parent=1 // loop_header_branch
      %20 = sbr.rel (%p18) target = $region8
    $region5: #{tpu_custom_call.1} parent=1 // loop_body
      %s22 = ssub.s32 %s17, 1
      %s23 = ssub.s32 %s17, 2
      %s24 = sadd.s32 %s17, 1
      %s25 = ssub.s32 %s17, %s24
      %p26 = scmp.eq.s32.totalorder %s25, 0
      %s28 = sadd.s32 %s27, 1
      %s29 = scalar_select %p26, %s27, %s28
      %p32 = pneg %p26
      %p33 = scmp.eq.s32.totalorder %s17, 1
      %p34 = por %p32, %p33
      %p35 = scmp.ne.s32.totalorder %s27, %s30
      %p36 = scmp.eq.s32.totalorder %s17, 0
      %p37 = por %p35, %p36
      %p38 = scmp.ne.s32.totalorder %s27, %s30
      %p39 = scmp.eq.s32.totalorder %s22, 1
      %p40 = por %p38, %p39
      %p41 = scmp.ne.s32.totalorder %s30, %s31
      %p42 = scmp.eq.s32.totalorder %s22, 0
      %p43 = por %p41, %p42
      %p44 = scmp.ne.s32.totalorder %s30, %s31
      %p45 = scmp.eq.s32.totalorder %s23, 1
      %p46 = por %p44, %p45
      %p48 = scmp.ne.s32.totalorder %s31, %s47
      %p49 = scmp.eq.s32.totalorder %s23, 0
      %p50 = por %p48, %p49
      %s52 = sadd.s32 %s51, 1
      %p55 = scmp.eq.s32.totalorder %s17, 1
      %p56 = scmp.ne.s32.totalorder %s51, %s53
      %p57 = scmp.eq.s32.totalorder %s17, 0
      %p58 = por %p56, %p57
      %p59 = scmp.ne.s32.totalorder %s51, %s53
      %p60 = scmp.eq.s32.totalorder %s22, 1
      %p61 = por %p59, %p60
      %p62 = scmp.ne.s32.totalorder %s53, %s54
      %p63 = scmp.eq.s32.totalorder %s22, 0
      %p64 = por %p62, %p63
      %p65 = scmp.ne.s32.totalorder %s53, %s54
      %p66 = scmp.eq.s32.totalorder %s23, 1
      %p67 = por %p65, %p66
      %p69 = scmp.ne.s32.totalorder %s54, %s68
      %p70 = scmp.eq.s32.totalorder %s23, 0
      %p71 = por %p69, %p70
      %s73 = sadd.s32 %s72, 1
      %p76 = scmp.eq.s32.totalorder %s17, 1
      %p77 = scmp.ne.s32.totalorder %s72, %s74
      %p78 = scmp.eq.s32.totalorder %s17, 0
      %p79 = por %p77, %p78
      %p80 = scmp.ne.s32.totalorder %s72, %s74
      %p81 = scmp.eq.s32.totalorder %s22, 1
      %p82 = por %p80, %p81
      %p83 = scmp.ne.s32.totalorder %s74, %s75
      %p84 = scmp.eq.s32.totalorder %s22, 0
      %p85 = por %p83, %p84
      %p86 = scmp.ne.s32.totalorder %s74, %s75
      %p87 = scmp.eq.s32.totalorder %s23, 1
      %p88 = por %p86, %p87
      %p90 = scmp.ne.s32.totalorder %s75, %s89
      %p91 = scmp.eq.s32.totalorder %s23, 0
      %p92 = por %p90, %p91
      %s94 = sadd.s32 %s93, 1
      %p97 = scmp.eq.s32.totalorder %s17, 1
      %p98 = scmp.ne.s32.totalorder %s93, %s95
      %p99 = scmp.eq.s32.totalorder %s17, 0
      %p100 = por %p98, %p99
      %p101 = scmp.ne.s32.totalorder %s93, %s95
      %p102 = scmp.eq.s32.totalorder %s22, 1
      %p103 = por %p101, %p102
      %p104 = scmp.ne.s32.totalorder %s95, %s96
      %p105 = scmp.eq.s32.totalorder %s22, 0
      %p106 = por %p104, %p105
      %p107 = scmp.ne.s32.totalorder %s95, %s96
      %p108 = scmp.eq.s32.totalorder %s23, 1
      %p109 = por %p107, %p108
      %p111 = scmp.ne.s32.totalorder %s96, %s110
      %p112 = scmp.eq.s32.totalorder %s23, 0
      %p113 = por %p111, %p112
      %s115 = sadd.s32 %s114, 1
      %p118 = scmp.eq.s32.totalorder %s17, 1
      %p119 = scmp.ne.s32.totalorder %s114, %s116
      %p120 = scmp.eq.s32.totalorder %s17, 0
      %p121 = por %p119, %p120
      %p122 = scmp.ne.s32.totalorder %s114, %s116
      %p123 = scmp.eq.s32.totalorder %s22, 1
      %p124 = por %p122, %p123
      %p125 = scmp.ne.s32.totalorder %s116, %s117
      %p126 = scmp.eq.s32.totalorder %s22, 0
      %p127 = por %p125, %p126
      %p128 = scmp.ne.s32.totalorder %s116, %s117
      %p129 = scmp.eq.s32.totalorder %s23, 1
      %p130 = por %p128, %p129
      %p132 = scmp.ne.s32.totalorder %s117, %s131
      %p133 = scmp.eq.s32.totalorder %s23, 0
      %p134 = por %p132, %p133
      %s136 = sadd.s32 %s135, 1
      %p139 = scmp.eq.s32.totalorder %s17, 1
      %p140 = scmp.ne.s32.totalorder %s135, %s137
      %p141 = scmp.eq.s32.totalorder %s17, 0
      %p142 = por %p140, %p141
      %p143 = scmp.ne.s32.totalorder %s135, %s137
      %p144 = scmp.eq.s32.totalorder %s22, 1
      %p145 = por %p143, %p144
      %p146 = scmp.ne.s32.totalorder %s137, %s138
      %p147 = scmp.eq.s32.totalorder %s22, 0
      %p148 = por %p146, %p147
      %p149 = scmp.ne.s32.totalorder %s137, %s138
      %p150 = scmp.eq.s32.totalorder %s23, 1
      %p151 = por %p149, %p150
      %p153 = scmp.ne.s32.totalorder %s138, %s152
      %p154 = scmp.eq.s32.totalorder %s23, 0
      %p155 = por %p153, %p154
      %s156 = ssub.s32 %s17, %s24
      %p157 = scmp.eq.s32.totalorder %s156, 0
      %s159 = sadd.s32 %s158, 1
      %s160 = scalar_select %p157, %s158, %s159
      %p163 = pneg %p157
      %p164 = scmp.eq.s32.totalorder %s17, 1
      %p165 = por %p163, %p164
      %p166 = scmp.ne.s32.totalorder %s158, %s161
      %p167 = scmp.eq.s32.totalorder %s17, 0
      %p168 = por %p166, %p167
      %p169 = scmp.ne.s32.totalorder %s158, %s161
      %p170 = scmp.eq.s32.totalorder %s22, 1
      %p171 = por %p169, %p170
      %p172 = scmp.ne.s32.totalorder %s161, %s162
      %p173 = scmp.eq.s32.totalorder %s22, 0
      %p174 = por %p172, %p173
      %p175 = scmp.ne.s32.totalorder %s161, %s162
      %p176 = scmp.eq.s32.totalorder %s23, 1
      %p177 = por %p175, %p176
      %p179 = scmp.ne.s32.totalorder %s162, %s178
      %p180 = scmp.eq.s32.totalorder %s23, 0
      %p181 = por %p179, %p180
      %p182 = scmp.le.s32.totalorder 1, %s17
      %p183 = scmp.lt.s32.totalorder %s17, 3
      %p184 = pnand %p182, %p183
      %p185 = pneg %p184
      // Predicated region
      $region9: #{tpu_custom_call.1} parent=5 // pred_check
        _
      $region10: #{tpu_custom_call.1} parent=5 // pred_check_branch
        %187 = sbr.rel (%p184) target = $region12
      $region11: #{tpu_custom_call.1} parent=5 // pred_region
        %s188 = ssub.s32 %s17, 1
        // Predicated region
        $region13: #{tpu_custom_call.1} parent=11 // pred_check
          %p189 = pneg %p64
        $region14: #{tpu_custom_call.1} parent=11 // pred_check_branch
          %191 = sbr.rel (%p189) target = $region16
        $region15: #{tpu_custom_call.1} parent=11 // pred_region
          _
        $region16: #{tpu_custom_call.1} parent=11 // pred_fallthru
          _
        // Predicated region
        $region17: #{tpu_custom_call.1} parent=11 // pred_check
          %p192 = pneg %p85
        $region18: #{tpu_custom_call.1} parent=11 // pred_check_branch
          %194 = sbr.rel (%p192) target = $region20
        $region19: #{tpu_custom_call.1} parent=11 // pred_region
          %196 = vsyncadd [#allocation4], 0
          %s198 = sshll.u32 %s2, 4
          %s199 = int_to_ptr.hbm [resolvable:$true] %s198
          %s200 = sshll.u32 [#allocation3], 4
          %s201 = int_to_ptr.vmem [resolvable:$true] %s200
          %203 = dma.hbm_to_vmem [thread:$0]  %s199, 128, %s201, [#allocation4]
        $region20: #{tpu_custom_call.1} parent=11 // pred_fallthru
          _
        // Predicated region
        $region21: #{tpu_custom_call.1} parent=11 // pred_check
          %p204 = pneg %p106
        $region22: #{tpu_custom_call.1} parent=11 // pred_check_branch
          %206 = sbr.rel (%p204) target = $region24
        $region23: #{tpu_custom_call.1} parent=11 // pred_region
          %208 = vsyncadd [#allocation7], 0
          %s209 = sshll.u32 %s3, 4
          %s210 = int_to_ptr.hbm [resolvable:$true] %s209
          %s211 = sshll.u32 [#allocation6], 4
          %s212 = int_to_ptr.vmem [resolvable:$true] %s211
          %217 = dma.hbm_to_vmem [thread:$0]  %s210, 256, %s212, [#allocation7], 128, 128, 8
        $region24: #{tpu_custom_call.1} parent=11 // pred_fallthru
          _
        // Predicated region
        $region25: #{tpu_custom_call.1} parent=11 // pred_check
          %p218 = pneg %p127
        $region26: #{tpu_custom_call.1} parent=11 // pred_check_branch
          %220 = sbr.rel (%p218) target = $region28
        $region27: #{tpu_custom_call.1} parent=11 // pred_region
          %222 = vsyncadd [#allocation7], 0
          %s224 = sshll.u32 %s4, 4
          %s225 = int_to_ptr.hbm [resolvable:$true] %s224
          %s226 = sshll.u32 [#allocation8], 4
          %s227 = int_to_ptr.vmem [resolvable:$true] %s226
          %229 = dma.hbm_to_vmem [thread:$0]  %s225, 128, %s227, [#allocation7]
        $region28: #{tpu_custom_call.1} parent=11 // pred_fallthru
          _
        // Predicated region
        $region29: #{tpu_custom_call.1} parent=11 // pred_check
          %p230 = pneg %p148
        $region30: #{tpu_custom_call.1} parent=11 // pred_check_branch
          %232 = sbr.rel (%p230) target = $region32
        $region31: #{tpu_custom_call.1} parent=11 // pred_region
          _
        $region32: #{tpu_custom_call.1} parent=11 // pred_fallthru
          _
      $region12: #{tpu_custom_call.1} parent=5 // pred_fallthru
        _
      %p233 = scmp.lt.s32.totalorder %s17, 2
      // Predicated region
      $region33: #{tpu_custom_call.1} parent=5 // pred_check
        %p234 = pneg %p233
      $region34: #{tpu_custom_call.1} parent=5 // pred_check_branch
        %236 = sbr.rel (%p234) target = $region36
      $region35: #{tpu_custom_call.1} parent=5 // pred_region
        // Predicated region
        $region37: #{tpu_custom_call.1} parent=35 // pred_check
          %p237 = pneg %p37
        $region38: #{tpu_custom_call.1} parent=35 // pred_check_branch
          %239 = sbr.rel (%p237) target = $region40
        $region39: #{tpu_custom_call.1} parent=35 // pred_region
          %p240 = scmp.lt.s32.totalorder %s17, 1
          %s241 = scalar_select %p240, %s17, 1
          %s242 = smul.addr %s241, 8
          %s243 = scalar_lea.vmem %s0, %s242
        $region40: #{tpu_custom_call.1} parent=35 // pred_fallthru
          _
      $region36: #{tpu_custom_call.1} parent=5 // pred_fallthru
        _
      %p244 = scmp.le.s32.totalorder 1, %s17
      %p245 = scmp.lt.s32.totalorder %s17, 3
      %p246 = pnand %p244, %p245
      %p247 = pneg %p246
      // Predicated region
      $region41: #{tpu_custom_call.1} parent=5 // pred_check
        _
      $region42: #{tpu_custom_call.1} parent=5 // pred_check_branch
        %249 = sbr.rel (%p246) target = $region44
      $region43: #{tpu_custom_call.1} parent=5 // pred_region
        %s250 = ssub.s32 %s17, 1
        // Predicated region
        $region45: #{tpu_custom_call.1} parent=43 // pred_check
          %p251 = pneg %p85
        $region46: #{tpu_custom_call.1} parent=43 // pred_check_branch
          %253 = sbr.rel (%p251) target = $region48
        $region47: #{tpu_custom_call.1} parent=43 // pred_region
          %255 = dma.done [#allocation4], 128
        $region48: #{tpu_custom_call.1} parent=43 // pred_fallthru
          _
        // Predicated region
        $region49: #{tpu_custom_call.1} parent=43 // pred_check
          %p256 = pneg %p106
        $region50: #{tpu_custom_call.1} parent=43 // pred_check_branch
          %258 = sbr.rel (%p256) target = $region52
        $region51: #{tpu_custom_call.1} parent=43 // pred_region
          %260 = dma.done [#allocation7], 256
        $region52: #{tpu_custom_call.1} parent=43 // pred_fallthru
          _
        // Predicated region
        $region53: #{tpu_custom_call.1} parent=43 // pred_check
          %p261 = pneg %p127
        $region54: #{tpu_custom_call.1} parent=43 // pred_check_branch
          %263 = sbr.rel (%p261) target = $region56
        $region55: #{tpu_custom_call.1} parent=43 // pred_region
          %265 = dma.done [#allocation7], 128
        $region56: #{tpu_custom_call.1} parent=43 // pred_fallthru
          _
        %p266 = scmp.lt.s32.totalorder %s22, 1
        %s267 = scalar_select %p266, %s22, 1
        %s268 = smul.addr %s267, 8
        %s269 = scalar_lea.vmem %s0, %s268
        %p270 = pneg %p43
        %p271 = pneg %p40
        %p272 = pneg %p64
        %p273 = pneg %p61
        %p274 = pneg %p85
        %p275 = pneg %p82
        %p276 = pneg %p106
        %p277 = pneg %p103
        %p278 = pneg %p127
        %p279 = pneg %p124
        %p280 = pneg %p148
        %p281 = pneg %p145
        %p282 = pneg %p174
        %p283 = pneg %p171
        %s284 = sand.u32 %s161, 1
        %s285 = scalar_lea.sflag [#allocation5], %s284
        %s286 = sand.u32 %s161, 1
        %s287 = smul.addr %s286, 8
        %s288 = scalar_lea.vmem [#allocation9], %s287
        %p289 = scmp.lt.s32.totalorder %s22, 1
        %s290 = scalar_select %p289, %s22, 1
        %s291 = smul.addr %s290, 8
        %s292 = scalar_lea.vmem %s0, %s291
        %v293 = vld [vmem:[%s292] sm:$0xff]
        %v294 = vld [vmem:[%s1] sm:$0xff]
        %vm295 = vcmask 523264
        %v296 = vsel %vm295, %v293, 0.0
        %v297 = vrot.slane %v296, 4
        %v298 = vadd.f32 %v296, %v297
        %v299 = vrot.slane %v298, 2
        %v300 = vadd.f32 %v298, %v299
        %v301 = vrot.slane %v300, 1
        %v302 = vadd.f32 %v300, %v301
        %v303 = vrcp.pop 8.0
        %v304 = vmul.f32 8.0, %v303
        %v305 = vsub.f32 1.0, %v304
        %v306 = vmul.f32 %v303, %v305
        %v307 = vadd.f32 %v303, %v306
        %vm308 = vweird.f32 %v303
        %v309 = vsel %vm308, %v303, %v307
        %v310 = vmul.f32 %v302, %v309
        %v311 = vsub.f32 %v293, %v310
        %v312 = vmul.f32 %v311, %v311
        %v313 = vsel %vm295, %v312, 0.0
        %v314 = vrot.slane %v313, 4
        %v315 = vadd.f32 %v313, %v314
        %v316 = vrot.slane %v315, 2
        %v317 = vadd.f32 %v315, %v316
        %v318 = vrot.slane %v317, 1
        %v319 = vadd.f32 %v317, %v318
        %v320 = vmul.f32 %v319, %v309
        %v321 = vadd.f32 %v320, 1e-05
        %v322 = vrsqrt.pop %v321
        %v323 = vmul.f32 %v322, %v321
        %v324 = vmul.f32 %v323, %v322
        %v325 = vmul.f32 0.5, %v324
        %v326 = vsub.f32 1.5, %v325
        %v327 = vmul.f32 %v322, %v326
        %vm328 = vweird.f32 %v321
        %vm329 = vweird.f32 %v322
        %vm330 = vmor %vm328, %vm329
        %v331 = vsel %vm330, %v322, %v327
        %v332 = vmul.f32 %v311, %v331
        %334 = vset.pattern.permute.xlu0 0
        %335 = vperm.xlu0 %334, %v294
        %v336 = vpop.permute.xlu0 %335
        %v338 = vmul.f32 %v332, %v336
        %v339 = vld [vmem:[#allocation3] sm:$0xff]
        %340 = vxpose.xlu0.b32.start [1/16] %v338, 128
        %341 = vxpose.xlu0.b32.cont [2/16] 0.0, 128
        %342 = vxpose.xlu0.b32.cont [3/16] 0.0, 128
        %343 = vxpose.xlu0.b32.cont [4/16] 0.0, 128
        %344 = vxpose.xlu0.b32.cont [5/16] 0.0, 128
        %345 = vxpose.xlu0.b32.cont [6/16] 0.0, 128
        %346 = vxpose.xlu0.b32.cont [7/16] 0.0, 128
        %347 = vxpose.xlu0.b32.cont [8/16] 0.0, 128
        %348 = vxpose.xlu0.b32.cont [9/16] 0.0, 128
        %349 = vxpose.xlu0.b32.cont [10/16] 0.0, 128
        %350 = vxpose.xlu0.b32.cont [11/16] 0.0, 128
        %351 = vxpose.xlu0.b32.cont [12/16] 0.0, 128
        %352 = vxpose.xlu0.b32.cont [13/16] 0.0, 128
        %353 = vxpose.xlu0.b32.cont [14/16] 0.0, 128
        %354 = vxpose.xlu0.b32.cont [15/16] 0.0, 128
        %355 = vxpose.xlu0.b32.end [16/16] 0.0, 128
        %v356 = vpop.trf.xlu0
        %v357 = vpop.trf.xlu0
        %v358 = vpop.trf.xlu0
        %v359 = vpop.trf.xlu0
        %v360 = vpop.trf.xlu0
        %v361 = vpop.trf.xlu0
        %v362 = vpop.trf.xlu0
        %v363 = vpop.trf.xlu0
        %v364 = vpop.trf.xlu0
        %v365 = vpop.trf.xlu0
        %v366 = vpop.trf.xlu0
        %v367 = vpop.trf.xlu0
        %v368 = vpop.trf.xlu0
        %v369 = vpop.trf.xlu0
        %v370 = vpop.trf.xlu0
        %v371 = vpop.trf.xlu0
        %vm372 = vcmask 64512
        %v374 = vsel %vm372, %v356, 0
        %v377 = vsel %vm372, %v357, 0
        %v380 = vsel %vm372, %v358, 0
        %v383 = vsel %vm372, %v359, 0
        %v386 = vsel %vm372, %v360, 0
        %v389 = vsel %vm372, %v361, 0
        %v392 = vsel %vm372, %v362, 0
        %v395 = vsel %vm372, %v363, 0
        %397 = vmatpush.msra.mxu0 0.0
        %398 = vmatpush.msra.mxu0 0.0
        %399 = vmatpush.msra.mxu0 0.0
        %400 = vmatpush.msra.mxu0 0.0
        %401 = vmatpush.msra.mxu0 0.0
        %402 = vmatpush.msra.mxu0 0.0
        %403 = vmatpush.msra.mxu0 0.0
        %404 = vmatpush.msra.mxu0 0.0
        %405 = vmatpush.msra.mxu0 0.0
        %406 = vmatpush.msra.mxu0 0.0
        %407 = vmatpush.msra.mxu0 0.0
        %408 = vmatpush.msra.mxu0 0.0
        %409 = vmatpush.msra.mxu0 0.0
        %410 = vmatpush.msra.mxu0 0.0
        %411 = vmatpush.msra.mxu0 0.0
        %412 = vmatpush.msra.mxu0 %v339
        %413 = vmatmul.f32.gmra.mxu0 %v374
        %v414 = vpop.f32.mrf.mxu0
        %v415 = vadd.f32 0.0, %v414
        %416 = vmatmul.f32.gmra.mxu0 %v377
        %v417 = vpop.f32.mrf.mxu0
        %v418 = vadd.f32 0.0, %v417
        %419 = vmatmul.f32.gmra.mxu0 %v380
        %v420 = vpop.f32.mrf.mxu0
        %v421 = vadd.f32 0.0, %v420
        %422 = vmatmul.f32.gmra.mxu0 %v383
        %v423 = vpop.f32.mrf.mxu0
        %v424 = vadd.f32 0.0, %v423
        %425 = vmatmul.f32.gmra.mxu0 %v386
        %v426 = vpop.f32.mrf.mxu0
        %v427 = vadd.f32 0.0, %v426
        %428 = vmatmul.f32.gmra.mxu0 %v389
        %v429 = vpop.f32.mrf.mxu0
        %v430 = vadd.f32 0.0, %v429
        %431 = vmatmul.f32.gmra.mxu0 %v392
        %v432 = vpop.f32.mrf.mxu0
        %v433 = vadd.f32 0.0, %v432
        %434 = vmatmul.f32.gmra.mxu0 %v395
        %v435 = vpop.f32.mrf.mxu0
        %v436 = vadd.f32 0.0, %v435
        %437 = vdwg.mxu0
        %vm438 = vcmask 785408
        %439 = vst.msk [vmem:[#allocation2] sm:$0xff] %vm438, 0.0
        %440 = vst.msk [vmem:[#allocation2 + $0x8] sm:$0xff] %vm438, 0.0
        %441 = vst.msk [vmem:[#allocation2 + $0x10] sm:$0xff] %vm438, 0.0
        %442 = vst.msk [vmem:[#allocation2 + $0x18] sm:$0xff] %vm438, 0.0
        %443 = vst.msk [vmem:[#allocation2 + $0x20] sm:$0xff] %vm438, 0.0
        %444 = vst.msk [vmem:[#allocation2 + $0x28] sm:$0xff] %vm438, 0.0
        %445 = vst.msk [vmem:[#allocation2 + $0x30] sm:$0xff] %vm438, 0.0
        %446 = vst.msk [vmem:[#allocation2 + $0x38] sm:$0xff] %vm438, 0.0
        %447 = vst.msk [vmem:[#allocation2 + $0x40] sm:$0xff] %vm438, 0.0
        %448 = vst.msk [vmem:[#allocation2 + $0x48] sm:$0xff] %vm438, 0.0
        %449 = vst.msk [vmem:[#allocation2 + $0x50] sm:$0xff] %vm438, 0.0
        %450 = vst.msk [vmem:[#allocation2 + $0x58] sm:$0xff] %vm438, 0.0
        %451 = vst.msk [vmem:[#allocation2 + $0x60] sm:$0xff] %vm438, 0.0
        %452 = vst.msk [vmem:[#allocation2 + $0x68] sm:$0xff] %vm438, 0.0
        %453 = vst.msk [vmem:[#allocation2 + $0x70] sm:$0xff] %vm438, 0.0
        %454 = vst.msk [vmem:[#allocation2 + $0x78] sm:$0xff] %vm438, 0.0
        %455 = vst.msk [vmem:[#allocation2 + $0x80] sm:$0xff] %vm438, 0.0
        %456 = vst.msk [vmem:[#allocation2 + $0x88] sm:$0xff] %vm438, 0.0
        %457 = vst.msk [vmem:[#allocation2 + $0x90] sm:$0xff] %vm438, 0.0
        %458 = vst.msk [vmem:[#allocation2 + $0x98] sm:$0xff] %vm438, 0.0
        %459 = vst.msk [vmem:[#allocation2 + $0xa0] sm:$0xff] %vm438, 0.0
        %460 = vst.msk [vmem:[#allocation2 + $0xa8] sm:$0xff] %vm438, 0.0
        %461 = vst.msk [vmem:[#allocation2 + $0xb0] sm:$0xff] %vm438, 0.0
        %462 = vst.msk [vmem:[#allocation2 + $0xb8] sm:$0xff] %vm438, 0.0
        %463 = vst.msk [vmem:[#allocation2 + $0xc0] sm:$0xff] %vm438, 0.0
        %464 = vst.msk [vmem:[#allocation2 + $0xc8] sm:$0xff] %vm438, 0.0
        %465 = vst.msk [vmem:[#allocation2 + $0xd0] sm:$0xff] %vm438, 0.0
        %466 = vst.msk [vmem:[#allocation2 + $0xd8] sm:$0xff] %vm438, 0.0
        %467 = vst.msk [vmem:[#allocation2 + $0xe0] sm:$0xff] %vm438, 0.0
        %468 = vst.msk [vmem:[#allocation2 + $0xe8] sm:$0xff] %vm438, 0.0
        %s469 = scalar_lea.vmem [#allocation2], 24
        %470 = vst.msk [vmem:[%s469 + $0x8] sm:$0xff] %vm438, %v415
        %471 = vst.msk [vmem:[%s469 + $0x20] sm:$0xff] %vm438, %v418
        %472 = vst.msk [vmem:[%s469 + $0x38] sm:$0xff] %vm438, %v421
        %473 = vst.msk [vmem:[%s469 + $0x50] sm:$0xff] %vm438, %v424
        %474 = vst.msk [vmem:[%s469 + $0x68] sm:$0xff] %vm438, %v427
        %475 = vst.msk [vmem:[%s469 + $0x80] sm:$0xff] %vm438, %v430
        %476 = vst.msk [vmem:[%s469 + $0x98] sm:$0xff] %vm438, %v433
        %477 = vst.msk [vmem:[%s469 + $0xb0] sm:$0xff] %vm438, %v436
        %v478 = vld [vmem:[#allocation2] sm:$0xff]
        %v479 = vld [vmem:[#allocation2 + $0x8] sm:$0xff]
        %v480 = vld [vmem:[#allocation2 + $0x10] sm:$0xff]
        %v481 = vld [vmem:[#allocation2 + $0x18] sm:$0xff]
        %v482 = vld [vmem:[#allocation2 + $0x20] sm:$0xff]
        %v483 = vld [vmem:[#allocation2 + $0x28] sm:$0xff]
        %v484 = vld [vmem:[#allocation2 + $0x30] sm:$0xff]
        %v485 = vld [vmem:[#allocation2 + $0x38] sm:$0xff]
        %v486 = vld [vmem:[#allocation2 + $0x40] sm:$0xff]
        %v487 = vld [vmem:[#allocation2 + $0x48] sm:$0xff]
        %v488 = vld [vmem:[#allocation2 + $0x50] sm:$0xff]
        %v489 = vld [vmem:[#allocation2 + $0x58] sm:$0xff]
        %v490 = vld [vmem:[#allocation2 + $0x60] sm:$0xff]
        %v491 = vld [vmem:[#allocation2 + $0x68] sm:$0xff]
        %v492 = vld [vmem:[#allocation2 + $0x70] sm:$0xff]
        %v493 = vld [vmem:[#allocation2 + $0x78] sm:$0xff]
        %v494 = vld [vmem:[#allocation2 + $0x80] sm:$0xff]
        %v495 = vld [vmem:[#allocation2 + $0x88] sm:$0xff]
        %v496 = vld [vmem:[#allocation2 + $0x90] sm:$0xff]
        %v497 = vld [vmem:[#allocation2 + $0x98] sm:$0xff]
        %v498 = vld [vmem:[#allocation2 + $0xa0] sm:$0xff]
        %v499 = vld [vmem:[#allocation2 + $0xa8] sm:$0xff]
        %v500 = vld [vmem:[#allocation2 + $0xb0] sm:$0xff]
        %v501 = vld [vmem:[#allocation2 + $0xb8] sm:$0xff]
        %v502 = vld [vmem:[#allocation2 + $0xc0] sm:$0xff]
        %v503 = vld [vmem:[#allocation2 + $0xc8] sm:$0xff]
        %v504 = vld [vmem:[#allocation2 + $0xd0] sm:$0xff]
        %v505 = vld [vmem:[#allocation2 + $0xd8] sm:$0xff]
        %v506 = vld [vmem:[#allocation2 + $0xe0] sm:$0xff]
        %v507 = vld [vmem:[#allocation2 + $0xe8] sm:$0xff]
        %v508 = vld [vmem:[#allocation6] sm:$0xff]
        %v509 = vld [vmem:[#allocation6 + $0x8] sm:$0x1]
        %v510 = vperm.slane %v508, 0
        %v511 = vmul.f32 %v478, %v510
        %v512 = vmul.f32 %v479, %v510
        %v513 = vmul.f32 %v481, %v510
        %v514 = vmul.f32 %v482, %v510
        %v515 = vmul.f32 %v484, %v510
        %v516 = vmul.f32 %v485, %v510
        %v517 = vmul.f32 %v487, %v510
        %v518 = vmul.f32 %v488, %v510
        %v519 = vmul.f32 %v490, %v510
        %v520 = vmul.f32 %v491, %v510
        %v521 = vmul.f32 %v493, %v510
        %v522 = vmul.f32 %v494, %v510
        %v523 = vmul.f32 %v496, %v510
        %v524 = vmul.f32 %v497, %v510
        %v525 = vmul.f32 %v499, %v510
        %v526 = vmul.f32 %v500, %v510
        %v527 = vperm.slane %v508, 1
        %v528 = vmul.f32 %v479, %v527
        %v529 = vmul.f32 %v482, %v527
        %v530 = vmul.f32 %v485, %v527
        %v531 = vmul.f32 %v488, %v527
        %v532 = vmul.f32 %v491, %v527
        %v533 = vmul.f32 %v494, %v527
        %v534 = vmul.f32 %v497, %v527
        %v535 = vmul.f32 %v500, %v527
        %v544 = vrot.slane %v528, 1
        %v545 = vrot.slane %v529, 1
        %v546 = vrot.slane %v530, 1
        %v547 = vrot.slane %v531, 1
        %v548 = vrot.slane %v532, 1
        %v549 = vrot.slane %v533, 1
        %v550 = vrot.slane %v534, 1
        %v551 = vrot.slane %v535, 1
        %v560 = vadd.f32 %v511, %v544
        %v561 = vadd.f32 %v512, %v544
        %v562 = vadd.f32 %v513, %v545
        %v563 = vadd.f32 %v514, %v545
        %v564 = vadd.f32 %v515, %v546
        %v565 = vadd.f32 %v516, %v546
        %v566 = vadd.f32 %v517, %v547
        %v567 = vadd.f32 %v518, %v547
        %v568 = vadd.f32 %v519, %v548
        %v569 = vadd.f32 %v520, %v548
        %v570 = vadd.f32 %v521, %v549
        %v571 = vadd.f32 %v522, %v549
        %v572 = vadd.f32 %v523, %v550
        %v573 = vadd.f32 %v524, %v550
        %v574 = vadd.f32 %v525, %v551
        %v575 = vadd.f32 %v526, %v551
        %v576 = vperm.slane %v508, 2
        %v577 = vmul.f32 %v479, %v576
        %v578 = vmul.f32 %v480, %v576
        %v579 = vmul.f32 %v482, %v576
        %v580 = vmul.f32 %v483, %v576
        %v581 = vmul.f32 %v485, %v576
        %v582 = vmul.f32 %v486, %v576
        %v583 = vmul.f32 %v488, %v576
        %v584 = vmul.f32 %v489, %v576
        %v585 = vmul.f32 %v491, %v576
        %v586 = vmul.f32 %v492, %v576
        %v587 = vmul.f32 %v494, %v576
        %v588 = vmul.f32 %v495, %v576
        %v589 = vmul.f32 %v497, %v576
        %v590 = vmul.f32 %v498, %v576
        %v591 = vmul.f32 %v500, %v576
        %v592 = vmul.f32 %v501, %v576
        %vm609 = vcmask 1045504
        %v610 = vrot.slane %v577, 2
        %v611 = vrot.slane %v578, 2
        %v612 = vsel %vm609, %v610, %v611
        %v613 = vrot.slane %v579, 2
        %v614 = vrot.slane %v580, 2
        %v615 = vsel %vm609, %v613, %v614
        %v616 = vrot.slane %v581, 2
        %v617 = vrot.slane %v582, 2
        %v618 = vsel %vm609, %v616, %v617
        %v619 = vrot.slane %v583, 2
        %v620 = vrot.slane %v584, 2
        %v621 = vsel %vm609, %v619, %v620
        %v622 = vrot.slane %v585, 2
        %v623 = vrot.slane %v586, 2
        %v624 = vsel %vm609, %v622, %v623
        %v625 = vrot.slane %v587, 2
        %v626 = vrot.slane %v588, 2
        %v627 = vsel %vm609, %v625, %v626
        %v628 = vrot.slane %v589, 2
        %v629 = vrot.slane %v590, 2
        %v630 = vsel %vm609, %v628, %v629
        %v631 = vrot.slane %v591, 2
        %v632 = vrot.slane %v592, 2
        %v633 = vsel %vm609, %v631, %v632
        %v650 = vadd.f32 %v560, %v610
        %v651 = vadd.f32 %v561, %v612
        %v652 = vadd.f32 %v562, %v613
        %v653 = vadd.f32 %v563, %v615
        %v654 = vadd.f32 %v564, %v616
        %v655 = vadd.f32 %v565, %v618
        %v656 = vadd.f32 %v566, %v619
        %v657 = vadd.f32 %v567, %v621
        %v658 = vadd.f32 %v568, %v622
        %v659 = vadd.f32 %v569, %v624
        %v660 = vadd.f32 %v570, %v625
        %v661 = vadd.f32 %v571, %v627
        %v662 = vadd.f32 %v572, %v628
        %v663 = vadd.f32 %v573, %v630
        %v664 = vadd.f32 %v574, %v631
        %v665 = vadd.f32 %v575, %v633
        %v666 = vperm.slane %v508, 3
        %v667 = vmul.f32 %v481, %v666
        %v668 = vmul.f32 %v482, %v666
        %v669 = vmul.f32 %v484, %v666
        %v670 = vmul.f32 %v485, %v666
        %v671 = vmul.f32 %v487, %v666
        %v672 = vmul.f32 %v488, %v666
        %v673 = vmul.f32 %v490, %v666
        %v674 = vmul.f32 %v491, %v666
        %v675 = vmul.f32 %v493, %v666
        %v676 = vmul.f32 %v494, %v666
        %v677 = vmul.f32 %v496, %v666
        %v678 = vmul.f32 %v497, %v666
        %v679 = vmul.f32 %v499, %v666
        %v680 = vmul.f32 %v500, %v666
        %v681 = vmul.f32 %v502, %v666
        %v682 = vmul.f32 %v503, %v666
        %v683 = vadd.f32 %v650, %v667
        %v684 = vadd.f32 %v651, %v668
        %v685 = vadd.f32 %v652, %v669
        %v686 = vadd.f32 %v653, %v670
        %v687 = vadd.f32 %v654, %v671
        %v688 = vadd.f32 %v655, %v672
        %v689 = vadd.f32 %v656, %v673
        %v690 = vadd.f32 %v657, %v674
        %v691 = vadd.f32 %v658, %v675
        %v692 = vadd.f32 %v659, %v676
        %v693 = vadd.f32 %v660, %v677
        %v694 = vadd.f32 %v661, %v678
        %v695 = vadd.f32 %v662, %v679
        %v696 = vadd.f32 %v663, %v680
        %v697 = vadd.f32 %v664, %v681
        %v698 = vadd.f32 %v665, %v682
        %v699 = vperm.slane %v508, 4
        %v700 = vmul.f32 %v482, %v699
        %v701 = vmul.f32 %v485, %v699
        %v702 = vmul.f32 %v488, %v699
        %v703 = vmul.f32 %v491, %v699
        %v704 = vmul.f32 %v494, %v699
        %v705 = vmul.f32 %v497, %v699
        %v706 = vmul.f32 %v500, %v699
        %v707 = vmul.f32 %v503, %v699
        %v716 = vrot.slane %v700, 1
        %v717 = vrot.slane %v701, 1
        %v718 = vrot.slane %v702, 1
        %v719 = vrot.slane %v703, 1
        %v720 = vrot.slane %v704, 1
        %v721 = vrot.slane %v705, 1
        %v722 = vrot.slane %v706, 1
        %v723 = vrot.slane %v707, 1
        %v732 = vadd.f32 %v683, %v716
        %v733 = vadd.f32 %v684, %v716
        %v734 = vadd.f32 %v685, %v717
        %v735 = vadd.f32 %v686, %v717
        %v736 = vadd.f32 %v687, %v718
        %v737 = vadd.f32 %v688, %v718
        %v738 = vadd.f32 %v689, %v719
        %v739 = vadd.f32 %v690, %v719
        %v740 = vadd.f32 %v691, %v720
        %v741 = vadd.f32 %v692, %v720
        %v742 = vadd.f32 %v693, %v721
        %v743 = vadd.f32 %v694, %v721
        %v744 = vadd.f32 %v695, %v722
        %v745 = vadd.f32 %v696, %v722
        %v746 = vadd.f32 %v697, %v723
        %v747 = vadd.f32 %v698, %v723
        %v748 = vperm.slane %v508, 5
        %v749 = vmul.f32 %v482, %v748
        %v750 = vmul.f32 %v483, %v748
        %v751 = vmul.f32 %v485, %v748
        %v752 = vmul.f32 %v486, %v748
        %v753 = vmul.f32 %v488, %v748
        %v754 = vmul.f32 %v489, %v748
        %v755 = vmul.f32 %v491, %v748
        %v756 = vmul.f32 %v492, %v748
        %v757 = vmul.f32 %v494, %v748
        %v758 = vmul.f32 %v495, %v748
        %v759 = vmul.f32 %v497, %v748
        %v760 = vmul.f32 %v498, %v748
        %v761 = vmul.f32 %v500, %v748
        %v762 = vmul.f32 %v501, %v748
        %v763 = vmul.f32 %v503, %v748
        %v764 = vmul.f32 %v504, %v748
        %v781 = vrot.slane %v749, 2
        %v782 = vrot.slane %v750, 2
        %v783 = vsel %vm609, %v781, %v782
        %v784 = vrot.slane %v751, 2
        %v785 = vrot.slane %v752, 2
        %v786 = vsel %vm609, %v784, %v785
        %v787 = vrot.slane %v753, 2
        %v788 = vrot.slane %v754, 2
        %v789 = vsel %vm609, %v787, %v788
        %v790 = vrot.slane %v755, 2
        %v791 = vrot.slane %v756, 2
        %v792 = vsel %vm609, %v790, %v791
        %v793 = vrot.slane %v757, 2
        %v794 = vrot.slane %v758, 2
        %v795 = vsel %vm609, %v793, %v794
        %v796 = vrot.slane %v759, 2
        %v797 = vrot.slane %v760, 2
        %v798 = vsel %vm609, %v796, %v797
        %v799 = vrot.slane %v761, 2
        %v800 = vrot.slane %v762, 2
        %v801 = vsel %vm609, %v799, %v800
        %v802 = vrot.slane %v763, 2
        %v803 = vrot.slane %v764, 2
        %v804 = vsel %vm609, %v802, %v803
        %v821 = vadd.f32 %v732, %v781
        %v822 = vadd.f32 %v733, %v783
        %v823 = vadd.f32 %v734, %v784
        %v824 = vadd.f32 %v735, %v786
        %v825 = vadd.f32 %v736, %v787
        %v826 = vadd.f32 %v737, %v789
        %v827 = vadd.f32 %v738, %v790
        %v828 = vadd.f32 %v739, %v792
        %v829 = vadd.f32 %v740, %v793
        %v830 = vadd.f32 %v741, %v795
        %v831 = vadd.f32 %v742, %v796
        %v832 = vadd.f32 %v743, %v798
        %v833 = vadd.f32 %v744, %v799
        %v834 = vadd.f32 %v745, %v801
        %v835 = vadd.f32 %v746, %v802
        %v836 = vadd.f32 %v747, %v804
        %v837 = vperm.slane %v508, 6
        %v838 = vmul.f32 %v484, %v837
        %v839 = vmul.f32 %v485, %v837
        %v840 = vmul.f32 %v487, %v837
        %v841 = vmul.f32 %v488, %v837
        %v842 = vmul.f32 %v490, %v837
        %v843 = vmul.f32 %v491, %v837
        %v844 = vmul.f32 %v493, %v837
        %v845 = vmul.f32 %v494, %v837
        %v846 = vmul.f32 %v496, %v837
        %v847 = vmul.f32 %v497, %v837
        %v848 = vmul.f32 %v499, %v837
        %v849 = vmul.f32 %v500, %v837
        %v850 = vmul.f32 %v502, %v837
        %v851 = vmul.f32 %v503, %v837
        %v852 = vmul.f32 %v505, %v837
        %v853 = vmul.f32 %v506, %v837
        %v854 = vadd.f32 %v821, %v838
        %v855 = vadd.f32 %v822, %v839
        %v856 = vadd.f32 %v823, %v840
        %v857 = vadd.f32 %v824, %v841
        %v858 = vadd.f32 %v825, %v842
        %v859 = vadd.f32 %v826, %v843
        %v860 = vadd.f32 %v827, %v844
        %v861 = vadd.f32 %v828, %v845
        %v862 = vadd.f32 %v829, %v846
        %v863 = vadd.f32 %v830, %v847
        %v864 = vadd.f32 %v831, %v848
        %v865 = vadd.f32 %v832, %v849
        %v866 = vadd.f32 %v833, %v850
        %v867 = vadd.f32 %v834, %v851
        %v868 = vadd.f32 %v835, %v852
        %v869 = vadd.f32 %v836, %v853
        %v870 = vperm.slane %v508, 7
        %v871 = vmul.f32 %v485, %v870
        %v872 = vmul.f32 %v488, %v870
        %v873 = vmul.f32 %v491, %v870
        %v874 = vmul.f32 %v494, %v870
        %v875 = vmul.f32 %v497, %v870
        %v876 = vmul.f32 %v500, %v870
        %v877 = vmul.f32 %v503, %v870
        %v878 = vmul.f32 %v506, %v870
        %v887 = vrot.slane %v871, 1
        %v888 = vrot.slane %v872, 1
        %v889 = vrot.slane %v873, 1
        %v890 = vrot.slane %v874, 1
        %v891 = vrot.slane %v875, 1
        %v892 = vrot.slane %v876, 1
        %v893 = vrot.slane %v877, 1
        %v894 = vrot.slane %v878, 1
        %v903 = vadd.f32 %v854, %v887
        %v904 = vadd.f32 %v855, %v887
        %v905 = vadd.f32 %v856, %v888
        %v906 = vadd.f32 %v857, %v888
        %v907 = vadd.f32 %v858, %v889
        %v908 = vadd.f32 %v859, %v889
        %v909 = vadd.f32 %v860, %v890
        %v910 = vadd.f32 %v861, %v890
        %v911 = vadd.f32 %v862, %v891
        %v912 = vadd.f32 %v863, %v891
        %v913 = vadd.f32 %v864, %v892
        %v914 = vadd.f32 %v865, %v892
        %v915 = vadd.f32 %v866, %v893
        %v916 = vadd.f32 %v867, %v893
        %v917 = vadd.f32 %v868, %v894
        %v918 = vadd.f32 %v869, %v894
        %v919 = vperm.slane %v509, 0
        %v920 = vmul.f32 %v485, %v919
        %v921 = vmul.f32 %v486, %v919
        %v922 = vmul.f32 %v488, %v919
        %v923 = vmul.f32 %v489, %v919
        %v924 = vmul.f32 %v491, %v919
        %v925 = vmul.f32 %v492, %v919
        %v926 = vmul.f32 %v494, %v919
        %v927 = vmul.f32 %v495, %v919
        %v928 = vmul.f32 %v497, %v919
        %v929 = vmul.f32 %v498, %v919
        %v930 = vmul.f32 %v500, %v919
        %v931 = vmul.f32 %v501, %v919
        %v932 = vmul.f32 %v503, %v919
        %v933 = vmul.f32 %v504, %v919
        %v934 = vmul.f32 %v506, %v919
        %v935 = vmul.f32 %v507, %v919
        %v952 = vrot.slane %v920, 2
        %v953 = vrot.slane %v921, 2
        %v954 = vsel %vm609, %v952, %v953
        %v955 = vrot.slane %v922, 2
        %v956 = vrot.slane %v923, 2
        %v957 = vsel %vm609, %v955, %v956
        %v958 = vrot.slane %v924, 2
        %v959 = vrot.slane %v925, 2
        %v960 = vsel %vm609, %v958, %v959
        %v961 = vrot.slane %v926, 2
        %v962 = vrot.slane %v927, 2
        %v963 = vsel %vm609, %v961, %v962
        %v964 = vrot.slane %v928, 2
        %v965 = vrot.slane %v929, 2
        %v966 = vsel %vm609, %v964, %v965
        %v967 = vrot.slane %v930, 2
        %v968 = vrot.slane %v931, 2
        %v969 = vsel %vm609, %v967, %v968
        %v970 = vrot.slane %v932, 2
        %v971 = vrot.slane %v933, 2
        %v972 = vsel %vm609, %v970, %v971
        %v973 = vrot.slane %v934, 2
        %v974 = vrot.slane %v935, 2
        %v975 = vsel %vm609, %v973, %v974
        %v992 = vadd.f32 %v903, %v952
        %v993 = vadd.f32 %v904, %v954
        %v994 = vadd.f32 %v905, %v955
        %v995 = vadd.f32 %v906, %v957
        %v996 = vadd.f32 %v907, %v958
        %v997 = vadd.f32 %v908, %v960
        %v998 = vadd.f32 %v909, %v961
        %v999 = vadd.f32 %v910, %v963
        %v1000 = vadd.f32 %v911, %v964
        %v1001 = vadd.f32 %v912, %v966
        %v1002 = vadd.f32 %v913, %v967
        %v1003 = vadd.f32 %v914, %v969
        %v1004 = vadd.f32 %v915, %v970
        %v1005 = vadd.f32 %v916, %v972
        %v1006 = vadd.f32 %v917, %v973
        %v1007 = vadd.f32 %v918, %v975
        %vm1024 = vcmask 1040384
        %v1025 = vrot.slane %v992, 7
        %v1026 = vrot.slane %v993, 7
        %v1027 = vsel %vm1024, %v1025, %v1026
        %v1028 = vrot.slane %v994, 7
        %v1029 = vrot.slane %v995, 7
        %v1030 = vsel %vm1024, %v1028, %v1029
        %v1031 = vrot.slane %v996, 7
        %v1032 = vrot.slane %v997, 7
        %v1033 = vsel %vm1024, %v1031, %v1032
        %v1034 = vrot.slane %v998, 7
        %v1035 = vrot.slane %v999, 7
        %v1036 = vsel %vm1024, %v1034, %v1035
        %v1037 = vrot.slane %v1000, 7
        %v1038 = vrot.slane %v1001, 7
        %v1039 = vsel %vm1024, %v1037, %v1038
        %v1040 = vrot.slane %v1002, 7
        %v1041 = vrot.slane %v1003, 7
        %v1042 = vsel %vm1024, %v1040, %v1041
        %v1043 = vrot.slane %v1004, 7
        %v1044 = vrot.slane %v1005, 7
        %v1045 = vsel %vm1024, %v1043, %v1044
        %v1046 = vrot.slane %v1006, 7
        %v1047 = vrot.slane %v1007, 7
        %v1048 = vsel %vm1024, %v1046, %v1047
        %v1057 = vsel %vm372, %v1027, -inf
        %1058 = vmax.xlane.f32.xlu0 %v1057
        %v1059 = vpop.xlane.xlu0 %1058
        %v1060 = vsel %vm372, %v1030, -inf
        %1061 = vmax.xlane.f32.xlu0 %v1060
        %v1062 = vpop.xlane.xlu0 %1061
        %v1063 = vsel %vm372, %v1033, -inf
        %1064 = vmax.xlane.f32.xlu0 %v1063
        %v1065 = vpop.xlane.xlu0 %1064
        %v1066 = vsel %vm372, %v1036, -inf
        %1067 = vmax.xlane.f32.xlu0 %v1066
        %v1068 = vpop.xlane.xlu0 %1067
        %v1069 = vsel %vm372, %v1039, -inf
        %1070 = vmax.xlane.f32.xlu0 %v1069
        %v1071 = vpop.xlane.xlu0 %1070
        %v1072 = vsel %vm372, %v1042, -inf
        %1073 = vmax.xlane.f32.xlu0 %v1072
        %v1074 = vpop.xlane.xlu0 %1073
        %v1075 = vsel %vm372, %v1045, -inf
        %1076 = vmax.xlane.f32.xlu0 %v1075
        %v1077 = vpop.xlane.xlu0 %1076
        %v1078 = vsel %vm372, %v1048, -inf
        %1079 = vmax.xlane.f32.xlu0 %v1078
        %v1080 = vpop.xlane.xlu0 %1079
        %v1081 = vsub.f32 %v1027, %v1059
        %v1082 = vsub.f32 %v1030, %v1062
        %v1083 = vsub.f32 %v1033, %v1065
        %v1084 = vsub.f32 %v1036, %v1068
        %v1085 = vsub.f32 %v1039, %v1071
        %v1086 = vsub.f32 %v1042, %v1074
        %v1087 = vsub.f32 %v1045, %v1077
        %v1088 = vsub.f32 %v1048, %v1080
        %v1089 = vmul.f32 %v1081, 1.442695
        %v1090 = vpow.pop %v1089
        %v1091 = vmul.f32 %v1082, 1.442695
        %v1092 = vpow.pop %v1091
        %v1093 = vmul.f32 %v1083, 1.442695
        %v1094 = vpow.pop %v1093
        %v1095 = vmul.f32 %v1084, 1.442695
        %v1096 = vpow.pop %v1095
        %v1097 = vmul.f32 %v1085, 1.442695
        %v1098 = vpow.pop %v1097
        %v1099 = vmul.f32 %v1086, 1.442695
        %v1100 = vpow.pop %v1099
        %v1101 = vmul.f32 %v1087, 1.442695
        %v1102 = vpow.pop %v1101
        %v1103 = vmul.f32 %v1088, 1.442695
        %v1104 = vpow.pop %v1103
        %v1105 = vsel %vm372, %v1090, 0.0
        %1106 = vadd.xlane.f32.xlu0 %v1105
        %v1107 = vpop.xlane.xlu0 %1106
        %v1108 = vsel %vm372, %v1092, 0.0
        %1109 = vadd.xlane.f32.xlu0 %v1108
        %v1110 = vpop.xlane.xlu0 %1109
        %v1111 = vsel %vm372, %v1094, 0.0
        %1112 = vadd.xlane.f32.xlu0 %v1111
        %v1113 = vpop.xlane.xlu0 %1112
        %v1114 = vsel %vm372, %v1096, 0.0
        %1115 = vadd.xlane.f32.xlu0 %v1114
        %v1116 = vpop.xlane.xlu0 %1115
        %v1117 = vsel %vm372, %v1098, 0.0
        %1118 = vadd.xlane.f32.xlu0 %v1117
        %v1119 = vpop.xlane.xlu0 %1118
        %v1120 = vsel %vm372, %v1100, 0.0
        %1121 = vadd.xlane.f32.xlu0 %v1120
        %v1122 = vpop.xlane.xlu0 %1121
        %v1123 = vsel %vm372, %v1102, 0.0
        %1124 = vadd.xlane.f32.xlu0 %v1123
        %v1125 = vpop.xlane.xlu0 %1124
        %v1126 = vsel %vm372, %v1104, 0.0
        %1127 = vadd.xlane.f32.xlu0 %v1126
        %v1128 = vpop.xlane.xlu0 %1127
        %v1129 = vrcp.pop %v1107
        %v1130 = vmul.f32 %v1107, %v1129
        %v1131 = vsub.f32 1.0, %v1130
        %v1132 = vmul.f32 %v1129, %v1131
        %v1133 = vadd.f32 %v1129, %v1132
        %vm1134 = vweird.f32 %v1107
        %vm1135 = vweird.f32 %v1129
        %vm1136 = vmor %vm1134, %vm1135
        %v1137 = vsel %vm1136, %v1129, %v1133
        %v1138 = vand.u32 2147483647, %v1107
        %vm1139 = vcmp.eq.f32.partialorder %v1138, 8.507059e+37
        %v1140 = vand.u32 %v1107, 2147483648
        %v1141 = vor.u32 1.1754944e-38, %v1140
        %v1142 = vsel %vm1139, %v1141, %v1137
        %v1143 = vmul.f32 %v1090, %v1142
        %v1144 = vrcp.pop %v1110
        %v1145 = vmul.f32 %v1110, %v1144
        %v1146 = vsub.f32 1.0, %v1145
        %v1147 = vmul.f32 %v1144, %v1146
        %v1148 = vadd.f32 %v1144, %v1147
        %vm1149 = vweird.f32 %v1110
        %vm1150 = vweird.f32 %v1144
        %vm1151 = vmor %vm1149, %vm1150
        %v1152 = vsel %vm1151, %v1144, %v1148
        %v1153 = vand.u32 2147483647, %v1110
        %vm1154 = vcmp.eq.f32.partialorder %v1153, 8.507059e+37
        %v1155 = vand.u32 %v1110, 2147483648
        %v1156 = vor.u32 1.1754944e-38, %v1155
        %v1157 = vsel %vm1154, %v1156, %v1152
        %v1158 = vmul.f32 %v1092, %v1157
        %v1159 = vrcp.pop %v1113
        %v1160 = vmul.f32 %v1113, %v1159
        %v1161 = vsub.f32 1.0, %v1160
        %v1162 = vmul.f32 %v1159, %v1161
        %v1163 = vadd.f32 %v1159, %v1162
        %vm1164 = vweird.f32 %v1113
        %vm1165 = vweird.f32 %v1159
        %vm1166 = vmor %vm1164, %vm1165
        %v1167 = vsel %vm1166, %v1159, %v1163
        %v1168 = vand.u32 2147483647, %v1113
        %vm1169 = vcmp.eq.f32.partialorder %v1168, 8.507059e+37
        %v1170 = vand.u32 %v1113, 2147483648
        %v1171 = vor.u32 1.1754944e-38, %v1170
        %v1172 = vsel %vm1169, %v1171, %v1167
        %v1173 = vmul.f32 %v1094, %v1172
        %v1174 = vrcp.pop %v1116
        %v1175 = vmul.f32 %v1116, %v1174
        %v1176 = vsub.f32 1.0, %v1175
        %v1177 = vmul.f32 %v1174, %v1176
        %v1178 = vadd.f32 %v1174, %v1177
        %vm1179 = vweird.f32 %v1116
        %vm1180 = vweird.f32 %v1174
        %vm1181 = vmor %vm1179, %vm1180
        %v1182 = vsel %vm1181, %v1174, %v1178
        %v1183 = vand.u32 2147483647, %v1116
        %vm1184 = vcmp.eq.f32.partialorder %v1183, 8.507059e+37
        %v1185 = vand.u32 %v1116, 2147483648
        %v1186 = vor.u32 1.1754944e-38, %v1185
        %v1187 = vsel %vm1184, %v1186, %v1182
        %v1188 = vmul.f32 %v1096, %v1187
        %v1189 = vrcp.pop %v1119
        %v1190 = vmul.f32 %v1119, %v1189
        %v1191 = vsub.f32 1.0, %v1190
        %v1192 = vmul.f32 %v1189, %v1191
        %v1193 = vadd.f32 %v1189, %v1192
        %vm1194 = vweird.f32 %v1119
        %vm1195 = vweird.f32 %v1189
        %vm1196 = vmor %vm1194, %vm1195
        %v1197 = vsel %vm1196, %v1189, %v1193
        %v1198 = vand.u32 2147483647, %v1119
        %vm1199 = vcmp.eq.f32.partialorder %v1198, 8.507059e+37
        %v1200 = vand.u32 %v1119, 2147483648
        %v1201 = vor.u32 1.1754944e-38, %v1200
        %v1202 = vsel %vm1199, %v1201, %v1197
        %v1203 = vmul.f32 %v1098, %v1202
        %v1204 = vrcp.pop %v1122
        %v1205 = vmul.f32 %v1122, %v1204
        %v1206 = vsub.f32 1.0, %v1205
        %v1207 = vmul.f32 %v1204, %v1206
        %v1208 = vadd.f32 %v1204, %v1207
        %vm1209 = vweird.f32 %v1122
        %vm1210 = vweird.f32 %v1204
        %vm1211 = vmor %vm1209, %vm1210
        %v1212 = vsel %vm1211, %v1204, %v1208
        %v1213 = vand.u32 2147483647, %v1122
        %vm1214 = vcmp.eq.f32.partialorder %v1213, 8.507059e+37
        %v1215 = vand.u32 %v1122, 2147483648
        %v1216 = vor.u32 1.1754944e-38, %v1215
        %v1217 = vsel %vm1214, %v1216, %v1212
        %v1218 = vmul.f32 %v1100, %v1217
        %v1219 = vrcp.pop %v1125
        %v1220 = vmul.f32 %v1125, %v1219
        %v1221 = vsub.f32 1.0, %v1220
        %v1222 = vmul.f32 %v1219, %v1221
        %v1223 = vadd.f32 %v1219, %v1222
        %vm1224 = vweird.f32 %v1125
        %vm1225 = vweird.f32 %v1219
        %vm1226 = vmor %vm1224, %vm1225
        %v1227 = vsel %vm1226, %v1219, %v1223
        %v1228 = vand.u32 2147483647, %v1125
        %vm1229 = vcmp.eq.f32.partialorder %v1228, 8.507059e+37
        %v1230 = vand.u32 %v1125, 2147483648
        %v1231 = vor.u32 1.1754944e-38, %v1230
        %v1232 = vsel %vm1229, %v1231, %v1227
        %v1233 = vmul.f32 %v1102, %v1232
        %v1234 = vrcp.pop %v1128
        %v1235 = vmul.f32 %v1128, %v1234
        %v1236 = vsub.f32 1.0, %v1235
        %v1237 = vmul.f32 %v1234, %v1236
        %v1238 = vadd.f32 %v1234, %v1237
        %vm1239 = vweird.f32 %v1128
        %vm1240 = vweird.f32 %v1234
        %vm1241 = vmor %vm1239, %vm1240
        %v1242 = vsel %vm1241, %v1234, %v1238
        %v1243 = vand.u32 2147483647, %v1128
        %vm1244 = vcmp.eq.f32.partialorder %v1243, 8.507059e+37
        %v1245 = vand.u32 %v1128, 2147483648
        %v1246 = vor.u32 1.1754944e-38, %v1245
        %v1247 = vsel %vm1244, %v1246, %v1242
        %v1248 = vmul.f32 %v1104, %v1247
        %v1249 = vmul.f32 %v1143, 0.35355338
        %v1250 = vmul.f32 %v1158, 0.35355338
        %v1251 = vmul.f32 %v1173, 0.35355338
        %v1252 = vmul.f32 %v1188, 0.35355338
        %v1253 = vmul.f32 %v1203, 0.35355338
        %v1254 = vmul.f32 %v1218, 0.35355338
        %v1255 = vmul.f32 %v1233, 0.35355338
        %v1256 = vmul.f32 %v1248, 0.35355338
        %vm1257 = vcmask 326912
        %v1258 = vsel %vm1257, %v1027, -inf
        %v1259 = vsel %vm1257, %v1030, -inf
        %v1260 = vsel %vm1257, %v1033, -inf
        %v1261 = vsel %vm1257, %v1036, -inf
        %v1262 = vsel %vm1257, %v1039, -inf
        %v1263 = vmax.f32 %v1258, %v1262
        %v1264 = vsel %vm1257, %v1042, -inf
        %v1265 = vmax.f32 %v1259, %v1264
        %v1266 = vsel %vm1257, %v1045, -inf
        %v1267 = vmax.f32 %v1260, %v1266
        %v1268 = vsel %vm1257, %v1048, -inf
        %v1269 = vmax.f32 %v1261, %v1268
        %v1270 = vmax.f32 %v1263, %v1265
        %v1271 = vmax.f32 %v1267, %v1269
        %v1272 = vmax.f32 %v1270, %v1271
        %v1273 = vrot.slane %v1272, 4
        %v1274 = vmax.f32 %v1272, %v1273
        %v1275 = vrot.slane %v1274, 2
        %v1276 = vmax.f32 %v1274, %v1275
        %v1277 = vrot.slane %v1276, 1
        %v1278 = vmax.f32 %v1276, %v1277
        %v1279 = vsub.f32 %v1027, %v1278
        %v1280 = vsub.f32 %v1030, %v1278
        %v1281 = vsub.f32 %v1033, %v1278
        %v1282 = vsub.f32 %v1036, %v1278
        %v1283 = vsub.f32 %v1039, %v1278
        %v1284 = vsub.f32 %v1042, %v1278
        %v1285 = vsub.f32 %v1045, %v1278
        %v1286 = vsub.f32 %v1048, %v1278
        %v1287 = vmul.f32 %v1279, 1.442695
        %v1288 = vpow.pop %v1287
        %v1289 = vmul.f32 %v1280, 1.442695
        %v1290 = vpow.pop %v1289
        %v1291 = vmul.f32 %v1281, 1.442695
        %v1292 = vpow.pop %v1291
        %v1293 = vmul.f32 %v1282, 1.442695
        %v1294 = vpow.pop %v1293
        %v1295 = vmul.f32 %v1283, 1.442695
        %v1296 = vpow.pop %v1295
        %v1297 = vmul.f32 %v1284, 1.442695
        %v1298 = vpow.pop %v1297
        %v1299 = vmul.f32 %v1285, 1.442695
        %v1300 = vpow.pop %v1299
        %v1301 = vmul.f32 %v1286, 1.442695
        %v1302 = vpow.pop %v1301
        %v1303 = vsel %vm1257, %v1288, 0.0
        %v1304 = vsel %vm1257, %v1290, 0.0
        %v1305 = vadd.f32 %v1303, %v1304
        %v1306 = vsel %vm1257, %v1292, 0.0
        %v1307 = vadd.f32 %v1305, %v1306
        %v1308 = vsel %vm1257, %v1294, 0.0
        %v1309 = vadd.f32 %v1307, %v1308
        %v1310 = vsel %vm1257, %v1296, 0.0
        %v1311 = vadd.f32 %v1309, %v1310
        %v1312 = vsel %vm1257, %v1298, 0.0
        %v1313 = vadd.f32 %v1311, %v1312
        %v1314 = vsel %vm1257, %v1300, 0.0
        %v1315 = vadd.f32 %v1313, %v1314
        %v1316 = vsel %vm1257, %v1302, 0.0
        %v1317 = vadd.f32 %v1315, %v1316
        %v1318 = vrot.slane %v1317, 4
        %v1319 = vadd.f32 %v1317, %v1318
        %v1320 = vrot.slane %v1319, 2
        %v1321 = vadd.f32 %v1319, %v1320
        %v1322 = vrot.slane %v1321, 1
        %v1323 = vadd.f32 %v1321, %v1322
        %v1324 = vrcp.pop %v1323
        %v1325 = vmul.f32 %v1323, %v1324
        %v1326 = vsub.f32 1.0, %v1325
        %v1327 = vmul.f32 %v1324, %v1326
        %v1328 = vadd.f32 %v1324, %v1327
        %vm1329 = vweird.f32 %v1323
        %vm1330 = vweird.f32 %v1324
        %vm1331 = vmor %vm1329, %vm1330
        %v1332 = vsel %vm1331, %v1324, %v1328
        %v1333 = vand.u32 2147483647, %v1323
        %vm1334 = vcmp.eq.f32.partialorder %v1333, 8.507059e+37
        %v1335 = vand.u32 %v1323, 2147483648
        %v1336 = vor.u32 1.1754944e-38, %v1335
        %v1337 = vsel %vm1334, %v1336, %v1332
        %v1338 = vmul.f32 %v1288, %v1337
        %v1339 = vmul.f32 %v1290, %v1337
        %v1340 = vmul.f32 %v1292, %v1337
        %v1341 = vmul.f32 %v1294, %v1337
        %v1342 = vmul.f32 %v1296, %v1337
        %v1343 = vmul.f32 %v1298, %v1337
        %v1344 = vmul.f32 %v1300, %v1337
        %v1345 = vmul.f32 %v1302, %v1337
        %1354 = vrot.lane.b32.xlu0 %v1338, 96
        %v1355 = vpop.permute.xlu0 %1354
        %1356 = vrot.lane.b32.xlu0 %v1339, 96
        %v1357 = vpop.permute.xlu0 %1356
        %1358 = vrot.lane.b32.xlu0 %v1340, 96
        %v1359 = vpop.permute.xlu0 %1358
        %1360 = vrot.lane.b32.xlu0 %v1341, 96
        %v1361 = vpop.permute.xlu0 %1360
        %1362 = vrot.lane.b32.xlu0 %v1342, 96
        %v1363 = vpop.permute.xlu0 %1362
        %1364 = vrot.lane.b32.xlu0 %v1343, 96
        %v1365 = vpop.permute.xlu0 %1364
        %1366 = vrot.lane.b32.xlu0 %v1344, 96
        %v1367 = vpop.permute.xlu0 %1366
        %1368 = vrot.lane.b32.xlu0 %v1345, 96
        %v1369 = vpop.permute.xlu0 %1368
        %1378 = vxpose.xlu0.b32.start [1/16] %v1355, 128
        %1379 = vxpose.xlu0.b32.cont [2/16] %v1357, 128
        %1380 = vxpose.xlu0.b32.cont [3/16] %v1359, 128
        %1381 = vxpose.xlu0.b32.cont [4/16] %v1361, 128
        %1382 = vxpose.xlu0.b32.cont [5/16] %v1363, 128
        %1383 = vxpose.xlu0.b32.cont [6/16] %v1365, 128
        %1384 = vxpose.xlu0.b32.cont [7/16] %v1367, 128
        %1385 = vxpose.xlu0.b32.cont [8/16] %v1369, 128
        %1386 = vxpose.xlu0.b32.cont [9/16] 0.0, 128
        %1387 = vxpose.xlu0.b32.cont [10/16] 0.0, 128
        %1388 = vxpose.xlu0.b32.cont [11/16] 0.0, 128
        %1389 = vxpose.xlu0.b32.cont [12/16] 0.0, 128
        %1390 = vxpose.xlu0.b32.cont [13/16] 0.0, 128
        %1391 = vxpose.xlu0.b32.cont [14/16] 0.0, 128
        %1392 = vxpose.xlu0.b32.cont [15/16] 0.0, 128
        %1393 = vxpose.xlu0.b32.end [16/16] 0.0, 128
        %v1394 = vpop.trf.xlu0
        %v1395 = vpop.trf.xlu0
        %v1396 = vpop.trf.xlu0
        %v1397 = vpop.trf.xlu0
        %v1398 = vpop.trf.xlu0
        %v1399 = vpop.trf.xlu0
        %v1400 = vpop.trf.xlu0
        %v1401 = vpop.trf.xlu0
        %v1402 = vpop.trf.xlu0
        %v1403 = vpop.trf.xlu0
        %v1404 = vpop.trf.xlu0
        %v1405 = vpop.trf.xlu0
        %v1406 = vpop.trf.xlu0
        %v1407 = vpop.trf.xlu0
        %v1408 = vpop.trf.xlu0
        %v1409 = vpop.trf.xlu0
        %1410 = vrot.lane.b32.xlu0 %v1027, 64
        %v1411 = vpop.permute.xlu0 %1410
        %1412 = vrot.lane.b32.xlu0 %v1030, 64
        %v1413 = vpop.permute.xlu0 %1412
        %1414 = vrot.lane.b32.xlu0 %v1033, 64
        %v1415 = vpop.permute.xlu0 %1414
        %1416 = vrot.lane.b32.xlu0 %v1036, 64
        %v1417 = vpop.permute.xlu0 %1416
        %1418 = vrot.lane.b32.xlu0 %v1039, 64
        %v1419 = vpop.permute.xlu0 %1418
        %1420 = vrot.lane.b32.xlu0 %v1042, 64
        %v1421 = vpop.permute.xlu0 %1420
        %1422 = vrot.lane.b32.xlu0 %v1045, 64
        %v1423 = vpop.permute.xlu0 %1422
        %1424 = vrot.lane.b32.xlu0 %v1048, 64
        %v1425 = vpop.permute.xlu0 %1424
        %v1435 = vsel %vm295, %v1394, 0
        %1437 = vmatpush.msra.mxu0 0.0
        %1438 = vmatpush.msra.mxu0 0.0
        %1439 = vmatpush.msra.mxu0 0.0
        %1440 = vmatpush.msra.mxu0 0.0
        %1441 = vmatpush.msra.mxu0 0.0
        %1442 = vmatpush.msra.mxu0 0.0
        %1443 = vmatpush.msra.mxu0 0.0
        %1444 = vmatpush.msra.mxu0 0.0
        %1445 = vmatpush.msra.mxu0 %v1425
        %1446 = vmatpush.msra.mxu0 %v1423
        %1447 = vmatpush.msra.mxu0 %v1421
        %1448 = vmatpush.msra.mxu0 %v1419
        %1449 = vmatpush.msra.mxu0 %v1417
        %1450 = vmatpush.msra.mxu0 %v1415
        %1451 = vmatpush.msra.mxu0 %v1413
        %1452 = vmatpush.msra.mxu0 %v1411
        %1453 = vmatmul.f32.gmra.mxu0 %v1435
        %v1454 = vpop.f32.mrf.mxu0
        %v1455 = vadd.f32 0.0, %v1454
        %1456 = vdwg.mxu0
        %v1458 = vsel %vm372, %v1249, 0
        %v1461 = vsel %vm372, %v1250, 0
        %v1464 = vsel %vm372, %v1251, 0
        %v1467 = vsel %vm372, %v1252, 0
        %v1470 = vsel %vm372, %v1253, 0
        %v1473 = vsel %vm372, %v1254, 0
        %v1476 = vsel %vm372, %v1255, 0
        %v1479 = vsel %vm372, %v1256, 0
        %1481 = vmatpush.msra.mxu0 0.0
        %1482 = vmatpush.msra.mxu0 0.0
        %1483 = vmatpush.msra.mxu0 0.0
        %1484 = vmatpush.msra.mxu0 0.0
        %1485 = vmatpush.msra.mxu0 0.0
        %1486 = vmatpush.msra.mxu0 0.0
        %1487 = vmatpush.msra.mxu0 0.0
        %1488 = vmatpush.msra.mxu0 0.0
        %1489 = vmatpush.msra.mxu0 0.0
        %1490 = vmatpush.msra.mxu0 0.0
        %1491 = vmatpush.msra.mxu0 0.0
        %1492 = vmatpush.msra.mxu0 0.0
        %1493 = vmatpush.msra.mxu0 0.0
        %1494 = vmatpush.msra.mxu0 0.0
        %1495 = vmatpush.msra.mxu0 0.0
        %1496 = vmatpush.msra.mxu0 %v1455
        %1497 = vmatmul.f32.gmra.mxu0 %v1458
        %v1498 = vpop.f32.mrf.mxu0
        %v1499 = vadd.f32 0.0, %v1498
        %1500 = vmatmul.f32.gmra.mxu0 %v1461
        %v1501 = vpop.f32.mrf.mxu0
        %v1502 = vadd.f32 0.0, %v1501
        %1503 = vmatmul.f32.gmra.mxu0 %v1464
        %v1504 = vpop.f32.mrf.mxu0
        %v1505 = vadd.f32 0.0, %v1504
        %1506 = vmatmul.f32.gmra.mxu0 %v1467
        %v1507 = vpop.f32.mrf.mxu0
        %v1508 = vadd.f32 0.0, %v1507
        %1509 = vmatmul.f32.gmra.mxu0 %v1470
        %v1510 = vpop.f32.mrf.mxu0
        %v1511 = vadd.f32 0.0, %v1510
        %1512 = vmatmul.f32.gmra.mxu0 %v1473
        %v1513 = vpop.f32.mrf.mxu0
        %v1514 = vadd.f32 0.0, %v1513
        %1515 = vmatmul.f32.gmra.mxu0 %v1476
        %v1516 = vpop.f32.mrf.mxu0
        %v1517 = vadd.f32 0.0, %v1516
        %1518 = vmatmul.f32.gmra.mxu0 %v1479
        %v1519 = vpop.f32.mrf.mxu0
        %v1520 = vadd.f32 0.0, %v1519
        %1521 = vdwg.mxu0
        %vm1522 = vcmask 130112
        %v1523 = vsel %vm1522, %v1027, -inf
        %1524 = vmax.xlane.f32.xlu0 %v1523
        %v1525 = vpop.xlane.xlu0 %1524
        %v1526 = vsel %vm1522, %v1030, -inf
        %1527 = vmax.xlane.f32.xlu0 %v1526
        %v1528 = vpop.xlane.xlu0 %1527
        %v1529 = vsel %vm1522, %v1033, -inf
        %1530 = vmax.xlane.f32.xlu0 %v1529
        %v1531 = vpop.xlane.xlu0 %1530
        %v1532 = vsel %vm1522, %v1036, -inf
        %1533 = vmax.xlane.f32.xlu0 %v1532
        %v1534 = vpop.xlane.xlu0 %1533
        %v1535 = vsel %vm1522, %v1039, -inf
        %1536 = vmax.xlane.f32.xlu0 %v1535
        %v1537 = vpop.xlane.xlu0 %1536
        %v1538 = vsel %vm1522, %v1042, -inf
        %1539 = vmax.xlane.f32.xlu0 %v1538
        %v1540 = vpop.xlane.xlu0 %1539
        %v1541 = vsel %vm1522, %v1045, -inf
        %1542 = vmax.xlane.f32.xlu0 %v1541
        %v1543 = vpop.xlane.xlu0 %1542
        %v1544 = vsel %vm1522, %v1048, -inf
        %1545 = vmax.xlane.f32.xlu0 %v1544
        %v1546 = vpop.xlane.xlu0 %1545
        %v1547 = vsub.f32 %v1027, %v1525
        %v1548 = vsub.f32 %v1030, %v1528
        %v1549 = vsub.f32 %v1033, %v1531
        %v1550 = vsub.f32 %v1036, %v1534
        %v1551 = vsub.f32 %v1039, %v1537
        %v1552 = vsub.f32 %v1042, %v1540
        %v1553 = vsub.f32 %v1045, %v1543
        %v1554 = vsub.f32 %v1048, %v1546
        %v1555 = vmul.f32 %v1547, 1.442695
        %v1556 = vpow.pop %v1555
        %v1557 = vmul.f32 %v1548, 1.442695
        %v1558 = vpow.pop %v1557
        %v1559 = vmul.f32 %v1549, 1.442695
        %v1560 = vpow.pop %v1559
        %v1561 = vmul.f32 %v1550, 1.442695
        %v1562 = vpow.pop %v1561
        %v1563 = vmul.f32 %v1551, 1.442695
        %v1564 = vpow.pop %v1563
        %v1565 = vmul.f32 %v1552, 1.442695
        %v1566 = vpow.pop %v1565
        %v1567 = vmul.f32 %v1553, 1.442695
        %v1568 = vpow.pop %v1567
        %v1569 = vmul.f32 %v1554, 1.442695
        %v1570 = vpow.pop %v1569
        %1579 = vrot.lane.b32.xlu0 %v1556, 120
        %v1580 = vpop.permute.xlu0 %1579
        %1581 = vrot.lane.b32.xlu0 %v1558, 120
        %v1582 = vpop.permute.xlu0 %1581
        %1583 = vrot.lane.b32.xlu0 %v1560, 120
        %v1584 = vpop.permute.xlu0 %1583
        %1585 = vrot.lane.b32.xlu0 %v1562, 120
        %v1586 = vpop.permute.xlu0 %1585
        %1587 = vrot.lane.b32.xlu0 %v1564, 120
        %v1588 = vpop.permute.xlu0 %1587
        %1589 = vrot.lane.b32.xlu0 %v1566, 120
        %v1590 = vpop.permute.xlu0 %1589
        %1591 = vrot.lane.b32.xlu0 %v1568, 120
        %v1592 = vpop.permute.xlu0 %1591
        %1593 = vrot.lane.b32.xlu0 %v1570, 120
        %v1594 = vpop.permute.xlu0 %1593
        %v1603 = vsel %vm372, %v1580, 0.0
        %1604 = vadd.xlane.f32.xlu0 %v1603
        %v1605 = vpop.xlane.xlu0 %1604
        %v1606 = vsel %vm372, %v1582, 0.0
        %1607 = vadd.xlane.f32.xlu0 %v1606
        %v1608 = vpop.xlane.xlu0 %1607
        %v1609 = vsel %vm372, %v1584, 0.0
        %1610 = vadd.xlane.f32.xlu0 %v1609
        %v1611 = vpop.xlane.xlu0 %1610
        %v1612 = vsel %vm372, %v1586, 0.0
        %1613 = vadd.xlane.f32.xlu0 %v1612
        %v1614 = vpop.xlane.xlu0 %1613
        %v1615 = vsel %vm372, %v1588, 0.0
        %1616 = vadd.xlane.f32.xlu0 %v1615
        %v1617 = vpop.xlane.xlu0 %1616
        %v1618 = vsel %vm372, %v1590, 0.0
        %1619 = vadd.xlane.f32.xlu0 %v1618
        %v1620 = vpop.xlane.xlu0 %1619
        %v1621 = vsel %vm372, %v1592, 0.0
        %1622 = vadd.xlane.f32.xlu0 %v1621
        %v1623 = vpop.xlane.xlu0 %1622
        %v1624 = vsel %vm372, %v1594, 0.0
        %1625 = vadd.xlane.f32.xlu0 %v1624
        %v1626 = vpop.xlane.xlu0 %1625
        %v1627 = vrcp.pop %v1605
        %v1628 = vmul.f32 %v1605, %v1627
        %v1629 = vsub.f32 1.0, %v1628
        %v1630 = vmul.f32 %v1627, %v1629
        %v1631 = vadd.f32 %v1627, %v1630
        %vm1632 = vweird.f32 %v1605
        %vm1633 = vweird.f32 %v1627
        %vm1634 = vmor %vm1632, %vm1633
        %v1635 = vsel %vm1634, %v1627, %v1631
        %v1636 = vand.u32 2147483647, %v1605
        %vm1637 = vcmp.eq.f32.partialorder %v1636, 8.507059e+37
        %v1638 = vand.u32 %v1605, 2147483648
        %v1639 = vor.u32 1.1754944e-38, %v1638
        %v1640 = vsel %vm1637, %v1639, %v1635
        %v1641 = vmul.f32 %v1556, %v1640
        %v1642 = vrcp.pop %v1608
        %v1643 = vmul.f32 %v1608, %v1642
        %v1644 = vsub.f32 1.0, %v1643
        %v1645 = vmul.f32 %v1642, %v1644
        %v1646 = vadd.f32 %v1642, %v1645
        %vm1647 = vweird.f32 %v1608
        %vm1648 = vweird.f32 %v1642
        %vm1649 = vmor %vm1647, %vm1648
        %v1650 = vsel %vm1649, %v1642, %v1646
        %v1651 = vand.u32 2147483647, %v1608
        %vm1652 = vcmp.eq.f32.partialorder %v1651, 8.507059e+37
        %v1653 = vand.u32 %v1608, 2147483648
        %v1654 = vor.u32 1.1754944e-38, %v1653
        %v1655 = vsel %vm1652, %v1654, %v1650
        %v1656 = vmul.f32 %v1558, %v1655
        %v1657 = vrcp.pop %v1611
        %v1658 = vmul.f32 %v1611, %v1657
        %v1659 = vsub.f32 1.0, %v1658
        %v1660 = vmul.f32 %v1657, %v1659
        %v1661 = vadd.f32 %v1657, %v1660
        %vm1662 = vweird.f32 %v1611
        %vm1663 = vweird.f32 %v1657
        %vm1664 = vmor %vm1662, %vm1663
        %v1665 = vsel %vm1664, %v1657, %v1661
        %v1666 = vand.u32 2147483647, %v1611
        %vm1667 = vcmp.eq.f32.partialorder %v1666, 8.507059e+37
        %v1668 = vand.u32 %v1611, 2147483648
        %v1669 = vor.u32 1.1754944e-38, %v1668
        %v1670 = vsel %vm1667, %v1669, %v1665
        %v1671 = vmul.f32 %v1560, %v1670
        %v1672 = vrcp.pop %v1614
        %v1673 = vmul.f32 %v1614, %v1672
        %v1674 = vsub.f32 1.0, %v1673
        %v1675 = vmul.f32 %v1672, %v1674
        %v1676 = vadd.f32 %v1672, %v1675
        %vm1677 = vweird.f32 %v1614
        %vm1678 = vweird.f32 %v1672
        %vm1679 = vmor %vm1677, %vm1678
        %v1680 = vsel %vm1679, %v1672, %v1676
        %v1681 = vand.u32 2147483647, %v1614
        %vm1682 = vcmp.eq.f32.partialorder %v1681, 8.507059e+37
        %v1683 = vand.u32 %v1614, 2147483648
        %v1684 = vor.u32 1.1754944e-38, %v1683
        %v1685 = vsel %vm1682, %v1684, %v1680
        %v1686 = vmul.f32 %v1562, %v1685
        %v1687 = vrcp.pop %v1617
        %v1688 = vmul.f32 %v1617, %v1687
        %v1689 = vsub.f32 1.0, %v1688
        %v1690 = vmul.f32 %v1687, %v1689
        %v1691 = vadd.f32 %v1687, %v1690
        %vm1692 = vweird.f32 %v1617
        %vm1693 = vweird.f32 %v1687
        %vm1694 = vmor %vm1692, %vm1693
        %v1695 = vsel %vm1694, %v1687, %v1691
        %v1696 = vand.u32 2147483647, %v1617
        %vm1697 = vcmp.eq.f32.partialorder %v1696, 8.507059e+37
        %v1698 = vand.u32 %v1617, 2147483648
        %v1699 = vor.u32 1.1754944e-38, %v1698
        %v1700 = vsel %vm1697, %v1699, %v1695
        %v1701 = vmul.f32 %v1564, %v1700
        %v1702 = vrcp.pop %v1620
        %v1703 = vmul.f32 %v1620, %v1702
        %v1704 = vsub.f32 1.0, %v1703
        %v1705 = vmul.f32 %v1702, %v1704
        %v1706 = vadd.f32 %v1702, %v1705
        %vm1707 = vweird.f32 %v1620
        %vm1708 = vweird.f32 %v1702
        %vm1709 = vmor %vm1707, %vm1708
        %v1710 = vsel %vm1709, %v1702, %v1706
        %v1711 = vand.u32 2147483647, %v1620
        %vm1712 = vcmp.eq.f32.partialorder %v1711, 8.507059e+37
        %v1713 = vand.u32 %v1620, 2147483648
        %v1714 = vor.u32 1.1754944e-38, %v1713
        %v1715 = vsel %vm1712, %v1714, %v1710
        %v1716 = vmul.f32 %v1566, %v1715
        %v1717 = vrcp.pop %v1623
        %v1718 = vmul.f32 %v1623, %v1717
        %v1719 = vsub.f32 1.0, %v1718
        %v1720 = vmul.f32 %v1717, %v1719
        %v1721 = vadd.f32 %v1717, %v1720
        %vm1722 = vweird.f32 %v1623
        %vm1723 = vweird.f32 %v1717
        %vm1724 = vmor %vm1722, %vm1723
        %v1725 = vsel %vm1724, %v1717, %v1721
        %v1726 = vand.u32 2147483647, %v1623
        %vm1727 = vcmp.eq.f32.partialorder %v1726, 8.507059e+37
        %v1728 = vand.u32 %v1623, 2147483648
        %v1729 = vor.u32 1.1754944e-38, %v1728
        %v1730 = vsel %vm1727, %v1729, %v1725
        %v1731 = vmul.f32 %v1568, %v1730
        %v1732 = vrcp.pop %v1626
        %v1733 = vmul.f32 %v1626, %v1732
        %v1734 = vsub.f32 1.0, %v1733
        %v1735 = vmul.f32 %v1732, %v1734
        %v1736 = vadd.f32 %v1732, %v1735
        %vm1737 = vweird.f32 %v1626
        %vm1738 = vweird.f32 %v1732
        %vm1739 = vmor %vm1737, %vm1738
        %v1740 = vsel %vm1739, %v1732, %v1736
        %v1741 = vand.u32 2147483647, %v1626
        %vm1742 = vcmp.eq.f32.partialorder %v1741, 8.507059e+37
        %v1743 = vand.u32 %v1626, 2147483648
        %v1744 = vor.u32 1.1754944e-38, %v1743
        %v1745 = vsel %vm1742, %v1744, %v1740
        %v1746 = vmul.f32 %v1570, %v1745
        %v1747 = vmul.f32 %v1641, 0.35355338
        %v1748 = vmul.f32 %v1656, 0.35355338
        %v1749 = vmul.f32 %v1671, 0.35355338
        %v1750 = vmul.f32 %v1686, 0.35355338
        %v1751 = vmul.f32 %v1701, 0.35355338
        %v1752 = vmul.f32 %v1716, 0.35355338
        %v1753 = vmul.f32 %v1731, 0.35355338
        %v1754 = vmul.f32 %v1746, 0.35355338
        %vm1755 = vcmask 392512
        %v1756 = vsel %vm1755, %v1027, -inf
        %v1757 = vsel %vm1755, %v1030, -inf
        %v1758 = vsel %vm1755, %v1033, -inf
        %v1759 = vsel %vm1755, %v1036, -inf
        %v1760 = vsel %vm1755, %v1039, -inf
        %v1761 = vmax.f32 %v1756, %v1760
        %v1762 = vsel %vm1755, %v1042, -inf
        %v1763 = vmax.f32 %v1757, %v1762
        %v1764 = vsel %vm1755, %v1045, -inf
        %v1765 = vmax.f32 %v1758, %v1764
        %v1766 = vsel %vm1755, %v1048, -inf
        %v1767 = vmax.f32 %v1759, %v1766
        %v1768 = vmax.f32 %v1761, %v1763
        %v1769 = vmax.f32 %v1765, %v1767
        %v1770 = vmax.f32 %v1768, %v1769
        %v1771 = vrot.slane %v1770, 4
        %v1772 = vmax.f32 %v1770, %v1771
        %v1773 = vrot.slane %v1772, 2
        %v1774 = vmax.f32 %v1772, %v1773
        %v1775 = vrot.slane %v1774, 1
        %v1776 = vmax.f32 %v1774, %v1775
        %v1777 = vsub.f32 %v1027, %v1776
        %v1778 = vsub.f32 %v1030, %v1776
        %v1779 = vsub.f32 %v1033, %v1776
        %v1780 = vsub.f32 %v1036, %v1776
        %v1781 = vsub.f32 %v1039, %v1776
        %v1782 = vsub.f32 %v1042, %v1776
        %v1783 = vsub.f32 %v1045, %v1776
        %v1784 = vsub.f32 %v1048, %v1776
        %v1785 = vmul.f32 %v1777, 1.442695
        %v1786 = vpow.pop %v1785
        %v1787 = vmul.f32 %v1778, 1.442695
        %v1788 = vpow.pop %v1787
        %v1789 = vmul.f32 %v1779, 1.442695
        %v1790 = vpow.pop %v1789
        %v1791 = vmul.f32 %v1780, 1.442695
        %v1792 = vpow.pop %v1791
        %v1793 = vmul.f32 %v1781, 1.442695
        %v1794 = vpow.pop %v1793
        %v1795 = vmul.f32 %v1782, 1.442695
        %v1796 = vpow.pop %v1795
        %v1797 = vmul.f32 %v1783, 1.442695
        %v1798 = vpow.pop %v1797
        %v1799 = vmul.f32 %v1784, 1.442695
        %v1800 = vpow.pop %v1799
        %v1801 = vsel %vm1755, %v1786, 0.0
        %v1802 = vsel %vm1755, %v1788, 0.0
        %v1803 = vadd.f32 %v1801, %v1802
        %v1804 = vsel %vm1755, %v1790, 0.0
        %v1805 = vadd.f32 %v1803, %v1804
        %v1806 = vsel %vm1755, %v1792, 0.0
        %v1807 = vadd.f32 %v1805, %v1806
        %v1808 = vsel %vm1755, %v1794, 0.0
        %v1809 = vadd.f32 %v1807, %v1808
        %v1810 = vsel %vm1755, %v1796, 0.0
        %v1811 = vadd.f32 %v1809, %v1810
        %v1812 = vsel %vm1755, %v1798, 0.0
        %v1813 = vadd.f32 %v1811, %v1812
        %v1814 = vsel %vm1755, %v1800, 0.0
        %v1815 = vadd.f32 %v1813, %v1814
        %v1816 = vrot.slane %v1815, 4
        %v1817 = vadd.f32 %v1815, %v1816
        %v1818 = vrot.slane %v1817, 2
        %v1819 = vadd.f32 %v1817, %v1818
        %v1820 = vrot.slane %v1819, 1
        %v1821 = vadd.f32 %v1819, %v1820
        %v1822 = vrcp.pop %v1821
        %v1823 = vmul.f32 %v1821, %v1822
        %v1824 = vsub.f32 1.0, %v1823
        %v1825 = vmul.f32 %v1822, %v1824
        %v1826 = vadd.f32 %v1822, %v1825
        %vm1827 = vweird.f32 %v1821
        %vm1828 = vweird.f32 %v1822
        %vm1829 = vmor %vm1827, %vm1828
        %v1830 = vsel %vm1829, %v1822, %v1826
        %v1831 = vand.u32 2147483647, %v1821
        %vm1832 = vcmp.eq.f32.partialorder %v1831, 8.507059e+37
        %v1833 = vand.u32 %v1821, 2147483648
        %v1834 = vor.u32 1.1754944e-38, %v1833
        %v1835 = vsel %vm1832, %v1834, %v1830
        %v1836 = vmul.f32 %v1786, %v1835
        %v1837 = vmul.f32 %v1788, %v1835
        %v1838 = vmul.f32 %v1790, %v1835
        %v1839 = vmul.f32 %v1792, %v1835
        %v1840 = vmul.f32 %v1794, %v1835
        %v1841 = vmul.f32 %v1796, %v1835
        %v1842 = vmul.f32 %v1798, %v1835
        %v1843 = vmul.f32 %v1800, %v1835
        %1852 = vrot.lane.b32.xlu0 %v1836, 88
        %v1853 = vpop.permute.xlu0 %1852
        %1854 = vrot.lane.b32.xlu0 %v1837, 88
        %v1855 = vpop.permute.xlu0 %1854
        %1856 = vrot.lane.b32.xlu0 %v1838, 88
        %v1857 = vpop.permute.xlu0 %1856
        %1858 = vrot.lane.b32.xlu0 %v1839, 88
        %v1859 = vpop.permute.xlu0 %1858
        %1860 = vrot.lane.b32.xlu0 %v1840, 88
        %v1861 = vpop.permute.xlu0 %1860
        %1862 = vrot.lane.b32.xlu0 %v1841, 88
        %v1863 = vpop.permute.xlu0 %1862
        %1864 = vrot.lane.b32.xlu0 %v1842, 88
        %v1865 = vpop.permute.xlu0 %1864
        %1866 = vrot.lane.b32.xlu0 %v1843, 88
        %v1867 = vpop.permute.xlu0 %1866
        %1876 = vxpose.xlu0.b32.start [1/16] %v1853, 128
        %1877 = vxpose.xlu0.b32.cont [2/16] %v1855, 128
        %1878 = vxpose.xlu0.b32.cont [3/16] %v1857, 128
        %1879 = vxpose.xlu0.b32.cont [4/16] %v1859, 128
        %1880 = vxpose.xlu0.b32.cont [5/16] %v1861, 128
        %1881 = vxpose.xlu0.b32.cont [6/16] %v1863, 128
        %1882 = vxpose.xlu0.b32.cont [7/16] %v1865, 128
        %1883 = vxpose.xlu0.b32.cont [8/16] %v1867, 128
        %1884 = vxpose.xlu0.b32.cont [9/16] 0.0, 128
        %1885 = vxpose.xlu0.b32.cont [10/16] 0.0, 128
        %1886 = vxpose.xlu0.b32.cont [11/16] 0.0, 128
        %1887 = vxpose.xlu0.b32.cont [12/16] 0.0, 128
        %1888 = vxpose.xlu0.b32.cont [13/16] 0.0, 128
        %1889 = vxpose.xlu0.b32.cont [14/16] 0.0, 128
        %1890 = vxpose.xlu0.b32.cont [15/16] 0.0, 128
        %1891 = vxpose.xlu0.b32.end [16/16] 0.0, 128
        %v1892 = vpop.trf.xlu0
        %v1893 = vpop.trf.xlu0
        %v1894 = vpop.trf.xlu0
        %v1895 = vpop.trf.xlu0
        %v1896 = vpop.trf.xlu0
        %v1897 = vpop.trf.xlu0
        %v1898 = vpop.trf.xlu0
        %v1899 = vpop.trf.xlu0
        %v1900 = vpop.trf.xlu0
        %v1901 = vpop.trf.xlu0
        %v1902 = vpop.trf.xlu0
        %v1903 = vpop.trf.xlu0
        %v1904 = vpop.trf.xlu0
        %v1905 = vpop.trf.xlu0
        %v1906 = vpop.trf.xlu0
        %v1907 = vpop.trf.xlu0
        %1908 = vrot.lane.b32.xlu0 %v1027, 56
        %v1909 = vpop.permute.xlu0 %1908
        %1910 = vrot.lane.b32.xlu0 %v1030, 56
        %v1911 = vpop.permute.xlu0 %1910
        %1912 = vrot.lane.b32.xlu0 %v1033, 56
        %v1913 = vpop.permute.xlu0 %1912
        %1914 = vrot.lane.b32.xlu0 %v1036, 56
        %v1915 = vpop.permute.xlu0 %1914
        %1916 = vrot.lane.b32.xlu0 %v1039, 56
        %v1917 = vpop.permute.xlu0 %1916
        %1918 = vrot.lane.b32.xlu0 %v1042, 56
        %v1919 = vpop.permute.xlu0 %1918
        %1920 = vrot.lane.b32.xlu0 %v1045, 56
        %v1921 = vpop.permute.xlu0 %1920
        %1922 = vrot.lane.b32.xlu0 %v1048, 56
        %v1923 = vpop.permute.xlu0 %1922
        %v1933 = vsel %vm295, %v1892, 0
        %1935 = vmatpush.msra.mxu0 0.0
        %1936 = vmatpush.msra.mxu0 0.0
        %1937 = vmatpush.msra.mxu0 0.0
        %1938 = vmatpush.msra.mxu0 0.0
        %1939 = vmatpush.msra.mxu0 0.0
        %1940 = vmatpush.msra.mxu0 0.0
        %1941 = vmatpush.msra.mxu0 0.0
        %1942 = vmatpush.msra.mxu0 0.0
        %1943 = vmatpush.msra.mxu0 %v1923
        %1944 = vmatpush.msra.mxu0 %v1921
        %1945 = vmatpush.msra.mxu0 %v1919
        %1946 = vmatpush.msra.mxu0 %v1917
        %1947 = vmatpush.msra.mxu0 %v1915
        %1948 = vmatpush.msra.mxu0 %v1913
        %1949 = vmatpush.msra.mxu0 %v1911
        %1950 = vmatpush.msra.mxu0 %v1909
        %1951 = vmatmul.f32.gmra.mxu0 %v1933
        %v1952 = vpop.f32.mrf.mxu0
        %v1953 = vadd.f32 0.0, %v1952
        %1954 = vdwg.mxu0
        %1963 = vrot.lane.b32.xlu0 %v1747, 120
        %v1964 = vpop.permute.xlu0 %1963
        %1965 = vrot.lane.b32.xlu0 %v1748, 120
        %v1966 = vpop.permute.xlu0 %1965
        %1967 = vrot.lane.b32.xlu0 %v1749, 120
        %v1968 = vpop.permute.xlu0 %1967
        %1969 = vrot.lane.b32.xlu0 %v1750, 120
        %v1970 = vpop.permute.xlu0 %1969
        %1971 = vrot.lane.b32.xlu0 %v1751, 120
        %v1972 = vpop.permute.xlu0 %1971
        %1973 = vrot.lane.b32.xlu0 %v1752, 120
        %v1974 = vpop.permute.xlu0 %1973
        %1975 = vrot.lane.b32.xlu0 %v1753, 120
        %v1976 = vpop.permute.xlu0 %1975
        %1977 = vrot.lane.b32.xlu0 %v1754, 120
        %v1978 = vpop.permute.xlu0 %1977
        %v1979 = vsel %vm372, %v1964, 0
        %v1981 = vsel %vm372, %v1966, 0
        %v1983 = vsel %vm372, %v1968, 0
        %v1985 = vsel %vm372, %v1970, 0
        %v1987 = vsel %vm372, %v1972, 0
        %v1989 = vsel %vm372, %v1974, 0
        %v1991 = vsel %vm372, %v1976, 0
        %v1993 = vsel %vm372, %v1978, 0
        %1995 = vmatpush.msra.mxu0 0.0
        %1996 = vmatpush.msra.mxu0 0.0
        %1997 = vmatpush.msra.mxu0 0.0
        %1998 = vmatpush.msra.mxu0 0.0
        %1999 = vmatpush.msra.mxu0 0.0
        %2000 = vmatpush.msra.mxu0 0.0
        %2001 = vmatpush.msra.mxu0 0.0
        %2002 = vmatpush.msra.mxu0 0.0
        %2003 = vmatpush.msra.mxu0 0.0
        %2004 = vmatpush.msra.mxu0 0.0
        %2005 = vmatpush.msra.mxu0 0.0
        %2006 = vmatpush.msra.mxu0 0.0
        %2007 = vmatpush.msra.mxu0 0.0
        %2008 = vmatpush.msra.mxu0 0.0
        %2009 = vmatpush.msra.mxu0 0.0
        %2010 = vmatpush.msra.mxu0 %v1953
        %2011 = vmatmul.f32.gmra.mxu0 %v1979
        %v2012 = vpop.f32.mrf.mxu0
        %v2013 = vadd.f32 0.0, %v2012
        %2014 = vmatmul.f32.gmra.mxu0 %v1981
        %v2015 = vpop.f32.mrf.mxu0
        %v2016 = vadd.f32 0.0, %v2015
        %2017 = vmatmul.f32.gmra.mxu0 %v1983
        %v2018 = vpop.f32.mrf.mxu0
        %v2019 = vadd.f32 0.0, %v2018
        %2020 = vmatmul.f32.gmra.mxu0 %v1985
        %v2021 = vpop.f32.mrf.mxu0
        %v2022 = vadd.f32 0.0, %v2021
        %2023 = vmatmul.f32.gmra.mxu0 %v1987
        %v2024 = vpop.f32.mrf.mxu0
        %v2025 = vadd.f32 0.0, %v2024
        %2026 = vmatmul.f32.gmra.mxu0 %v1989
        %v2027 = vpop.f32.mrf.mxu0
        %v2028 = vadd.f32 0.0, %v2027
        %2029 = vmatmul.f32.gmra.mxu0 %v1991
        %v2030 = vpop.f32.mrf.mxu0
        %v2031 = vadd.f32 0.0, %v2030
        %2032 = vmatmul.f32.gmra.mxu0 %v1993
        %v2033 = vpop.f32.mrf.mxu0
        %v2034 = vadd.f32 0.0, %v2033
        %2035 = vdwg.mxu0
        %vm2036 = vcmask 195712
        %v2037 = vsel %vm2036, %v1027, -inf
        %2038 = vmax.xlane.f32.xlu0 %v2037
        %v2039 = vpop.xlane.xlu0 %2038
        %v2040 = vsel %vm2036, %v1030, -inf
        %2041 = vmax.xlane.f32.xlu0 %v2040
        %v2042 = vpop.xlane.xlu0 %2041
        %v2043 = vsel %vm2036, %v1033, -inf
        %2044 = vmax.xlane.f32.xlu0 %v2043
        %v2045 = vpop.xlane.xlu0 %2044
        %v2046 = vsel %vm2036, %v1036, -inf
        %2047 = vmax.xlane.f32.xlu0 %v2046
        %v2048 = vpop.xlane.xlu0 %2047
        %v2049 = vsel %vm2036, %v1039, -inf
        %2050 = vmax.xlane.f32.xlu0 %v2049
        %v2051 = vpop.xlane.xlu0 %2050
        %v2052 = vsel %vm2036, %v1042, -inf
        %2053 = vmax.xlane.f32.xlu0 %v2052
        %v2054 = vpop.xlane.xlu0 %2053
        %v2055 = vsel %vm2036, %v1045, -inf
        %2056 = vmax.xlane.f32.xlu0 %v2055
        %v2057 = vpop.xlane.xlu0 %2056
        %v2058 = vsel %vm2036, %v1048, -inf
        %2059 = vmax.xlane.f32.xlu0 %v2058
        %v2060 = vpop.xlane.xlu0 %2059
        %v2061 = vsub.f32 %v1027, %v2039
        %v2062 = vsub.f32 %v1030, %v2042
        %v2063 = vsub.f32 %v1033, %v2045
        %v2064 = vsub.f32 %v1036, %v2048
        %v2065 = vsub.f32 %v1039, %v2051
        %v2066 = vsub.f32 %v1042, %v2054
        %v2067 = vsub.f32 %v1045, %v2057
        %v2068 = vsub.f32 %v1048, %v2060
        %v2069 = vmul.f32 %v2061, 1.442695
        %v2070 = vpow.pop %v2069
        %v2071 = vmul.f32 %v2062, 1.442695
        %v2072 = vpow.pop %v2071
        %v2073 = vmul.f32 %v2063, 1.442695
        %v2074 = vpow.pop %v2073
        %v2075 = vmul.f32 %v2064, 1.442695
        %v2076 = vpow.pop %v2075
        %v2077 = vmul.f32 %v2065, 1.442695
        %v2078 = vpow.pop %v2077
        %v2079 = vmul.f32 %v2066, 1.442695
        %v2080 = vpow.pop %v2079
        %v2081 = vmul.f32 %v2067, 1.442695
        %v2082 = vpow.pop %v2081
        %v2083 = vmul.f32 %v2068, 1.442695
        %v2084 = vpow.pop %v2083
        %2093 = vrot.lane.b32.xlu0 %v2070, 112
        %v2094 = vpop.permute.xlu0 %2093
        %2095 = vrot.lane.b32.xlu0 %v2072, 112
        %v2096 = vpop.permute.xlu0 %2095
        %2097 = vrot.lane.b32.xlu0 %v2074, 112
        %v2098 = vpop.permute.xlu0 %2097
        %2099 = vrot.lane.b32.xlu0 %v2076, 112
        %v2100 = vpop.permute.xlu0 %2099
        %2101 = vrot.lane.b32.xlu0 %v2078, 112
        %v2102 = vpop.permute.xlu0 %2101
        %2103 = vrot.lane.b32.xlu0 %v2080, 112
        %v2104 = vpop.permute.xlu0 %2103
        %2105 = vrot.lane.b32.xlu0 %v2082, 112
        %v2106 = vpop.permute.xlu0 %2105
        %2107 = vrot.lane.b32.xlu0 %v2084, 112
        %v2108 = vpop.permute.xlu0 %2107
        %v2117 = vsel %vm372, %v2094, 0.0
        %2118 = vadd.xlane.f32.xlu0 %v2117
        %v2119 = vpop.xlane.xlu0 %2118
        %v2120 = vsel %vm372, %v2096, 0.0
        %2121 = vadd.xlane.f32.xlu0 %v2120
        %v2122 = vpop.xlane.xlu0 %2121
        %v2123 = vsel %vm372, %v2098, 0.0
        %2124 = vadd.xlane.f32.xlu0 %v2123
        %v2125 = vpop.xlane.xlu0 %2124
        %v2126 = vsel %vm372, %v2100, 0.0
        %2127 = vadd.xlane.f32.xlu0 %v2126
        %v2128 = vpop.xlane.xlu0 %2127
        %v2129 = vsel %vm372, %v2102, 0.0
        %2130 = vadd.xlane.f32.xlu0 %v2129
        %v2131 = vpop.xlane.xlu0 %2130
        %v2132 = vsel %vm372, %v2104, 0.0
        %2133 = vadd.xlane.f32.xlu0 %v2132
        %v2134 = vpop.xlane.xlu0 %2133
        %v2135 = vsel %vm372, %v2106, 0.0
        %2136 = vadd.xlane.f32.xlu0 %v2135
        %v2137 = vpop.xlane.xlu0 %2136
        %v2138 = vsel %vm372, %v2108, 0.0
        %2139 = vadd.xlane.f32.xlu0 %v2138
        %v2140 = vpop.xlane.xlu0 %2139
        %v2141 = vrcp.pop %v2119
        %v2142 = vmul.f32 %v2119, %v2141
        %v2143 = vsub.f32 1.0, %v2142
        %v2144 = vmul.f32 %v2141, %v2143
        %v2145 = vadd.f32 %v2141, %v2144
        %vm2146 = vweird.f32 %v2119
        %vm2147 = vweird.f32 %v2141
        %vm2148 = vmor %vm2146, %vm2147
        %v2149 = vsel %vm2148, %v2141, %v2145
        %v2150 = vand.u32 2147483647, %v2119
        %vm2151 = vcmp.eq.f32.partialorder %v2150, 8.507059e+37
        %v2152 = vand.u32 %v2119, 2147483648
        %v2153 = vor.u32 1.1754944e-38, %v2152
        %v2154 = vsel %vm2151, %v2153, %v2149
        %v2155 = vmul.f32 %v2070, %v2154
        %v2156 = vrcp.pop %v2122
        %v2157 = vmul.f32 %v2122, %v2156
        %v2158 = vsub.f32 1.0, %v2157
        %v2159 = vmul.f32 %v2156, %v2158
        %v2160 = vadd.f32 %v2156, %v2159
        %vm2161 = vweird.f32 %v2122
        %vm2162 = vweird.f32 %v2156
        %vm2163 = vmor %vm2161, %vm2162
        %v2164 = vsel %vm2163, %v2156, %v2160
        %v2165 = vand.u32 2147483647, %v2122
        %vm2166 = vcmp.eq.f32.partialorder %v2165, 8.507059e+37
        %v2167 = vand.u32 %v2122, 2147483648
        %v2168 = vor.u32 1.1754944e-38, %v2167
        %v2169 = vsel %vm2166, %v2168, %v2164
        %v2170 = vmul.f32 %v2072, %v2169
        %v2171 = vrcp.pop %v2125
        %v2172 = vmul.f32 %v2125, %v2171
        %v2173 = vsub.f32 1.0, %v2172
        %v2174 = vmul.f32 %v2171, %v2173
        %v2175 = vadd.f32 %v2171, %v2174
        %vm2176 = vweird.f32 %v2125
        %vm2177 = vweird.f32 %v2171
        %vm2178 = vmor %vm2176, %vm2177
        %v2179 = vsel %vm2178, %v2171, %v2175
        %v2180 = vand.u32 2147483647, %v2125
        %vm2181 = vcmp.eq.f32.partialorder %v2180, 8.507059e+37
        %v2182 = vand.u32 %v2125, 2147483648
        %v2183 = vor.u32 1.1754944e-38, %v2182
        %v2184 = vsel %vm2181, %v2183, %v2179
        %v2185 = vmul.f32 %v2074, %v2184
        %v2186 = vrcp.pop %v2128
        %v2187 = vmul.f32 %v2128, %v2186
        %v2188 = vsub.f32 1.0, %v2187
        %v2189 = vmul.f32 %v2186, %v2188
        %v2190 = vadd.f32 %v2186, %v2189
        %vm2191 = vweird.f32 %v2128
        %vm2192 = vweird.f32 %v2186
        %vm2193 = vmor %vm2191, %vm2192
        %v2194 = vsel %vm2193, %v2186, %v2190
        %v2195 = vand.u32 2147483647, %v2128
        %vm2196 = vcmp.eq.f32.partialorder %v2195, 8.507059e+37
        %v2197 = vand.u32 %v2128, 2147483648
        %v2198 = vor.u32 1.1754944e-38, %v2197
        %v2199 = vsel %vm2196, %v2198, %v2194
        %v2200 = vmul.f32 %v2076, %v2199
        %v2201 = vrcp.pop %v2131
        %v2202 = vmul.f32 %v2131, %v2201
        %v2203 = vsub.f32 1.0, %v2202
        %v2204 = vmul.f32 %v2201, %v2203
        %v2205 = vadd.f32 %v2201, %v2204
        %vm2206 = vweird.f32 %v2131
        %vm2207 = vweird.f32 %v2201
        %vm2208 = vmor %vm2206, %vm2207
        %v2209 = vsel %vm2208, %v2201, %v2205
        %v2210 = vand.u32 2147483647, %v2131
        %vm2211 = vcmp.eq.f32.partialorder %v2210, 8.507059e+37
        %v2212 = vand.u32 %v2131, 2147483648
        %v2213 = vor.u32 1.1754944e-38, %v2212
        %v2214 = vsel %vm2211, %v2213, %v2209
        %v2215 = vmul.f32 %v2078, %v2214
        %v2216 = vrcp.pop %v2134
        %v2217 = vmul.f32 %v2134, %v2216
        %v2218 = vsub.f32 1.0, %v2217
        %v2219 = vmul.f32 %v2216, %v2218
        %v2220 = vadd.f32 %v2216, %v2219
        %vm2221 = vweird.f32 %v2134
        %vm2222 = vweird.f32 %v2216
        %vm2223 = vmor %vm2221, %vm2222
        %v2224 = vsel %vm2223, %v2216, %v2220
        %v2225 = vand.u32 2147483647, %v2134
        %vm2226 = vcmp.eq.f32.partialorder %v2225, 8.507059e+37
        %v2227 = vand.u32 %v2134, 2147483648
        %v2228 = vor.u32 1.1754944e-38, %v2227
        %v2229 = vsel %vm2226, %v2228, %v2224
        %v2230 = vmul.f32 %v2080, %v2229
        %v2231 = vrcp.pop %v2137
        %v2232 = vmul.f32 %v2137, %v2231
        %v2233 = vsub.f32 1.0, %v2232
        %v2234 = vmul.f32 %v2231, %v2233
        %v2235 = vadd.f32 %v2231, %v2234
        %vm2236 = vweird.f32 %v2137
        %vm2237 = vweird.f32 %v2231
        %vm2238 = vmor %vm2236, %vm2237
        %v2239 = vsel %vm2238, %v2231, %v2235
        %v2240 = vand.u32 2147483647, %v2137
        %vm2241 = vcmp.eq.f32.partialorder %v2240, 8.507059e+37
        %v2242 = vand.u32 %v2137, 2147483648
        %v2243 = vor.u32 1.1754944e-38, %v2242
        %v2244 = vsel %vm2241, %v2243, %v2239
        %v2245 = vmul.f32 %v2082, %v2244
        %v2246 = vrcp.pop %v2140
        %v2247 = vmul.f32 %v2140, %v2246
        %v2248 = vsub.f32 1.0, %v2247
        %v2249 = vmul.f32 %v2246, %v2248
        %v2250 = vadd.f32 %v2246, %v2249
        %vm2251 = vweird.f32 %v2140
        %vm2252 = vweird.f32 %v2246
        %vm2253 = vmor %vm2251, %vm2252
        %v2254 = vsel %vm2253, %v2246, %v2250
        %v2255 = vand.u32 2147483647, %v2140
        %vm2256 = vcmp.eq.f32.partialorder %v2255, 8.507059e+37
        %v2257 = vand.u32 %v2140, 2147483648
        %v2258 = vor.u32 1.1754944e-38, %v2257
        %v2259 = vsel %vm2256, %v2258, %v2254
        %v2260 = vmul.f32 %v2084, %v2259
        %v2261 = vmul.f32 %v2155, 0.35355338
        %v2262 = vmul.f32 %v2170, 0.35355338
        %v2263 = vmul.f32 %v2185, 0.35355338
        %v2264 = vmul.f32 %v2200, 0.35355338
        %v2265 = vmul.f32 %v2215, 0.35355338
        %v2266 = vmul.f32 %v2230, 0.35355338
        %v2267 = vmul.f32 %v2245, 0.35355338
        %v2268 = vmul.f32 %v2260, 0.35355338
        %vm2269 = vcmask 458112
        %v2270 = vsel %vm2269, %v1027, -inf
        %v2271 = vsel %vm2269, %v1030, -inf
        %v2272 = vsel %vm2269, %v1033, -inf
        %v2273 = vsel %vm2269, %v1036, -inf
        %v2274 = vsel %vm2269, %v1039, -inf
        %v2275 = vmax.f32 %v2270, %v2274
        %v2276 = vsel %vm2269, %v1042, -inf
        %v2277 = vmax.f32 %v2271, %v2276
        %v2278 = vsel %vm2269, %v1045, -inf
        %v2279 = vmax.f32 %v2272, %v2278
        %v2280 = vsel %vm2269, %v1048, -inf
        %v2281 = vmax.f32 %v2273, %v2280
        %v2282 = vmax.f32 %v2275, %v2277
        %v2283 = vmax.f32 %v2279, %v2281
        %v2284 = vmax.f32 %v2282, %v2283
        %v2285 = vrot.slane %v2284, 4
        %v2286 = vmax.f32 %v2284, %v2285
        %v2287 = vrot.slane %v2286, 2
        %v2288 = vmax.f32 %v2286, %v2287
        %v2289 = vrot.slane %v2288, 1
        %v2290 = vmax.f32 %v2288, %v2289
        %v2291 = vsub.f32 %v1027, %v2290
        %v2292 = vsub.f32 %v1030, %v2290
        %v2293 = vsub.f32 %v1033, %v2290
        %v2294 = vsub.f32 %v1036, %v2290
        %v2295 = vsub.f32 %v1039, %v2290
        %v2296 = vsub.f32 %v1042, %v2290
        %v2297 = vsub.f32 %v1045, %v2290
        %v2298 = vsub.f32 %v1048, %v2290
        %v2299 = vmul.f32 %v2291, 1.442695
        %v2300 = vpow.pop %v2299
        %v2301 = vmul.f32 %v2292, 1.442695
        %v2302 = vpow.pop %v2301
        %v2303 = vmul.f32 %v2293, 1.442695
        %v2304 = vpow.pop %v2303
        %v2305 = vmul.f32 %v2294, 1.442695
        %v2306 = vpow.pop %v2305
        %v2307 = vmul.f32 %v2295, 1.442695
        %v2308 = vpow.pop %v2307
        %v2309 = vmul.f32 %v2296, 1.442695
        %v2310 = vpow.pop %v2309
        %v2311 = vmul.f32 %v2297, 1.442695
        %v2312 = vpow.pop %v2311
        %v2313 = vmul.f32 %v2298, 1.442695
        %v2314 = vpow.pop %v2313
        %v2315 = vsel %vm2269, %v2300, 0.0
        %v2316 = vsel %vm2269, %v2302, 0.0
        %v2317 = vadd.f32 %v2315, %v2316
        %v2318 = vsel %vm2269, %v2304, 0.0
        %v2319 = vadd.f32 %v2317, %v2318
        %v2320 = vsel %vm2269, %v2306, 0.0
        %v2321 = vadd.f32 %v2319, %v2320
        %v2322 = vsel %vm2269, %v2308, 0.0
        %v2323 = vadd.f32 %v2321, %v2322
        %v2324 = vsel %vm2269, %v2310, 0.0
        %v2325 = vadd.f32 %v2323, %v2324
        %v2326 = vsel %vm2269, %v2312, 0.0
        %v2327 = vadd.f32 %v2325, %v2326
        %v2328 = vsel %vm2269, %v2314, 0.0
        %v2329 = vadd.f32 %v2327, %v2328
        %v2330 = vrot.slane %v2329, 4
        %v2331 = vadd.f32 %v2329, %v2330
        %v2332 = vrot.slane %v2331, 2
        %v2333 = vadd.f32 %v2331, %v2332
        %v2334 = vrot.slane %v2333, 1
        %v2335 = vadd.f32 %v2333, %v2334
        %v2336 = vrcp.pop %v2335
        %v2337 = vmul.f32 %v2335, %v2336
        %v2338 = vsub.f32 1.0, %v2337
        %v2339 = vmul.f32 %v2336, %v2338
        %v2340 = vadd.f32 %v2336, %v2339
        %vm2341 = vweird.f32 %v2335
        %vm2342 = vweird.f32 %v2336
        %vm2343 = vmor %vm2341, %vm2342
        %v2344 = vsel %vm2343, %v2336, %v2340
        %v2345 = vand.u32 2147483647, %v2335
        %vm2346 = vcmp.eq.f32.partialorder %v2345, 8.507059e+37
        %v2347 = vand.u32 %v2335, 2147483648
        %v2348 = vor.u32 1.1754944e-38, %v2347
        %v2349 = vsel %vm2346, %v2348, %v2344
        %v2350 = vmul.f32 %v2300, %v2349
        %v2351 = vmul.f32 %v2302, %v2349
        %v2352 = vmul.f32 %v2304, %v2349
        %v2353 = vmul.f32 %v2306, %v2349
        %v2354 = vmul.f32 %v2308, %v2349
        %v2355 = vmul.f32 %v2310, %v2349
        %v2356 = vmul.f32 %v2312, %v2349
        %v2357 = vmul.f32 %v2314, %v2349
        %2366 = vrot.lane.b32.xlu0 %v2350, 80
        %v2367 = vpop.permute.xlu0 %2366
        %2368 = vrot.lane.b32.xlu0 %v2351, 80
        %v2369 = vpop.permute.xlu0 %2368
        %2370 = vrot.lane.b32.xlu0 %v2352, 80
        %v2371 = vpop.permute.xlu0 %2370
        %2372 = vrot.lane.b32.xlu0 %v2353, 80
        %v2373 = vpop.permute.xlu0 %2372
        %2374 = vrot.lane.b32.xlu0 %v2354, 80
        %v2375 = vpop.permute.xlu0 %2374
        %2376 = vrot.lane.b32.xlu0 %v2355, 80
        %v2377 = vpop.permute.xlu0 %2376
        %2378 = vrot.lane.b32.xlu0 %v2356, 80
        %v2379 = vpop.permute.xlu0 %2378
        %2380 = vrot.lane.b32.xlu0 %v2357, 80
        %v2381 = vpop.permute.xlu0 %2380
        %2390 = vxpose.xlu0.b32.start [1/16] %v2367, 128
        %2391 = vxpose.xlu0.b32.cont [2/16] %v2369, 128
        %2392 = vxpose.xlu0.b32.cont [3/16] %v2371, 128
        %2393 = vxpose.xlu0.b32.cont [4/16] %v2373, 128
        %2394 = vxpose.xlu0.b32.cont [5/16] %v2375, 128
        %2395 = vxpose.xlu0.b32.cont [6/16] %v2377, 128
        %2396 = vxpose.xlu0.b32.cont [7/16] %v2379, 128
        %2397 = vxpose.xlu0.b32.cont [8/16] %v2381, 128
        %2398 = vxpose.xlu0.b32.cont [9/16] 0.0, 128
        %2399 = vxpose.xlu0.b32.cont [10/16] 0.0, 128
        %2400 = vxpose.xlu0.b32.cont [11/16] 0.0, 128
        %2401 = vxpose.xlu0.b32.cont [12/16] 0.0, 128
        %2402 = vxpose.xlu0.b32.cont [13/16] 0.0, 128
        %2403 = vxpose.xlu0.b32.cont [14/16] 0.0, 128
        %2404 = vxpose.xlu0.b32.cont [15/16] 0.0, 128
        %2405 = vxpose.xlu0.b32.end [16/16] 0.0, 128
        %v2406 = vpop.trf.xlu0
        %v2407 = vpop.trf.xlu0
        %v2408 = vpop.trf.xlu0
        %v2409 = vpop.trf.xlu0
        %v2410 = vpop.trf.xlu0
        %v2411 = vpop.trf.xlu0
        %v2412 = vpop.trf.xlu0
        %v2413 = vpop.trf.xlu0
        %v2414 = vpop.trf.xlu0
        %v2415 = vpop.trf.xlu0
        %v2416 = vpop.trf.xlu0
        %v2417 = vpop.trf.xlu0
        %v2418 = vpop.trf.xlu0
        %v2419 = vpop.trf.xlu0
        %v2420 = vpop.trf.xlu0
        %v2421 = vpop.trf.xlu0
        %2422 = vrot.lane.b32.xlu0 %v1027, 48
        %v2423 = vpop.permute.xlu0 %2422
        %2424 = vrot.lane.b32.xlu0 %v1030, 48
        %v2425 = vpop.permute.xlu0 %2424
        %2426 = vrot.lane.b32.xlu0 %v1033, 48
        %v2427 = vpop.permute.xlu0 %2426
        %2428 = vrot.lane.b32.xlu0 %v1036, 48
        %v2429 = vpop.permute.xlu0 %2428
        %2430 = vrot.lane.b32.xlu0 %v1039, 48
        %v2431 = vpop.permute.xlu0 %2430
        %2432 = vrot.lane.b32.xlu0 %v1042, 48
        %v2433 = vpop.permute.xlu0 %2432
        %2434 = vrot.lane.b32.xlu0 %v1045, 48
        %v2435 = vpop.permute.xlu0 %2434
        %2436 = vrot.lane.b32.xlu0 %v1048, 48
        %v2437 = vpop.permute.xlu0 %2436
        %v2447 = vsel %vm295, %v2406, 0
        %2449 = vmatpush.msra.mxu0 0.0
        %2450 = vmatpush.msra.mxu0 0.0
        %2451 = vmatpush.msra.mxu0 0.0
        %2452 = vmatpush.msra.mxu0 0.0
        %2453 = vmatpush.msra.mxu0 0.0
        %2454 = vmatpush.msra.mxu0 0.0
        %2455 = vmatpush.msra.mxu0 0.0
        %2456 = vmatpush.msra.mxu0 0.0
        %2457 = vmatpush.msra.mxu0 %v2437
        %2458 = vmatpush.msra.mxu0 %v2435
        %2459 = vmatpush.msra.mxu0 %v2433
        %2460 = vmatpush.msra.mxu0 %v2431
        %2461 = vmatpush.msra.mxu0 %v2429
        %2462 = vmatpush.msra.mxu0 %v2427
        %2463 = vmatpush.msra.mxu0 %v2425
        %2464 = vmatpush.msra.mxu0 %v2423
        %2465 = vmatmul.f32.gmra.mxu0 %v2447
        %v2466 = vpop.f32.mrf.mxu0
        %v2467 = vadd.f32 0.0, %v2466
        %2468 = vdwg.mxu0
        %2477 = vrot.lane.b32.xlu0 %v2261, 112
        %v2478 = vpop.permute.xlu0 %2477
        %2479 = vrot.lane.b32.xlu0 %v2262, 112
        %v2480 = vpop.permute.xlu0 %2479
        %2481 = vrot.lane.b32.xlu0 %v2263, 112
        %v2482 = vpop.permute.xlu0 %2481
        %2483 = vrot.lane.b32.xlu0 %v2264, 112
        %v2484 = vpop.permute.xlu0 %2483
        %2485 = vrot.lane.b32.xlu0 %v2265, 112
        %v2486 = vpop.permute.xlu0 %2485
        %2487 = vrot.lane.b32.xlu0 %v2266, 112
        %v2488 = vpop.permute.xlu0 %2487
        %2489 = vrot.lane.b32.xlu0 %v2267, 112
        %v2490 = vpop.permute.xlu0 %2489
        %2491 = vrot.lane.b32.xlu0 %v2268, 112
        %v2492 = vpop.permute.xlu0 %2491
        %v2493 = vsel %vm372, %v2478, 0
        %v2495 = vsel %vm372, %v2480, 0
        %v2497 = vsel %vm372, %v2482, 0
        %v2499 = vsel %vm372, %v2484, 0
        %v2501 = vsel %vm372, %v2486, 0
        %v2503 = vsel %vm372, %v2488, 0
        %v2505 = vsel %vm372, %v2490, 0
        %v2507 = vsel %vm372, %v2492, 0
        %2509 = vmatpush.msra.mxu0 0.0
        %2510 = vmatpush.msra.mxu0 0.0
        %2511 = vmatpush.msra.mxu0 0.0
        %2512 = vmatpush.msra.mxu0 0.0
        %2513 = vmatpush.msra.mxu0 0.0
        %2514 = vmatpush.msra.mxu0 0.0
        %2515 = vmatpush.msra.mxu0 0.0
        %2516 = vmatpush.msra.mxu0 0.0
        %2517 = vmatpush.msra.mxu0 0.0
        %2518 = vmatpush.msra.mxu0 0.0
        %2519 = vmatpush.msra.mxu0 0.0
        %2520 = vmatpush.msra.mxu0 0.0
        %2521 = vmatpush.msra.mxu0 0.0
        %2522 = vmatpush.msra.mxu0 0.0
        %2523 = vmatpush.msra.mxu0 0.0
        %2524 = vmatpush.msra.mxu0 %v2467
        %2525 = vmatmul.f32.gmra.mxu0 %v2493
        %v2526 = vpop.f32.mrf.mxu0
        %v2527 = vadd.f32 0.0, %v2526
        %2528 = vmatmul.f32.gmra.mxu0 %v2495
        %v2529 = vpop.f32.mrf.mxu0
        %v2530 = vadd.f32 0.0, %v2529
        %2531 = vmatmul.f32.gmra.mxu0 %v2497
        %v2532 = vpop.f32.mrf.mxu0
        %v2533 = vadd.f32 0.0, %v2532
        %2534 = vmatmul.f32.gmra.mxu0 %v2499
        %v2535 = vpop.f32.mrf.mxu0
        %v2536 = vadd.f32 0.0, %v2535
        %2537 = vmatmul.f32.gmra.mxu0 %v2501
        %v2538 = vpop.f32.mrf.mxu0
        %v2539 = vadd.f32 0.0, %v2538
        %2540 = vmatmul.f32.gmra.mxu0 %v2503
        %v2541 = vpop.f32.mrf.mxu0
        %v2542 = vadd.f32 0.0, %v2541
        %2543 = vmatmul.f32.gmra.mxu0 %v2505
        %v2544 = vpop.f32.mrf.mxu0
        %v2545 = vadd.f32 0.0, %v2544
        %2546 = vmatmul.f32.gmra.mxu0 %v2507
        %v2547 = vpop.f32.mrf.mxu0
        %v2548 = vadd.f32 0.0, %v2547
        %2549 = vdwg.mxu0
        %vm2550 = vcmask 261312
        %v2551 = vsel %vm2550, %v1027, -inf
        %2552 = vmax.xlane.f32.xlu0 %v2551
        %v2553 = vpop.xlane.xlu0 %2552
        %v2554 = vsel %vm2550, %v1030, -inf
        %2555 = vmax.xlane.f32.xlu0 %v2554
        %v2556 = vpop.xlane.xlu0 %2555
        %v2557 = vsel %vm2550, %v1033, -inf
        %2558 = vmax.xlane.f32.xlu0 %v2557
        %v2559 = vpop.xlane.xlu0 %2558
        %v2560 = vsel %vm2550, %v1036, -inf
        %2561 = vmax.xlane.f32.xlu0 %v2560
        %v2562 = vpop.xlane.xlu0 %2561
        %v2563 = vsel %vm2550, %v1039, -inf
        %2564 = vmax.xlane.f32.xlu0 %v2563
        %v2565 = vpop.xlane.xlu0 %2564
        %v2566 = vsel %vm2550, %v1042, -inf
        %2567 = vmax.xlane.f32.xlu0 %v2566
        %v2568 = vpop.xlane.xlu0 %2567
        %v2569 = vsel %vm2550, %v1045, -inf
        %2570 = vmax.xlane.f32.xlu0 %v2569
        %v2571 = vpop.xlane.xlu0 %2570
        %v2572 = vsel %vm2550, %v1048, -inf
        %2573 = vmax.xlane.f32.xlu0 %v2572
        %v2574 = vpop.xlane.xlu0 %2573
        %v2575 = vsub.f32 %v1027, %v2553
        %v2576 = vsub.f32 %v1030, %v2556
        %v2577 = vsub.f32 %v1033, %v2559
        %v2578 = vsub.f32 %v1036, %v2562
        %v2579 = vsub.f32 %v1039, %v2565
        %v2580 = vsub.f32 %v1042, %v2568
        %v2581 = vsub.f32 %v1045, %v2571
        %v2582 = vsub.f32 %v1048, %v2574
        %v2583 = vmul.f32 %v2575, 1.442695
        %v2584 = vpow.pop %v2583
        %v2585 = vmul.f32 %v2576, 1.442695
        %v2586 = vpow.pop %v2585
        %v2587 = vmul.f32 %v2577, 1.442695
        %v2588 = vpow.pop %v2587
        %v2589 = vmul.f32 %v2578, 1.442695
        %v2590 = vpow.pop %v2589
        %v2591 = vmul.f32 %v2579, 1.442695
        %v2592 = vpow.pop %v2591
        %v2593 = vmul.f32 %v2580, 1.442695
        %v2594 = vpow.pop %v2593
        %v2595 = vmul.f32 %v2581, 1.442695
        %v2596 = vpow.pop %v2595
        %v2597 = vmul.f32 %v2582, 1.442695
        %v2598 = vpow.pop %v2597
        %2607 = vrot.lane.b32.xlu0 %v2584, 104
        %v2608 = vpop.permute.xlu0 %2607
        %2609 = vrot.lane.b32.xlu0 %v2586, 104
        %v2610 = vpop.permute.xlu0 %2609
        %2611 = vrot.lane.b32.xlu0 %v2588, 104
        %v2612 = vpop.permute.xlu0 %2611
        %2613 = vrot.lane.b32.xlu0 %v2590, 104
        %v2614 = vpop.permute.xlu0 %2613
        %2615 = vrot.lane.b32.xlu0 %v2592, 104
        %v2616 = vpop.permute.xlu0 %2615
        %2617 = vrot.lane.b32.xlu0 %v2594, 104
        %v2618 = vpop.permute.xlu0 %2617
        %2619 = vrot.lane.b32.xlu0 %v2596, 104
        %v2620 = vpop.permute.xlu0 %2619
        %2621 = vrot.lane.b32.xlu0 %v2598, 104
        %v2622 = vpop.permute.xlu0 %2621
        %v2631 = vsel %vm372, %v2608, 0.0
        %2632 = vadd.xlane.f32.xlu0 %v2631
        %v2633 = vpop.xlane.xlu0 %2632
        %v2634 = vsel %vm372, %v2610, 0.0
        %2635 = vadd.xlane.f32.xlu0 %v2634
        %v2636 = vpop.xlane.xlu0 %2635
        %v2637 = vsel %vm372, %v2612, 0.0
        %2638 = vadd.xlane.f32.xlu0 %v2637
        %v2639 = vpop.xlane.xlu0 %2638
        %v2640 = vsel %vm372, %v2614, 0.0
        %2641 = vadd.xlane.f32.xlu0 %v2640
        %v2642 = vpop.xlane.xlu0 %2641
        %v2643 = vsel %vm372, %v2616, 0.0
        %2644 = vadd.xlane.f32.xlu0 %v2643
        %v2645 = vpop.xlane.xlu0 %2644
        %v2646 = vsel %vm372, %v2618, 0.0
        %2647 = vadd.xlane.f32.xlu0 %v2646
        %v2648 = vpop.xlane.xlu0 %2647
        %v2649 = vsel %vm372, %v2620, 0.0
        %2650 = vadd.xlane.f32.xlu0 %v2649
        %v2651 = vpop.xlane.xlu0 %2650
        %v2652 = vsel %vm372, %v2622, 0.0
        %2653 = vadd.xlane.f32.xlu0 %v2652
        %v2654 = vpop.xlane.xlu0 %2653
        %v2655 = vrcp.pop %v2633
        %v2656 = vmul.f32 %v2633, %v2655
        %v2657 = vsub.f32 1.0, %v2656
        %v2658 = vmul.f32 %v2655, %v2657
        %v2659 = vadd.f32 %v2655, %v2658
        %vm2660 = vweird.f32 %v2633
        %vm2661 = vweird.f32 %v2655
        %vm2662 = vmor %vm2660, %vm2661
        %v2663 = vsel %vm2662, %v2655, %v2659
        %v2664 = vand.u32 2147483647, %v2633
        %vm2665 = vcmp.eq.f32.partialorder %v2664, 8.507059e+37
        %v2666 = vand.u32 %v2633, 2147483648
        %v2667 = vor.u32 1.1754944e-38, %v2666
        %v2668 = vsel %vm2665, %v2667, %v2663
        %v2669 = vmul.f32 %v2584, %v2668
        %v2670 = vrcp.pop %v2636
        %v2671 = vmul.f32 %v2636, %v2670
        %v2672 = vsub.f32 1.0, %v2671
        %v2673 = vmul.f32 %v2670, %v2672
        %v2674 = vadd.f32 %v2670, %v2673
        %vm2675 = vweird.f32 %v2636
        %vm2676 = vweird.f32 %v2670
        %vm2677 = vmor %vm2675, %vm2676
        %v2678 = vsel %vm2677, %v2670, %v2674
        %v2679 = vand.u32 2147483647, %v2636
        %vm2680 = vcmp.eq.f32.partialorder %v2679, 8.507059e+37
        %v2681 = vand.u32 %v2636, 2147483648
        %v2682 = vor.u32 1.1754944e-38, %v2681
        %v2683 = vsel %vm2680, %v2682, %v2678
        %v2684 = vmul.f32 %v2586, %v2683
        %v2685 = vrcp.pop %v2639
        %v2686 = vmul.f32 %v2639, %v2685
        %v2687 = vsub.f32 1.0, %v2686
        %v2688 = vmul.f32 %v2685, %v2687
        %v2689 = vadd.f32 %v2685, %v2688
        %vm2690 = vweird.f32 %v2639
        %vm2691 = vweird.f32 %v2685
        %vm2692 = vmor %vm2690, %vm2691
        %v2693 = vsel %vm2692, %v2685, %v2689
        %v2694 = vand.u32 2147483647, %v2639
        %vm2695 = vcmp.eq.f32.partialorder %v2694, 8.507059e+37
        %v2696 = vand.u32 %v2639, 2147483648
        %v2697 = vor.u32 1.1754944e-38, %v2696
        %v2698 = vsel %vm2695, %v2697, %v2693
        %v2699 = vmul.f32 %v2588, %v2698
        %v2700 = vrcp.pop %v2642
        %v2701 = vmul.f32 %v2642, %v2700
        %v2702 = vsub.f32 1.0, %v2701
        %v2703 = vmul.f32 %v2700, %v2702
        %v2704 = vadd.f32 %v2700, %v2703
        %vm2705 = vweird.f32 %v2642
        %vm2706 = vweird.f32 %v2700
        %vm2707 = vmor %vm2705, %vm2706
        %v2708 = vsel %vm2707, %v2700, %v2704
        %v2709 = vand.u32 2147483647, %v2642
        %vm2710 = vcmp.eq.f32.partialorder %v2709, 8.507059e+37
        %v2711 = vand.u32 %v2642, 2147483648
        %v2712 = vor.u32 1.1754944e-38, %v2711
        %v2713 = vsel %vm2710, %v2712, %v2708
        %v2714 = vmul.f32 %v2590, %v2713
        %v2715 = vrcp.pop %v2645
        %v2716 = vmul.f32 %v2645, %v2715
        %v2717 = vsub.f32 1.0, %v2716
        %v2718 = vmul.f32 %v2715, %v2717
        %v2719 = vadd.f32 %v2715, %v2718
        %vm2720 = vweird.f32 %v2645
        %vm2721 = vweird.f32 %v2715
        %vm2722 = vmor %vm2720, %vm2721
        %v2723 = vsel %vm2722, %v2715, %v2719
        %v2724 = vand.u32 2147483647, %v2645
        %vm2725 = vcmp.eq.f32.partialorder %v2724, 8.507059e+37
        %v2726 = vand.u32 %v2645, 2147483648
        %v2727 = vor.u32 1.1754944e-38, %v2726
        %v2728 = vsel %vm2725, %v2727, %v2723
        %v2729 = vmul.f32 %v2592, %v2728
        %v2730 = vrcp.pop %v2648
        %v2731 = vmul.f32 %v2648, %v2730
        %v2732 = vsub.f32 1.0, %v2731
        %v2733 = vmul.f32 %v2730, %v2732
        %v2734 = vadd.f32 %v2730, %v2733
        %vm2735 = vweird.f32 %v2648
        %vm2736 = vweird.f32 %v2730
        %vm2737 = vmor %vm2735, %vm2736
        %v2738 = vsel %vm2737, %v2730, %v2734
        %v2739 = vand.u32 2147483647, %v2648
        %vm2740 = vcmp.eq.f32.partialorder %v2739, 8.507059e+37
        %v2741 = vand.u32 %v2648, 2147483648
        %v2742 = vor.u32 1.1754944e-38, %v2741
        %v2743 = vsel %vm2740, %v2742, %v2738
        %v2744 = vmul.f32 %v2594, %v2743
        %v2745 = vrcp.pop %v2651
        %v2746 = vmul.f32 %v2651, %v2745
        %v2747 = vsub.f32 1.0, %v2746
        %v2748 = vmul.f32 %v2745, %v2747
        %v2749 = vadd.f32 %v2745, %v2748
        %vm2750 = vweird.f32 %v2651
        %vm2751 = vweird.f32 %v2745
        %vm2752 = vmor %vm2750, %vm2751
        %v2753 = vsel %vm2752, %v2745, %v2749
        %v2754 = vand.u32 2147483647, %v2651
        %vm2755 = vcmp.eq.f32.partialorder %v2754, 8.507059e+37
        %v2756 = vand.u32 %v2651, 2147483648
        %v2757 = vor.u32 1.1754944e-38, %v2756
        %v2758 = vsel %vm2755, %v2757, %v2753
        %v2759 = vmul.f32 %v2596, %v2758
        %v2760 = vrcp.pop %v2654
        %v2761 = vmul.f32 %v2654, %v2760
        %v2762 = vsub.f32 1.0, %v2761
        %v2763 = vmul.f32 %v2760, %v2762
        %v2764 = vadd.f32 %v2760, %v2763
        %vm2765 = vweird.f32 %v2654
        %vm2766 = vweird.f32 %v2760
        %vm2767 = vmor %vm2765, %vm2766
        %v2768 = vsel %vm2767, %v2760, %v2764
        %v2769 = vand.u32 2147483647, %v2654
        %vm2770 = vcmp.eq.f32.partialorder %v2769, 8.507059e+37
        %v2771 = vand.u32 %v2654, 2147483648
        %v2772 = vor.u32 1.1754944e-38, %v2771
        %v2773 = vsel %vm2770, %v2772, %v2768
        %v2774 = vmul.f32 %v2598, %v2773
        %v2775 = vmul.f32 %v2669, 0.35355338
        %v2776 = vmul.f32 %v2684, 0.35355338
        %v2777 = vmul.f32 %v2699, 0.35355338
        %v2778 = vmul.f32 %v2714, 0.35355338
        %v2779 = vmul.f32 %v2729, 0.35355338
        %v2780 = vmul.f32 %v2744, 0.35355338
        %v2781 = vmul.f32 %v2759, 0.35355338
        %v2782 = vmul.f32 %v2774, 0.35355338
        %vm2783 = vcmask 523712
        %v2784 = vsel %vm2783, %v1027, -inf
        %v2785 = vsel %vm2783, %v1030, -inf
        %v2786 = vsel %vm2783, %v1033, -inf
        %v2787 = vsel %vm2783, %v1036, -inf
        %v2788 = vsel %vm2783, %v1039, -inf
        %v2789 = vmax.f32 %v2784, %v2788
        %v2790 = vsel %vm2783, %v1042, -inf
        %v2791 = vmax.f32 %v2785, %v2790
        %v2792 = vsel %vm2783, %v1045, -inf
        %v2793 = vmax.f32 %v2786, %v2792
        %v2794 = vsel %vm2783, %v1048, -inf
        %v2795 = vmax.f32 %v2787, %v2794
        %v2796 = vmax.f32 %v2789, %v2791
        %v2797 = vmax.f32 %v2793, %v2795
        %v2798 = vmax.f32 %v2796, %v2797
        %v2799 = vrot.slane %v2798, 4
        %v2800 = vmax.f32 %v2798, %v2799
        %v2801 = vrot.slane %v2800, 2
        %v2802 = vmax.f32 %v2800, %v2801
        %v2803 = vrot.slane %v2802, 1
        %v2804 = vmax.f32 %v2802, %v2803
        %v2805 = vsub.f32 %v1027, %v2804
        %v2806 = vsub.f32 %v1030, %v2804
        %v2807 = vsub.f32 %v1033, %v2804
        %v2808 = vsub.f32 %v1036, %v2804
        %v2809 = vsub.f32 %v1039, %v2804
        %v2810 = vsub.f32 %v1042, %v2804
        %v2811 = vsub.f32 %v1045, %v2804
        %v2812 = vsub.f32 %v1048, %v2804
        %v2813 = vmul.f32 %v2805, 1.442695
        %v2814 = vpow.pop %v2813
        %v2815 = vmul.f32 %v2806, 1.442695
        %v2816 = vpow.pop %v2815
        %v2817 = vmul.f32 %v2807, 1.442695
        %v2818 = vpow.pop %v2817
        %v2819 = vmul.f32 %v2808, 1.442695
        %v2820 = vpow.pop %v2819
        %v2821 = vmul.f32 %v2809, 1.442695
        %v2822 = vpow.pop %v2821
        %v2823 = vmul.f32 %v2810, 1.442695
        %v2824 = vpow.pop %v2823
        %v2825 = vmul.f32 %v2811, 1.442695
        %v2826 = vpow.pop %v2825
        %v2827 = vmul.f32 %v2812, 1.442695
        %v2828 = vpow.pop %v2827
        %v2829 = vsel %vm2783, %v2814, 0.0
        %v2830 = vsel %vm2783, %v2816, 0.0
        %v2831 = vadd.f32 %v2829, %v2830
        %v2832 = vsel %vm2783, %v2818, 0.0
        %v2833 = vadd.f32 %v2831, %v2832
        %v2834 = vsel %vm2783, %v2820, 0.0
        %v2835 = vadd.f32 %v2833, %v2834
        %v2836 = vsel %vm2783, %v2822, 0.0
        %v2837 = vadd.f32 %v2835, %v2836
        %v2838 = vsel %vm2783, %v2824, 0.0
        %v2839 = vadd.f32 %v2837, %v2838
        %v2840 = vsel %vm2783, %v2826, 0.0
        %v2841 = vadd.f32 %v2839, %v2840
        %v2842 = vsel %vm2783, %v2828, 0.0
        %v2843 = vadd.f32 %v2841, %v2842
        %v2844 = vrot.slane %v2843, 4
        %v2845 = vadd.f32 %v2843, %v2844
        %v2846 = vrot.slane %v2845, 2
        %v2847 = vadd.f32 %v2845, %v2846
        %v2848 = vrot.slane %v2847, 1
        %v2849 = vadd.f32 %v2847, %v2848
        %v2850 = vrcp.pop %v2849
        %v2851 = vmul.f32 %v2849, %v2850
        %v2852 = vsub.f32 1.0, %v2851
        %v2853 = vmul.f32 %v2850, %v2852
        %v2854 = vadd.f32 %v2850, %v2853
        %vm2855 = vweird.f32 %v2849
        %vm2856 = vweird.f32 %v2850
        %vm2857 = vmor %vm2855, %vm2856
        %v2858 = vsel %vm2857, %v2850, %v2854
        %v2859 = vand.u32 2147483647, %v2849
        %vm2860 = vcmp.eq.f32.partialorder %v2859, 8.507059e+37
        %v2861 = vand.u32 %v2849, 2147483648
        %v2862 = vor.u32 1.1754944e-38, %v2861
        %v2863 = vsel %vm2860, %v2862, %v2858
        %v2864 = vmul.f32 %v2814, %v2863
        %v2865 = vmul.f32 %v2816, %v2863
        %v2866 = vmul.f32 %v2818, %v2863
        %v2867 = vmul.f32 %v2820, %v2863
        %v2868 = vmul.f32 %v2822, %v2863
        %v2869 = vmul.f32 %v2824, %v2863
        %v2870 = vmul.f32 %v2826, %v2863
        %v2871 = vmul.f32 %v2828, %v2863
        %2880 = vrot.lane.b32.xlu0 %v2864, 72
        %v2881 = vpop.permute.xlu0 %2880
        %2882 = vrot.lane.b32.xlu0 %v2865, 72
        %v2883 = vpop.permute.xlu0 %2882
        %2884 = vrot.lane.b32.xlu0 %v2866, 72
        %v2885 = vpop.permute.xlu0 %2884
        %2886 = vrot.lane.b32.xlu0 %v2867, 72
        %v2887 = vpop.permute.xlu0 %2886
        %2888 = vrot.lane.b32.xlu0 %v2868, 72
        %v2889 = vpop.permute.xlu0 %2888
        %2890 = vrot.lane.b32.xlu0 %v2869, 72
        %v2891 = vpop.permute.xlu0 %2890
        %2892 = vrot.lane.b32.xlu0 %v2870, 72
        %v2893 = vpop.permute.xlu0 %2892
        %2894 = vrot.lane.b32.xlu0 %v2871, 72
        %v2895 = vpop.permute.xlu0 %2894
        %2904 = vxpose.xlu0.b32.start [1/16] %v2881, 128
        %2905 = vxpose.xlu0.b32.cont [2/16] %v2883, 128
        %2906 = vxpose.xlu0.b32.cont [3/16] %v2885, 128
        %2907 = vxpose.xlu0.b32.cont [4/16] %v2887, 128
        %2908 = vxpose.xlu0.b32.cont [5/16] %v2889, 128
        %2909 = vxpose.xlu0.b32.cont [6/16] %v2891, 128
        %2910 = vxpose.xlu0.b32.cont [7/16] %v2893, 128
        %2911 = vxpose.xlu0.b32.cont [8/16] %v2895, 128
        %2912 = vxpose.xlu0.b32.cont [9/16] 0.0, 128
        %2913 = vxpose.xlu0.b32.cont [10/16] 0.0, 128
        %2914 = vxpose.xlu0.b32.cont [11/16] 0.0, 128
        %2915 = vxpose.xlu0.b32.cont [12/16] 0.0, 128
        %2916 = vxpose.xlu0.b32.cont [13/16] 0.0, 128
        %2917 = vxpose.xlu0.b32.cont [14/16] 0.0, 128
        %2918 = vxpose.xlu0.b32.cont [15/16] 0.0, 128
        %2919 = vxpose.xlu0.b32.end [16/16] 0.0, 128
        %v2920 = vpop.trf.xlu0
        %v2921 = vpop.trf.xlu0
        %v2922 = vpop.trf.xlu0
        %v2923 = vpop.trf.xlu0
        %v2924 = vpop.trf.xlu0
        %v2925 = vpop.trf.xlu0
        %v2926 = vpop.trf.xlu0
        %v2927 = vpop.trf.xlu0
        %v2928 = vpop.trf.xlu0
        %v2929 = vpop.trf.xlu0
        %v2930 = vpop.trf.xlu0
        %v2931 = vpop.trf.xlu0
        %v2932 = vpop.trf.xlu0
        %v2933 = vpop.trf.xlu0
        %v2934 = vpop.trf.xlu0
        %v2935 = vpop.trf.xlu0
        %2936 = vrot.lane.b32.xlu0 %v1027, 40
        %v2937 = vpop.permute.xlu0 %2936
        %2938 = vrot.lane.b32.xlu0 %v1030, 40
        %v2939 = vpop.permute.xlu0 %2938
        %2940 = vrot.lane.b32.xlu0 %v1033, 40
        %v2941 = vpop.permute.xlu0 %2940
        %2942 = vrot.lane.b32.xlu0 %v1036, 40
        %v2943 = vpop.permute.xlu0 %2942
        %2944 = vrot.lane.b32.xlu0 %v1039, 40
        %v2945 = vpop.permute.xlu0 %2944
        %2946 = vrot.lane.b32.xlu0 %v1042, 40
        %v2947 = vpop.permute.xlu0 %2946
        %2948 = vrot.lane.b32.xlu0 %v1045, 40
        %v2949 = vpop.permute.xlu0 %2948
        %2950 = vrot.lane.b32.xlu0 %v1048, 40
        %v2951 = vpop.permute.xlu0 %2950
        %v2961 = vsel %vm295, %v2920, 0
        %2963 = vmatpush.msra.mxu0 0.0
        %2964 = vmatpush.msra.mxu0 0.0
        %2965 = vmatpush.msra.mxu0 0.0
        %2966 = vmatpush.msra.mxu0 0.0
        %2967 = vmatpush.msra.mxu0 0.0
        %2968 = vmatpush.msra.mxu0 0.0
        %2969 = vmatpush.msra.mxu0 0.0
        %2970 = vmatpush.msra.mxu0 0.0
        %2971 = vmatpush.msra.mxu0 %v2951
        %2972 = vmatpush.msra.mxu0 %v2949
        %2973 = vmatpush.msra.mxu0 %v2947
        %2974 = vmatpush.msra.mxu0 %v2945
        %2975 = vmatpush.msra.mxu0 %v2943
        %2976 = vmatpush.msra.mxu0 %v2941
        %2977 = vmatpush.msra.mxu0 %v2939
        %2978 = vmatpush.msra.mxu0 %v2937
        %2979 = vmatmul.f32.gmra.mxu0 %v2961
        %v2980 = vpop.f32.mrf.mxu0
        %v2981 = vadd.f32 0.0, %v2980
        %2982 = vdwg.mxu0
        %2991 = vrot.lane.b32.xlu0 %v2775, 104
        %v2992 = vpop.permute.xlu0 %2991
        %2993 = vrot.lane.b32.xlu0 %v2776, 104
        %v2994 = vpop.permute.xlu0 %2993
        %2995 = vrot.lane.b32.xlu0 %v2777, 104
        %v2996 = vpop.permute.xlu0 %2995
        %2997 = vrot.lane.b32.xlu0 %v2778, 104
        %v2998 = vpop.permute.xlu0 %2997
        %2999 = vrot.lane.b32.xlu0 %v2779, 104
        %v3000 = vpop.permute.xlu0 %2999
        %3001 = vrot.lane.b32.xlu0 %v2780, 104
        %v3002 = vpop.permute.xlu0 %3001
        %3003 = vrot.lane.b32.xlu0 %v2781, 104
        %v3004 = vpop.permute.xlu0 %3003
        %3005 = vrot.lane.b32.xlu0 %v2782, 104
        %v3006 = vpop.permute.xlu0 %3005
        %v3007 = vsel %vm372, %v2992, 0
        %v3009 = vsel %vm372, %v2994, 0
        %v3011 = vsel %vm372, %v2996, 0
        %v3013 = vsel %vm372, %v2998, 0
        %v3015 = vsel %vm372, %v3000, 0
        %v3017 = vsel %vm372, %v3002, 0
        %v3019 = vsel %vm372, %v3004, 0
        %v3021 = vsel %vm372, %v3006, 0
        %3023 = vmatpush.msra.mxu0 0.0
        %3024 = vmatpush.msra.mxu0 0.0
        %3025 = vmatpush.msra.mxu0 0.0
        %3026 = vmatpush.msra.mxu0 0.0
        %3027 = vmatpush.msra.mxu0 0.0
        %3028 = vmatpush.msra.mxu0 0.0
        %3029 = vmatpush.msra.mxu0 0.0
        %3030 = vmatpush.msra.mxu0 0.0
        %3031 = vmatpush.msra.mxu0 0.0
        %3032 = vmatpush.msra.mxu0 0.0
        %3033 = vmatpush.msra.mxu0 0.0
        %3034 = vmatpush.msra.mxu0 0.0
        %3035 = vmatpush.msra.mxu0 0.0
        %3036 = vmatpush.msra.mxu0 0.0
        %3037 = vmatpush.msra.mxu0 0.0
        %3038 = vmatpush.msra.mxu0 %v2981
        %3039 = vmatmul.f32.gmra.mxu0 %v3007
        %v3040 = vpop.f32.mrf.mxu0
        %v3041 = vadd.f32 0.0, %v3040
        %3042 = vmatmul.f32.gmra.mxu0 %v3009
        %v3043 = vpop.f32.mrf.mxu0
        %v3044 = vadd.f32 0.0, %v3043
        %3045 = vmatmul.f32.gmra.mxu0 %v3011
        %v3046 = vpop.f32.mrf.mxu0
        %v3047 = vadd.f32 0.0, %v3046
        %3048 = vmatmul.f32.gmra.mxu0 %v3013
        %v3049 = vpop.f32.mrf.mxu0
        %v3050 = vadd.f32 0.0, %v3049
        %3051 = vmatmul.f32.gmra.mxu0 %v3015
        %v3052 = vpop.f32.mrf.mxu0
        %v3053 = vadd.f32 0.0, %v3052
        %3054 = vmatmul.f32.gmra.mxu0 %v3017
        %v3055 = vpop.f32.mrf.mxu0
        %v3056 = vadd.f32 0.0, %v3055
        %3057 = vmatmul.f32.gmra.mxu0 %v3019
        %v3058 = vpop.f32.mrf.mxu0
        %v3059 = vadd.f32 0.0, %v3058
        %3060 = vmatmul.f32.gmra.mxu0 %v3021
        %v3061 = vpop.f32.mrf.mxu0
        %v3062 = vadd.f32 0.0, %v3061
        %3063 = vdwg.mxu0
        %3072 = vrot.lane.b32.xlu0 %v2013, 8
        %v3073 = vpop.permute.xlu0 %3072
        %3074 = vrot.lane.b32.xlu0 %v2016, 8
        %v3075 = vpop.permute.xlu0 %3074
        %3076 = vrot.lane.b32.xlu0 %v2019, 8
        %v3077 = vpop.permute.xlu0 %3076
        %3078 = vrot.lane.b32.xlu0 %v2022, 8
        %v3079 = vpop.permute.xlu0 %3078
        %3080 = vrot.lane.b32.xlu0 %v2025, 8
        %v3081 = vpop.permute.xlu0 %3080
        %3082 = vrot.lane.b32.xlu0 %v2028, 8
        %v3083 = vpop.permute.xlu0 %3082
        %3084 = vrot.lane.b32.xlu0 %v2031, 8
        %v3085 = vpop.permute.xlu0 %3084
        %3086 = vrot.lane.b32.xlu0 %v2034, 8
        %v3087 = vpop.permute.xlu0 %3086
        %3104 = vrot.lane.b32.xlu0 %v2527, 16
        %v3105 = vpop.permute.xlu0 %3104
        %3106 = vrot.lane.b32.xlu0 %v2530, 16
        %v3107 = vpop.permute.xlu0 %3106
        %3108 = vrot.lane.b32.xlu0 %v2533, 16
        %v3109 = vpop.permute.xlu0 %3108
        %3110 = vrot.lane.b32.xlu0 %v2536, 16
        %v3111 = vpop.permute.xlu0 %3110
        %3112 = vrot.lane.b32.xlu0 %v2539, 16
        %v3113 = vpop.permute.xlu0 %3112
        %3114 = vrot.lane.b32.xlu0 %v2542, 16
        %v3115 = vpop.permute.xlu0 %3114
        %3116 = vrot.lane.b32.xlu0 %v2545, 16
        %v3117 = vpop.permute.xlu0 %3116
        %3118 = vrot.lane.b32.xlu0 %v2548, 16
        %v3119 = vpop.permute.xlu0 %3118
        %3136 = vrot.lane.b32.xlu0 %v3041, 24
        %v3137 = vpop.permute.xlu0 %3136
        %3138 = vrot.lane.b32.xlu0 %v3044, 24
        %v3139 = vpop.permute.xlu0 %3138
        %3140 = vrot.lane.b32.xlu0 %v3047, 24
        %v3141 = vpop.permute.xlu0 %3140
        %3142 = vrot.lane.b32.xlu0 %v3050, 24
        %v3143 = vpop.permute.xlu0 %3142
        %3144 = vrot.lane.b32.xlu0 %v3053, 24
        %v3145 = vpop.permute.xlu0 %3144
        %3146 = vrot.lane.b32.xlu0 %v3056, 24
        %v3147 = vpop.permute.xlu0 %3146
        %3148 = vrot.lane.b32.xlu0 %v3059, 24
        %v3149 = vpop.permute.xlu0 %3148
        %3150 = vrot.lane.b32.xlu0 %v3062, 24
        %v3151 = vpop.permute.xlu0 %3150
        %v3160 = vsel %vm372, %v1499, %v3073
        %v3161 = vsel %vm372, %v1502, %v3075
        %v3162 = vsel %vm372, %v1505, %v3077
        %v3163 = vsel %vm372, %v1508, %v3079
        %v3164 = vsel %vm372, %v1511, %v3081
        %v3165 = vsel %vm372, %v1514, %v3083
        %v3166 = vsel %vm372, %v1517, %v3085
        %v3167 = vsel %vm372, %v1520, %v3087
        %vm3168 = vcmask 130048
        %v3169 = vsel %vm3168, %v3160, %v3105
        %v3170 = vsel %vm3168, %v3161, %v3107
        %v3171 = vsel %vm3168, %v3162, %v3109
        %v3172 = vsel %vm3168, %v3163, %v3111
        %v3173 = vsel %vm3168, %v3164, %v3113
        %v3174 = vsel %vm3168, %v3165, %v3115
        %v3175 = vsel %vm3168, %v3166, %v3117
        %v3176 = vsel %vm3168, %v3167, %v3119
        %vm3177 = vcmask 195584
        %v3178 = vsel %vm3177, %v3169, %v3137
        %v3179 = vsel %vm3177, %v3170, %v3139
        %v3180 = vsel %vm3177, %v3171, %v3141
        %v3181 = vsel %vm3177, %v3172, %v3143
        %v3182 = vsel %vm3177, %v3173, %v3145
        %v3183 = vsel %vm3177, %v3174, %v3147
        %v3184 = vsel %vm3177, %v3175, %v3149
        %v3185 = vsel %vm3177, %v3176, %v3151
        %v3186 = vxor.u32 %v3178, 2147483648
        %v3187 = vxor.u32 %v3179, 2147483648
        %v3188 = vxor.u32 %v3180, 2147483648
        %v3189 = vxor.u32 %v3181, 2147483648
        %v3190 = vxor.u32 %v3182, 2147483648
        %v3191 = vxor.u32 %v3183, 2147483648
        %v3192 = vxor.u32 %v3184, 2147483648
        %v3193 = vxor.u32 %v3185, 2147483648
        %v3194 = vmul.f32 %v3186, 1.442695
        %v3195 = vpow.pop %v3194
        %v3196 = vmul.f32 %v3187, 1.442695
        %v3197 = vpow.pop %v3196
        %v3198 = vmul.f32 %v3188, 1.442695
        %v3199 = vpow.pop %v3198
        %v3200 = vmul.f32 %v3189, 1.442695
        %v3201 = vpow.pop %v3200
        %v3202 = vmul.f32 %v3190, 1.442695
        %v3203 = vpow.pop %v3202
        %v3204 = vmul.f32 %v3191, 1.442695
        %v3205 = vpow.pop %v3204
        %v3206 = vmul.f32 %v3192, 1.442695
        %v3207 = vpow.pop %v3206
        %v3208 = vmul.f32 %v3193, 1.442695
        %v3209 = vpow.pop %v3208
        %v3210 = vadd.f32 %v3195, 1.0
        %v3211 = vadd.f32 %v3197, 1.0
        %v3212 = vadd.f32 %v3199, 1.0
        %v3213 = vadd.f32 %v3201, 1.0
        %v3214 = vadd.f32 %v3203, 1.0
        %v3215 = vadd.f32 %v3205, 1.0
        %v3216 = vadd.f32 %v3207, 1.0
        %v3217 = vadd.f32 %v3209, 1.0
        %v3218 = vrcp.pop %v3210
        %v3219 = vmul.f32 %v3210, %v3218
        %v3220 = vsub.f32 1.0, %v3219
        %v3221 = vmul.f32 %v3218, %v3220
        %v3222 = vadd.f32 %v3218, %v3221
        %vm3223 = vweird.f32 %v3210
        %vm3224 = vweird.f32 %v3218
        %vm3225 = vmor %vm3223, %vm3224
        %v3226 = vsel %vm3225, %v3218, %v3222
        %v3227 = vand.u32 2147483647, %v3210
        %vm3228 = vcmp.eq.f32.partialorder %v3227, 8.507059e+37
        %v3229 = vand.u32 %v3210, 2147483648
        %v3230 = vor.u32 1.1754944e-38, %v3229
        %v3231 = vsel %vm3228, %v3230, %v3226
        %v3232 = vmul.f32 1.0, %v3231
        %v3233 = vrcp.pop %v3211
        %v3234 = vmul.f32 %v3211, %v3233
        %v3235 = vsub.f32 1.0, %v3234
        %v3236 = vmul.f32 %v3233, %v3235
        %v3237 = vadd.f32 %v3233, %v3236
        %vm3238 = vweird.f32 %v3211
        %vm3239 = vweird.f32 %v3233
        %vm3240 = vmor %vm3238, %vm3239
        %v3241 = vsel %vm3240, %v3233, %v3237
        %v3242 = vand.u32 2147483647, %v3211
        %vm3243 = vcmp.eq.f32.partialorder %v3242, 8.507059e+37
        %v3244 = vand.u32 %v3211, 2147483648
        %v3245 = vor.u32 1.1754944e-38, %v3244
        %v3246 = vsel %vm3243, %v3245, %v3241
        %v3247 = vmul.f32 1.0, %v3246
        %v3248 = vrcp.pop %v3212
        %v3249 = vmul.f32 %v3212, %v3248
        %v3250 = vsub.f32 1.0, %v3249
        %v3251 = vmul.f32 %v3248, %v3250
        %v3252 = vadd.f32 %v3248, %v3251
        %vm3253 = vweird.f32 %v3212
        %vm3254 = vweird.f32 %v3248
        %vm3255 = vmor %vm3253, %vm3254
        %v3256 = vsel %vm3255, %v3248, %v3252
        %v3257 = vand.u32 2147483647, %v3212
        %vm3258 = vcmp.eq.f32.partialorder %v3257, 8.507059e+37
        %v3259 = vand.u32 %v3212, 2147483648
        %v3260 = vor.u32 1.1754944e-38, %v3259
        %v3261 = vsel %vm3258, %v3260, %v3256
        %v3262 = vmul.f32 1.0, %v3261
        %v3263 = vrcp.pop %v3213
        %v3264 = vmul.f32 %v3213, %v3263
        %v3265 = vsub.f32 1.0, %v3264
        %v3266 = vmul.f32 %v3263, %v3265
        %v3267 = vadd.f32 %v3263, %v3266
        %vm3268 = vweird.f32 %v3213
        %vm3269 = vweird.f32 %v3263
        %vm3270 = vmor %vm3268, %vm3269
        %v3271 = vsel %vm3270, %v3263, %v3267
        %v3272 = vand.u32 2147483647, %v3213
        %vm3273 = vcmp.eq.f32.partialorder %v3272, 8.507059e+37
        %v3274 = vand.u32 %v3213, 2147483648
        %v3275 = vor.u32 1.1754944e-38, %v3274
        %v3276 = vsel %vm3273, %v3275, %v3271
        %v3277 = vmul.f32 1.0, %v3276
        %v3278 = vrcp.pop %v3214
        %v3279 = vmul.f32 %v3214, %v3278
        %v3280 = vsub.f32 1.0, %v3279
        %v3281 = vmul.f32 %v3278, %v3280
        %v3282 = vadd.f32 %v3278, %v3281
        %vm3283 = vweird.f32 %v3214
        %vm3284 = vweird.f32 %v3278
        %vm3285 = vmor %vm3283, %vm3284
        %v3286 = vsel %vm3285, %v3278, %v3282
        %v3287 = vand.u32 2147483647, %v3214
        %vm3288 = vcmp.eq.f32.partialorder %v3287, 8.507059e+37
        %v3289 = vand.u32 %v3214, 2147483648
        %v3290 = vor.u32 1.1754944e-38, %v3289
        %v3291 = vsel %vm3288, %v3290, %v3286
        %v3292 = vmul.f32 1.0, %v3291
        %v3293 = vrcp.pop %v3215
        %v3294 = vmul.f32 %v3215, %v3293
        %v3295 = vsub.f32 1.0, %v3294
        %v3296 = vmul.f32 %v3293, %v3295
        %v3297 = vadd.f32 %v3293, %v3296
        %vm3298 = vweird.f32 %v3215
        %vm3299 = vweird.f32 %v3293
        %vm3300 = vmor %vm3298, %vm3299
        %v3301 = vsel %vm3300, %v3293, %v3297
        %v3302 = vand.u32 2147483647, %v3215
        %vm3303 = vcmp.eq.f32.partialorder %v3302, 8.507059e+37
        %v3304 = vand.u32 %v3215, 2147483648
        %v3305 = vor.u32 1.1754944e-38, %v3304
        %v3306 = vsel %vm3303, %v3305, %v3301
        %v3307 = vmul.f32 1.0, %v3306
        %v3308 = vrcp.pop %v3216
        %v3309 = vmul.f32 %v3216, %v3308
        %v3310 = vsub.f32 1.0, %v3309
        %v3311 = vmul.f32 %v3308, %v3310
        %v3312 = vadd.f32 %v3308, %v3311
        %vm3313 = vweird.f32 %v3216
        %vm3314 = vweird.f32 %v3308
        %vm3315 = vmor %vm3313, %vm3314
        %v3316 = vsel %vm3315, %v3308, %v3312
        %v3317 = vand.u32 2147483647, %v3216
        %vm3318 = vcmp.eq.f32.partialorder %v3317, 8.507059e+37
        %v3319 = vand.u32 %v3216, 2147483648
        %v3320 = vor.u32 1.1754944e-38, %v3319
        %v3321 = vsel %vm3318, %v3320, %v3316
        %v3322 = vmul.f32 1.0, %v3321
        %v3323 = vrcp.pop %v3217
        %v3324 = vmul.f32 %v3217, %v3323
        %v3325 = vsub.f32 1.0, %v3324
        %v3326 = vmul.f32 %v3323, %v3325
        %v3327 = vadd.f32 %v3323, %v3326
        %vm3328 = vweird.f32 %v3217
        %vm3329 = vweird.f32 %v3323
        %vm3330 = vmor %vm3328, %vm3329
        %v3331 = vsel %vm3330, %v3323, %v3327
        %v3332 = vand.u32 2147483647, %v3217
        %vm3333 = vcmp.eq.f32.partialorder %v3332, 8.507059e+37
        %v3334 = vand.u32 %v3217, 2147483648
        %v3335 = vor.u32 1.1754944e-38, %v3334
        %v3336 = vsel %vm3333, %v3335, %v3331
        %v3337 = vmul.f32 1.0, %v3336
        %v3338 = vmul.f32 %v3178, %v3232
        %v3339 = vmul.f32 %v3179, %v3247
        %v3340 = vmul.f32 %v3180, %v3262
        %v3341 = vmul.f32 %v3181, %v3277
        %v3342 = vmul.f32 %v3182, %v3292
        %v3343 = vmul.f32 %v3183, %v3307
        %v3344 = vmul.f32 %v3184, %v3322
        %v3345 = vmul.f32 %v3185, %v3337
        %v3346 = vld [vmem:[#allocation8] sm:$0xff]
        %vm3347 = vcmask 261120
        %v3349 = vsel %vm3347, %v3346, 0
        %v3352 = vsel %vm3347, %v3338, 0
        %v3355 = vsel %vm3347, %v3339, 0
        %v3358 = vsel %vm3347, %v3340, 0
        %v3361 = vsel %vm3347, %v3341, 0
        %v3364 = vsel %vm3347, %v3342, 0
        %v3367 = vsel %vm3347, %v3343, 0
        %v3370 = vsel %vm3347, %v3344, 0
        %v3373 = vsel %vm3347, %v3345, 0
        %3375 = vmatpush.xpose.msra.mxu0 0.0
        %3376 = vmatpush.xpose.msra.mxu0 0.0
        %3377 = vmatpush.xpose.msra.mxu0 0.0
        %3378 = vmatpush.xpose.msra.mxu0 0.0
        %3379 = vmatpush.xpose.msra.mxu0 0.0
        %3380 = vmatpush.xpose.msra.mxu0 0.0
        %3381 = vmatpush.xpose.msra.mxu0 0.0
        %3382 = vmatpush.xpose.msra.mxu0 0.0
        %3383 = vmatpush.xpose.msra.mxu0 %v3373
        %3384 = vmatpush.xpose.msra.mxu0 %v3370
        %3385 = vmatpush.xpose.msra.mxu0 %v3367
        %3386 = vmatpush.xpose.msra.mxu0 %v3364
        %3387 = vmatpush.xpose.msra.mxu0 %v3361
        %3388 = vmatpush.xpose.msra.mxu0 %v3358
        %3389 = vmatpush.xpose.msra.mxu0 %v3355
        %3390 = vmatpush.xpose.msra.mxu0 %v3352
        %3391 = vmatmul.f32.gmra.mxu0 %v3349
        %v3392 = vpop.f32.mrf.mxu0
        %v3393 = vadd.f32 0.0, %v3392
        %3394 = vdwg.mxu0
        %v3395 = vld [vmem:[%s5] sm:$0xff]
        %v3396 = vsel %vm295, %v3393, 0.0
        %v3397 = vrot.slane %v3396, 4
        %v3398 = vadd.f32 %v3396, %v3397
        %v3399 = vrot.slane %v3398, 2
        %v3400 = vadd.f32 %v3398, %v3399
        %v3401 = vrot.slane %v3400, 1
        %v3402 = vadd.f32 %v3400, %v3401
        %v3403 = vmul.f32 %v3402, %v309
        %v3404 = vsub.f32 %v3393, %v3403
        %v3405 = vmul.f32 %v3404, %v3404
        %v3406 = vsel %vm295, %v3405, 0.0
        %v3407 = vrot.slane %v3406, 4
        %v3408 = vadd.f32 %v3406, %v3407
        %v3409 = vrot.slane %v3408, 2
        %v3410 = vadd.f32 %v3408, %v3409
        %v3411 = vrot.slane %v3410, 1
        %v3412 = vadd.f32 %v3410, %v3411
        %v3413 = vmul.f32 %v3412, %v309
        %v3414 = vadd.f32 %v3413, 1e-05
        %v3415 = vrsqrt.pop %v3414
        %v3416 = vmul.f32 %v3415, %v3414
        %v3417 = vmul.f32 %v3416, %v3415
        %v3418 = vmul.f32 0.5, %v3417
        %v3419 = vsub.f32 1.5, %v3418
        %v3420 = vmul.f32 %v3415, %v3419
        %vm3421 = vweird.f32 %v3414
        %vm3422 = vweird.f32 %v3415
        %vm3423 = vmor %vm3421, %vm3422
        %v3424 = vsel %vm3423, %v3415, %v3420
        %v3425 = vmul.f32 %v3404, %v3424
        %3427 = vset.pattern.permute.xlu0 0
        %3428 = vperm.xlu0 %3427, %v3395
        %v3429 = vpop.permute.xlu0 %3428
        %v3431 = vmul.f32 %v3425, %v3429
        %3432 = vst.msk [vmem:[%s288] sm:$0xff] %vm295, %v3431
        %s3433 = sand.u32 %s161, 1
        %s3434 = scalar_lea.sflag [#allocation5], %s3433
        %s3435 = sand.u32 %s161, 1
        %s3436 = smul.addr %s3435, 8
        %s3437 = scalar_lea.vmem [#allocation9], %s3436
        // Predicated region
        $region57: #{tpu_custom_call.1} parent=43 // pred_check
          %p3438 = pneg %p171
        $region58: #{tpu_custom_call.1} parent=43 // pred_check_branch
          %3440 = sbr.rel (%p3438) target = $region60
        $region59: #{tpu_custom_call.1} parent=43 // pred_region
          %3442 = vsyncadd %s3434, 0
          %s3443 = smul.addr %s22, 8
          %s3444 = scalar_lea.hbm %s6, %s3443
          %s3446 = sshll.u32 %s3437, 4
          %s3447 = int_to_ptr.vmem [resolvable:$true] %s3446
          %s3448 = sshll.u32 %s3444, 4
          %s3449 = int_to_ptr.hbm [resolvable:$true] %s3448
          %3451 = dma.vmem_to_hbm [thread:$0]  %s3447, 128, %s3449, %s3434
        $region60: #{tpu_custom_call.1} parent=43 // pred_fallthru
          _
      $region44: #{tpu_custom_call.1} parent=5 // pred_fallthru
        _
      %p3452 = scmp.le.s32.totalorder 2, %s17
      // Predicated region
      $region61: #{tpu_custom_call.1} parent=5 // pred_check
        %p3453 = pneg %p3452
      $region62: #{tpu_custom_call.1} parent=5 // pred_check_branch
        %3455 = sbr.rel (%p3453) target = $region64
      $region63: #{tpu_custom_call.1} parent=5 // pred_region
        %s3456 = ssub.s32 %s17, 2
        // Predicated region
        $region65: #{tpu_custom_call.1} parent=63 // pred_check
          %p3457 = pneg %p177
        $region66: #{tpu_custom_call.1} parent=63 // pred_check_branch
          %3459 = sbr.rel (%p3457) target = $region68
        $region67: #{tpu_custom_call.1} parent=63 // pred_region
          %s3460 = sand.u32 %s162, 1
          %s3461 = scalar_lea.sflag [#allocation5], %s3460
          %s3462 = sand.u32 %s162, 1
          %s3463 = smul.addr %s3462, 8
          %s3464 = scalar_lea.vmem [#allocation9], %s3463
          %3466 = dma.done %s3461, 128
        $region68: #{tpu_custom_call.1} parent=63 // pred_fallthru
          _
      $region64: #{tpu_custom_call.1} parent=5 // pred_fallthru
        _
    $region6: #{tpu_custom_call.1} parent=1 // loop_footer
      %s21 = sadd.s32 1, %s17
    $region7: #{tpu_custom_call.1} parent=1 // loop_footer_branch
      %16 = sbr.rel target = $region3
    $region8: #{tpu_custom_call.1} parent=1 // loop_exit
      _
    %3467 = vsyncpa [#allocation4], 1
    %s3468 = scalar_lea.sflag [#allocation4], 1
    %3469 = vsyncpa %s3468, 1
    %3470 = vsyncpa [#allocation7], 1
    %3471 = vsyncpa [#allocation5], 1
    %s3472 = scalar_lea.sflag [#allocation5], 1
    %3473 = vsyncpa %s3472, 1

</llo_original>
